<compile_context>
chip_gen: v7x
topology: tpu7x:2x2x1
jax: 0.10.0
libtpu: 0.0.40
codegen_flags: <defaults>
</compile_context>

<pallas_src>
import math

import jax
import jax.numpy as jnp
from jax import lax
from jax.experimental import pallas as pl
from jax.experimental.pallas import tpu as pltpu


# ---------------------------------------------------------------------------
# Shared math.
# ---------------------------------------------------------------------------
def _softplus(x):
    # numerically stable softplus == F.softplus
    return jnp.maximum(x, 0.0) + jnp.log(1.0 + jnp.exp(-jnp.abs(x)))


def _round_up(x, m):
    return ((x + m - 1) // m) * m


# ---------------------------------------------------------------------------
# Pallas kernel (static config baked in via closure).
#
# Inputs (all whole-array blocks, single grid step):
#   ent_ref  : (2B, 2*Wh) f32  -- de-dup'd entity embeddings, row 2b = head of
#                                 pair b, row 2b+1 = tail; stored as two
#                                 zero-padded, lane-aligned halves of width Wh.
#   rel_ref  : (B, 2*Wh)  f32  -- relation embeddings, same half layout.
#   hidx_ref : (B, N)     i32  -- neg_idx[..., 0] (rows of ent_ref)
#   tidx_ref : (B, N)     i32  -- neg_idx[..., 1]
# Output:
#   out_ref  : (1,) f32 in SMEM -- the scalar loss.
# ---------------------------------------------------------------------------
def _make_kernel(rel_model, loss_fn, regularizer, B, N, D, Wh):
    normalize = (rel_model == "transe")
    inv_BD = 1.0 / float(B * D)

    def score(h, t, r):
        # Padded lanes are zero in every operand of every product, so sums are
        # unaffected by the padding.
        if rel_model == "transe":
            return -jnp.sum(jnp.abs(h + r - t), axis=-1, keepdims=True)
        if rel_model == "distmult":
            return jnp.sum(h * r * t, axis=-1, keepdims=True)
        # complex / simple: halves are contiguous, 128-aligned blocks.
        ha, hb = h[:, :Wh], h[:, Wh:]
        ta, tb = t[:, :Wh], t[:, Wh:]
        ra, rb = r[:, :Wh], r[:, Wh:]
        if rel_model == "complex":
            return jnp.sum(ra * ha * ta + ra * hb * tb + rb * ha * tb - rb * hb * ta,
                           axis=-1, keepdims=True)
        if rel_model == "simple":
            return jnp.sum(ha * ra * tb + ta * rb * hb,
                           axis=-1, keepdims=True) * 0.5
        raise ValueError(f"Unknown relational model {rel_model}.")

    def gather(onehot, ent):
        # Exact row gather through the (otherwise idle) MXU: one-hot @ embeddings.
        return jnp.dot(onehot, ent, preferred_element_type=jnp.float32,
                       precision=lax.Precision.HIGHEST)

    def kernel(ent_ref, rel_ref, hidx_ref, tidx_ref, out_ref):
        ent = ent_ref[...]            # (2B, 2*Wh)
        rel = rel_ref[...]            # (B, 2*Wh)
        hidx = hidx_ref[...]          # (B, N) int32
        tidx = tidx_ref[...]          # (B, N) int32

        if normalize:
            # Normalize the unique embeddings ONCE (== F.normalize semantics:
            # clamp on the squared norm keeps max(||x||, 1e-12) behaviour).
            ss = jnp.sum(ent * ent, axis=-1, keepdims=True)      # (2B, 1)
            ent = ent * lax.rsqrt(jnp.maximum(ss, 1e-24))

        col = lax.broadcasted_iota(jnp.int32, (B, 2 * B), 1)
        row = lax.broadcasted_iota(jnp.int32, (B, 2 * B), 0)

        # Positive heads/tails (rows 2b / 2b+1) from the normalized slab.
        hp = gather((col == 2 * row).astype(jnp.float32), ent)       # (B, 2Wh)
        tp = gather((col == 2 * row + 1).astype(jnp.float32), ent)   # (B, 2Wh)
        pos = score(hp, tp, rel)                                     # (B, 1)

        # Negatives: in-VMEM gather, one negative column per step; partial loss
        # terms accumulate in a (B, 1) VMEM vector -- no per-step scalar reduce.
        # TODO(synk): for very large N, fold several negatives into one wider
        # one-hot matmul (or chunk via fori_loop) to bound unrolled code size.
        neg_acc = jnp.zeros((B, 1), jnp.float32)
        for n in range(N):
            oh_h = (col == hidx[:, n:n + 1]).astype(jnp.float32)     # (B, 2B)
            oh_t = (col == tidx[:, n:n + 1]).astype(jnp.float32)     # (B, 2B)
            sn = score(gather(oh_h, ent), gather(oh_t, ent), rel)    # (B, 1)
            if loss_fn == "margin":
                neg_acc = neg_acc + jnp.maximum(1.0 - pos + sn, 0.0)
            else:  # 'nll'
                neg_acc = neg_acc + _softplus(sn)

        # Single scalarizing reduce at the very end.
        if loss_fn == "margin":
            model_loss = jnp.sum(neg_acc) * (1.0 / float(B * N))
        else:
            model_loss = (jnp.sum(_softplus(-pos)) * (1.0 / float(B))
                          + jnp.sum(neg_acc) * (1.0 / float(B * N))) * 0.5

        if regularizer > 0:
            reg_sum = jnp.sum(hp * hp) + jnp.sum(tp * tp) + jnp.sum(rel * rel)
            model_loss = model_loss + float(regularizer) * reg_sum * (inv_BD / 3.0)

        out_ref[0] = model_loss

    return kernel


# ---------------------------------------------------------------------------
# Wrapper: embedding-table gathers in JAX, everything else in one Pallas call.
# ---------------------------------------------------------------------------
def link_prediction_forward(ent_emb, rel_emb, pos_pairs, rels, neg_idx,
                            *, rel_model, loss_fn, regularizer):
    if rel_model not in ("transe", "distmult", "complex", "simple"):
        raise ValueError(f"Unknown relational model {rel_model}.")
    if loss_fn not in ("margin", "nll"):
        raise ValueError(f"Unknown loss function {loss_fn}.")

    B = pos_pairs.shape[0]
    N = neg_idx.shape[1]
    D = ent_emb.shape[1]

    # Lane-aligned half layout: each D/2 half is zero-padded to a multiple of
    # 128 lanes so complex/simple never slice mid-lane inside the kernel.
    half = D // 2
    rest = D - half
    Wh = max(128, _round_up(max(half, rest), 128))

    def split_pad(x):  # (..., D) -> (..., 2*Wh)
        a, b = x[..., :half], x[..., half:]
        pa = [(0, 0)] * (x.ndim - 1) + [(0, Wh - a.shape[-1])]
        pb = [(0, 0)] * (x.ndim - 1) + [(0, Wh - b.shape[-1])]
        return jnp.concatenate([jnp.pad(a, pa), jnp.pad(b, pb)], axis=-1)

    # --- glue: data-dependent embedding-table gathers stay in plain JAX ---
    embs = ent_emb[pos_pairs]                      # (B, 2, D)  unique rows only
    ent_flat = embs.reshape(2 * B, D)              # row 2b = head b, 2b+1 = tail b
    rel_e = rel_emb[rels[:, 0]]                    # (B, D)

    ent_in = split_pad(ent_flat).astype(jnp.float32)   # (2B, 2*Wh)
    rel_in = split_pad(rel_e).astype(jnp.float32)      # (B, 2*Wh)
    hidx = neg_idx[:, :, 0].astype(jnp.int32)          # (B, N)
    tidx = neg_idx[:, :, 1].astype(jnp.int32)          # (B, N)

    in_bytes = sum(int(a.size) * a.dtype.itemsize
                   for a in (ent_in, rel_in, hidx, tidx))
    # Generation-aware VMEM budget: grow with the working set, stay well under
    # v7x's 64 MiB physical VMEM (v5e/v6e have 128 MiB).
    vmem_limit = int(min(max(8 * in_bytes + (4 << 20), 16 << 20), 48 << 20))

    gather_flops = 2 * (N + 2) * (2 * B) * B * (2 * Wh)   # one-hot MXU gathers
    ew_flops = (N + 1) * B * (2 * Wh) * 8                 # scores + loss
    cost = pl.CostEstimate(
        flops=int(gather_flops + ew_flops),
        transcendentals=int(2 * B + B * (N + 1)),
        bytes_accessed=int(in_bytes + 4),
    )

    kernel = _make_kernel(rel_model, loss_fn, regularizer, B, N, D, Wh)

    # TODO(synk): for batches too large to keep resident, tile B with a
    # 'parallel' grid emitting per-tile partial sums (2-TC v7x) and reduce in JAX.
    out = pl.pallas_call(
        kernel,
        out_shape=jax.ShapeDtypeStruct((1,), jnp.float32),
        grid_spec=pltpu.PrefetchScalarGridSpec(
            num_scalar_prefetch=0,
            grid=(1,),
            in_specs=[
                pl.BlockSpec((2 * B, 2 * Wh), lambda i: (0, 0)),
                pl.BlockSpec((B, 2 * Wh), lambda i: (0, 0)),
                pl.BlockSpec((B, N), lambda i: (0, 0)),
                pl.BlockSpec((B, N), lambda i: (0, 0)),
            ],
            out_specs=pl.BlockSpec(memory_space=pltpu.MemorySpace.SMEM),
        ),
        compiler_params=pltpu.CompilerParams(
            dimension_semantics=("arbitrary",),
            vmem_limit_bytes=vmem_limit,
        ),
        cost_estimate=cost,
    )(ent_in, rel_in, hidx, tidx)
    return out[0]


# ---------------------------------------------------------------------------
# Pure-JAX reference (mirrors the PyTorch forward exactly) for validation.
# ---------------------------------------------------------------------------
def _l2_normalize(x):
    n = jnp.sqrt(jnp.sum(x * x, axis=-1, keepdims=True))
    return x / jnp.maximum(n, 1e-12)


def _score_ref(heads, tails, rels, rel_model):
    if rel_model == "transe":
        return -jnp.sum(jnp.abs(heads + rels - tails), axis=-1)
    elif rel_model == "distmult":
        return jnp.sum(heads * rels * tails, axis=-1)
    elif rel_model == "complex":
        d = heads.shape[-1] // 2
        hr, hi = heads[..., :d], heads[..., d:]
        tr, ti = tails[..., :d], tails[..., d:]
        rr, ri = rels[..., :d], rels[..., d:]
        return jnp.sum(rr * hr * tr + rr * hi * ti + ri * hr * ti - ri * hi * tr,
                       axis=-1)
    elif rel_model == "simple":
        d = heads.shape[-1] // 2
        hh, ht = heads[..., :d], heads[..., d:]
        th, tt = tails[..., :d], tails[..., d:]
        ra, rb = rels[..., :d], rels[..., d:]
        return jnp.sum(hh * ra * tt + th * rb * ht, axis=-1) / 2.0
    else:
        raise ValueError(f"Unknown relational model {rel_model}.")


def reference_forward(ent_emb, rel_emb, pos_pairs, rels, neg_idx,
                      *, rel_model, loss_fn, regularizer):
    B = pos_pairs.shape[0]
    D = ent_emb.shape[1]
    embs = ent_emb[pos_pairs]                       # (B, 2, D)
    if rel_model == "transe":
        embs = _l2_normalize(embs)
    rel_e = rel_emb[rels[:, 0]][:, None, :]         # (B, 1, D)
    heads, tails = embs[:, :1, :], embs[:, 1:, :]
    pos = _score_ref(heads, tails, rel_e, rel_model)    # (B, 1)
    neg_embs = embs.reshape(B * 2, D)[neg_idx]          # (B, N, 2, D)
    hn, tn = neg_embs[:, :, 0, :], neg_embs[:, :, 1, :]
    neg = _score_ref(hn, tn, rel_e, rel_model)          # (B, N)
    if loss_fn == "margin":
        model_loss = jnp.mean(jnp.maximum(1.0 - pos + neg, 0.0))
    else:
        model_loss = (jnp.mean(_softplus(-pos)) + jnp.mean(_softplus(neg))) / 2.0
    if regularizer > 0:
        reg = regularizer * (jnp.mean(heads ** 2) + jnp.mean(tails ** 2)
                             + jnp.mean(rel_e ** 2)) / 3.0
    else:
        reg = 0.0
    return model_loss + reg


if __name__ == "__main__":
    key = jax.random.PRNGKey(0)
    num_entities, num_relations = 40, 11
    dim = 32          # even (complex / simple chunk in halves)
    B, N = 8, 4       # batch size, negatives per positive

    k1, k2, k3, k4, k5 = jax.random.split(key, 5)

    # Deterministic xavier_uniform-style init.
    be = math.sqrt(6.0 / (num_entities + dim))
    ent_emb = jax.random.uniform(k1, (num_entities, dim), jnp.float32, -be, be)
    br = math.sqrt(6.0 / (num_relations + dim))
    rel_emb = jax.random.uniform(k2, (num_relations, dim), jnp.float32, -br, br)

    pos_pairs = jax.random.randint(k3, (B, 2), 0, num_entities, jnp.int32)
    rels = jax.random.randint(k4, (B, 1), 0, num_relations, jnp.int32)
    neg_idx = jax.random.randint(k5, (B, N, 2), 0, 2 * B, jnp.int32)

    configs = [
        dict(rel_model="transe", loss_fn="margin", regularizer=0.01),
        dict(rel_model="distmult", loss_fn="nll", regularizer=0.0),
        dict(rel_model="complex", loss_fn="nll", regularizer=0.01),
        dict(rel_model="simple", loss_fn="margin", regularizer=0.0),
    ]

    for cfg in configs:
        loss = link_prediction_forward(
            ent_emb, rel_emb, pos_pairs, rels, neg_idx, **cfg)
        loss = jax.block_until_ready(loss)
        ref = reference_forward(
            ent_emb, rel_emb, pos_pairs, rels, neg_idx, **cfg)
        assert jnp.allclose(loss, ref, rtol=1e-3, atol=1e-4), (
            cfg, float(loss), float(ref))

    print("KERNEL_OK")
</pallas_src>

<mosaic_0001>
module attributes {stable_mosaic.version = 11 : i64} {
  func.func @kernel(%arg0: i32, %arg1: memref<16x256xf32, #tpu.memory_space<vmem>>, %arg2: memref<8x256xf32, #tpu.memory_space<vmem>>, %arg3: memref<8x4xi32, #tpu.memory_space<vmem>>, %arg4: memref<8x4xi32, #tpu.memory_space<vmem>>, %arg5: memref<1xf32, #tpu.memory_space<smem>>) attributes {dimension_semantics = [#tpu.dimension_semantics<arbitrary>], iteration_bounds = array<i64: 1>, scalar_prefetch = 0 : i64, scratch_operands = 0 : i64, tpu.core_type = #tpu.core_type<tc>, window_params = [{pipeline_mode = #tpu.pipeline_mode<synchronous>, transform_indices = @transform_0, window_bounds = array<i64: 16, 256>}, {pipeline_mode = #tpu.pipeline_mode<synchronous>, transform_indices = @transform_1, window_bounds = array<i64: 8, 256>}, {pipeline_mode = #tpu.pipeline_mode<synchronous>, transform_indices = @transform_2, window_bounds = array<i64: 8, 4>}, {pipeline_mode = #tpu.pipeline_mode<synchronous>, transform_indices = @transform_3, window_bounds = array<i64: 8, 4>}, {transform_indices = @transform_4, window_bounds = array<i64: 1>}]} {
    %c0 = arith.constant 0 : index
    %c0_0 = arith.constant 0 : index
    %0 = vector.load %arg1[%c0, %c0_0] : memref<16x256xf32, #tpu.memory_space<vmem>>, vector<16x256xf32>
    %c0_1 = arith.constant 0 : index
    %c0_2 = arith.constant 0 : index
    %1 = vector.load %arg2[%c0_1, %c0_2] : memref<8x256xf32, #tpu.memory_space<vmem>>, vector<8x256xf32>
    %c0_3 = arith.constant 0 : index
    %c0_4 = arith.constant 0 : index
    %2 = vector.load %arg3[%c0_3, %c0_4] : memref<8x4xi32, #tpu.memory_space<vmem>>, vector<8x4xi32>
    %c0_5 = arith.constant 0 : index
    %c0_6 = arith.constant 0 : index
    %3 = vector.load %arg4[%c0_5, %c0_6] : memref<8x4xi32, #tpu.memory_space<vmem>>, vector<8x4xi32>
    %4 = arith.mulf %0, %0 : vector<16x256xf32>
    %cst = arith.constant dense<0.000000e+00> : vector<16xf32>
    %5 = vector.multi_reduction <add>, %4, %cst [1] : vector<16x256xf32> to vector<16xf32>
    %6 = vector.shape_cast %5 : vector<16xf32> to vector<16x1xf32>
    %cst_7 = arith.constant 1.000000e-24 : f32
    %7 = vector.broadcast %cst_7 : f32 to vector<16x1xf32>
    %8 = arith.maximumf %6, %7 : vector<16x1xf32>
    %9 = math.rsqrt %8 : vector<16x1xf32>
    %10 = vector.broadcast %9 : vector<16x1xf32> to vector<16x256xf32>
    %11 = arith.mulf %0, %10 : vector<16x256xf32>
    %12 = tpu.iota {dimensions = array<i32: 1>} : vector<8x16xi32>
    %13 = tpu.iota {dimensions = array<i32: 0>} : vector<8x16xi32>
    %c2_i32 = arith.constant 2 : i32
    %14 = vector.broadcast %c2_i32 : i32 to vector<8x16xi32>
    %15 = arith.muli %14, %13 : vector<8x16xi32>
    %16 = arith.cmpi eq, %12, %15 : vector<8x16xi32>
    %17 = arith.extui %16 : vector<8x16xi1> to vector<8x16xi32>
    %18 = arith.sitofp %17 : vector<8x16xi32> to vector<8x16xf32>
    %cst_8 = arith.constant dense<0.000000e+00> : vector<8x256xf32>
    %19 = tpu.matmul %18, %11, %cst_8 {dimension_numbers = #tpu.dot_dimension_numbers<[1], [0], [0], [1], [0, 0, 1, 1], [], []>, precision = #tpu.contract_precision<fp32>} : vector<8x16xf32>, vector<16x256xf32>, vector<8x256xf32> -> vector<8x256xf32>
    %c2_i32_9 = arith.constant 2 : i32
    %20 = vector.broadcast %c2_i32_9 : i32 to vector<8x16xi32>
    %21 = arith.muli %20, %13 : vector<8x16xi32>
    %c1_i32 = arith.constant 1 : i32
    %22 = vector.broadcast %c1_i32 : i32 to vector<8x16xi32>
    %23 = arith.addi %21, %22 : vector<8x16xi32>
    %24 = arith.cmpi eq, %12, %23 : vector<8x16xi32>
    %25 = arith.extui %24 : vector<8x16xi1> to vector<8x16xi32>
    %26 = arith.sitofp %25 : vector<8x16xi32> to vector<8x16xf32>
    %cst_10 = arith.constant dense<0.000000e+00> : vector<8x256xf32>
    %27 = tpu.matmul %26, %11, %cst_10 {dimension_numbers = #tpu.dot_dimension_numbers<[1], [0], [0], [1], [0, 0, 1, 1], [], []>, precision = #tpu.contract_precision<fp32>} : vector<8x16xf32>, vector<16x256xf32>, vector<8x256xf32> -> vector<8x256xf32>
    %28 = arith.addf %19, %1 : vector<8x256xf32>
    %29 = arith.subf %28, %27 : vector<8x256xf32>
    %30 = math.absf %29 : vector<8x256xf32>
    %cst_11 = arith.constant dense<0.000000e+00> : vector<8xf32>
    %31 = vector.multi_reduction <add>, %30, %cst_11 [1] : vector<8x256xf32> to vector<8xf32>
    %32 = vector.shape_cast %31 : vector<8xf32> to vector<8x1xf32>
    %cst_12 = arith.constant 0.000000e+00 : f32
    %33 = vector.broadcast %cst_12 : f32 to vector<8x1xf32>
    %34 = arith.subf %33, %32 : vector<8x1xf32>
    %cst_13 = arith.constant 0.000000e+00 : f32
    %35 = vector.broadcast %cst_13 : f32 to vector<8x1xf32>
    %36 = vector.extract_strided_slice %2 {offsets = [0, 0], sizes = [8, 1], strides = [1, 1]} : vector<8x4xi32> to vector<8x1xi32>
    %37 = vector.broadcast %36 : vector<8x1xi32> to vector<8x16xi32>
    %38 = arith.cmpi eq, %12, %37 : vector<8x16xi32>
    %39 = arith.extui %38 : vector<8x16xi1> to vector<8x16xi32>
    %40 = arith.sitofp %39 : vector<8x16xi32> to vector<8x16xf32>
    %41 = vector.extract_strided_slice %3 {offsets = [0, 0], sizes = [8, 1], strides = [1, 1]} : vector<8x4xi32> to vector<8x1xi32>
    %42 = vector.broadcast %41 : vector<8x1xi32> to vector<8x16xi32>
    %43 = arith.cmpi eq, %12, %42 : vector<8x16xi32>
    %44 = arith.extui %43 : vector<8x16xi1> to vector<8x16xi32>
    %45 = arith.sitofp %44 : vector<8x16xi32> to vector<8x16xf32>
    %cst_14 = arith.constant dense<0.000000e+00> : vector<8x256xf32>
    %46 = tpu.matmul %40, %11, %cst_14 {dimension_numbers = #tpu.dot_dimension_numbers<[1], [0], [0], [1], [0, 0, 1, 1], [], []>, precision = #tpu.contract_precision<fp32>} : vector<8x16xf32>, vector<16x256xf32>, vector<8x256xf32> -> vector<8x256xf32>
    %cst_15 = arith.constant dense<0.000000e+00> : vector<8x256xf32>
    %47 = tpu.matmul %45, %11, %cst_15 {dimension_numbers = #tpu.dot_dimension_numbers<[1], [0], [0], [1], [0, 0, 1, 1], [], []>, precision = #tpu.contract_precision<fp32>} : vector<8x16xf32>, vector<16x256xf32>, vector<8x256xf32> -> vector<8x256xf32>
    %48 = arith.addf %46, %1 : vector<8x256xf32>
    %49 = arith.subf %48, %47 : vector<8x256xf32>
    %50 = math.absf %49 : vector<8x256xf32>
    %cst_16 = arith.constant dense<0.000000e+00> : vector<8xf32>
    %51 = vector.multi_reduction <add>, %50, %cst_16 [1] : vector<8x256xf32> to vector<8xf32>
    %52 = vector.shape_cast %51 : vector<8xf32> to vector<8x1xf32>
    %cst_17 = arith.constant 0.000000e+00 : f32
    %53 = vector.broadcast %cst_17 : f32 to vector<8x1xf32>
    %54 = arith.subf %53, %52 : vector<8x1xf32>
    %cst_18 = arith.constant 1.000000e+00 : f32
    %55 = vector.broadcast %cst_18 : f32 to vector<8x1xf32>
    %56 = arith.subf %55, %34 : vector<8x1xf32>
    %57 = arith.addf %56, %54 : vector<8x1xf32>
    %cst_19 = arith.constant 0.000000e+00 : f32
    %58 = vector.broadcast %cst_19 : f32 to vector<8x1xf32>
    %59 = arith.maximumf %57, %58 : vector<8x1xf32>
    %60 = arith.addf %35, %59 : vector<8x1xf32>
    %61 = vector.extract_strided_slice %2 {offsets = [0, 1], sizes = [8, 1], strides = [1, 1]} : vector<8x4xi32> to vector<8x1xi32>
    %62 = vector.broadcast %61 : vector<8x1xi32> to vector<8x16xi32>
    %63 = arith.cmpi eq, %12, %62 : vector<8x16xi32>
    %64 = arith.extui %63 : vector<8x16xi1> to vector<8x16xi32>
    %65 = arith.sitofp %64 : vector<8x16xi32> to vector<8x16xf32>
    %66 = vector.extract_strided_slice %3 {offsets = [0, 1], sizes = [8, 1], strides = [1, 1]} : vector<8x4xi32> to vector<8x1xi32>
    %67 = vector.broadcast %66 : vector<8x1xi32> to vector<8x16xi32>
    %68 = arith.cmpi eq, %12, %67 : vector<8x16xi32>
    %69 = arith.extui %68 : vector<8x16xi1> to vector<8x16xi32>
    %70 = arith.sitofp %69 : vector<8x16xi32> to vector<8x16xf32>
    %cst_20 = arith.constant dense<0.000000e+00> : vector<8x256xf32>
    %71 = tpu.matmul %65, %11, %cst_20 {dimension_numbers = #tpu.dot_dimension_numbers<[1], [0], [0], [1], [0, 0, 1, 1], [], []>, precision = #tpu.contract_precision<fp32>} : vector<8x16xf32>, vector<16x256xf32>, vector<8x256xf32> -> vector<8x256xf32>
    %cst_21 = arith.constant dense<0.000000e+00> : vector<8x256xf32>
    %72 = tpu.matmul %70, %11, %cst_21 {dimension_numbers = #tpu.dot_dimension_numbers<[1], [0], [0], [1], [0, 0, 1, 1], [], []>, precision = #tpu.contract_precision<fp32>} : vector<8x16xf32>, vector<16x256xf32>, vector<8x256xf32> -> vector<8x256xf32>
    %73 = arith.addf %71, %1 : vector<8x256xf32>
    %74 = arith.subf %73, %72 : vector<8x256xf32>
    %75 = math.absf %74 : vector<8x256xf32>
    %cst_22 = arith.constant dense<0.000000e+00> : vector<8xf32>
    %76 = vector.multi_reduction <add>, %75, %cst_22 [1] : vector<8x256xf32> to vector<8xf32>
    %77 = vector.shape_cast %76 : vector<8xf32> to vector<8x1xf32>
    %cst_23 = arith.constant 0.000000e+00 : f32
    %78 = vector.broadcast %cst_23 : f32 to vector<8x1xf32>
    %79 = arith.subf %78, %77 : vector<8x1xf32>
    %cst_24 = arith.constant 1.000000e+00 : f32
    %80 = vector.broadcast %cst_24 : f32 to vector<8x1xf32>
    %81 = arith.subf %80, %34 : vector<8x1xf32>
    %82 = arith.addf %81, %79 : vector<8x1xf32>
    %cst_25 = arith.constant 0.000000e+00 : f32
    %83 = vector.broadcast %cst_25 : f32 to vector<8x1xf32>
    %84 = arith.maximumf %82, %83 : vector<8x1xf32>
    %85 = arith.addf %60, %84 : vector<8x1xf32>
    %86 = vector.extract_strided_slice %2 {offsets = [0, 2], sizes = [8, 1], strides = [1, 1]} : vector<8x4xi32> to vector<8x1xi32>
    %87 = vector.broadcast %86 : vector<8x1xi32> to vector<8x16xi32>
    %88 = arith.cmpi eq, %12, %87 : vector<8x16xi32>
    %89 = arith.extui %88 : vector<8x16xi1> to vector<8x16xi32>
    %90 = arith.sitofp %89 : vector<8x16xi32> to vector<8x16xf32>
    %91 = vector.extract_strided_slice %3 {offsets = [0, 2], sizes = [8, 1], strides = [1, 1]} : vector<8x4xi32> to vector<8x1xi32>
    %92 = vector.broadcast %91 : vector<8x1xi32> to vector<8x16xi32>
    %93 = arith.cmpi eq, %12, %92 : vector<8x16xi32>
    %94 = arith.extui %93 : vector<8x16xi1> to vector<8x16xi32>
    %95 = arith.sitofp %94 : vector<8x16xi32> to vector<8x16xf32>
    %cst_26 = arith.constant dense<0.000000e+00> : vector<8x256xf32>
    %96 = tpu.matmul %90, %11, %cst_26 {dimension_numbers = #tpu.dot_dimension_numbers<[1], [0], [0], [1], [0, 0, 1, 1], [], []>, precision = #tpu.contract_precision<fp32>} : vector<8x16xf32>, vector<16x256xf32>, vector<8x256xf32> -> vector<8x256xf32>
    %cst_27 = arith.constant dense<0.000000e+00> : vector<8x256xf32>
    %97 = tpu.matmul %95, %11, %cst_27 {dimension_numbers = #tpu.dot_dimension_numbers<[1], [0], [0], [1], [0, 0, 1, 1], [], []>, precision = #tpu.contract_precision<fp32>} : vector<8x16xf32>, vector<16x256xf32>, vector<8x256xf32> -> vector<8x256xf32>
    %98 = arith.addf %96, %1 : vector<8x256xf32>
    %99 = arith.subf %98, %97 : vector<8x256xf32>
    %100 = math.absf %99 : vector<8x256xf32>
    %cst_28 = arith.constant dense<0.000000e+00> : vector<8xf32>
    %101 = vector.multi_reduction <add>, %100, %cst_28 [1] : vector<8x256xf32> to vector<8xf32>
    %102 = vector.shape_cast %101 : vector<8xf32> to vector<8x1xf32>
    %cst_29 = arith.constant 0.000000e+00 : f32
    %103 = vector.broadcast %cst_29 : f32 to vector<8x1xf32>
    %104 = arith.subf %103, %102 : vector<8x1xf32>
    %cst_30 = arith.constant 1.000000e+00 : f32
    %105 = vector.broadcast %cst_30 : f32 to vector<8x1xf32>
    %106 = arith.subf %105, %34 : vector<8x1xf32>
    %107 = arith.addf %106, %104 : vector<8x1xf32>
    %cst_31 = arith.constant 0.000000e+00 : f32
    %108 = vector.broadcast %cst_31 : f32 to vector<8x1xf32>
    %109 = arith.maximumf %107, %108 : vector<8x1xf32>
    %110 = arith.addf %85, %109 : vector<8x1xf32>
    %111 = vector.extract_strided_slice %2 {offsets = [0, 3], sizes = [8, 1], strides = [1, 1]} : vector<8x4xi32> to vector<8x1xi32>
    %112 = vector.broadcast %111 : vector<8x1xi32> to vector<8x16xi32>
    %113 = arith.cmpi eq, %12, %112 : vector<8x16xi32>
    %114 = arith.extui %113 : vector<8x16xi1> to vector<8x16xi32>
    %115 = arith.sitofp %114 : vector<8x16xi32> to vector<8x16xf32>
    %116 = vector.extract_strided_slice %3 {offsets = [0, 3], sizes = [8, 1], strides = [1, 1]} : vector<8x4xi32> to vector<8x1xi32>
    %117 = vector.broadcast %116 : vector<8x1xi32> to vector<8x16xi32>
    %118 = arith.cmpi eq, %12, %117 : vector<8x16xi32>
    %119 = arith.extui %118 : vector<8x16xi1> to vector<8x16xi32>
    %120 = arith.sitofp %119 : vector<8x16xi32> to vector<8x16xf32>
    %cst_32 = arith.constant dense<0.000000e+00> : vector<8x256xf32>
    %121 = tpu.matmul %115, %11, %cst_32 {dimension_numbers = #tpu.dot_dimension_numbers<[1], [0], [0], [1], [0, 0, 1, 1], [], []>, precision = #tpu.contract_precision<fp32>} : vector<8x16xf32>, vector<16x256xf32>, vector<8x256xf32> -> vector<8x256xf32>
    %cst_33 = arith.constant dense<0.000000e+00> : vector<8x256xf32>
    %122 = tpu.matmul %120, %11, %cst_33 {dimension_numbers = #tpu.dot_dimension_numbers<[1], [0], [0], [1], [0, 0, 1, 1], [], []>, precision = #tpu.contract_precision<fp32>} : vector<8x16xf32>, vector<16x256xf32>, vector<8x256xf32> -> vector<8x256xf32>
    %123 = arith.addf %121, %1 : vector<8x256xf32>
    %124 = arith.subf %123, %122 : vector<8x256xf32>
    %125 = math.absf %124 : vector<8x256xf32>
    %cst_34 = arith.constant dense<0.000000e+00> : vector<8xf32>
    %126 = vector.multi_reduction <add>, %125, %cst_34 [1] : vector<8x256xf32> to vector<8xf32>
    %127 = vector.shape_cast %126 : vector<8xf32> to vector<8x1xf32>
    %cst_35 = arith.constant 0.000000e+00 : f32
    %128 = vector.broadcast %cst_35 : f32 to vector<8x1xf32>
    %129 = arith.subf %128, %127 : vector<8x1xf32>
    %cst_36 = arith.constant 1.000000e+00 : f32
    %130 = vector.broadcast %cst_36 : f32 to vector<8x1xf32>
    %131 = arith.subf %130, %34 : vector<8x1xf32>
    %132 = arith.addf %131, %129 : vector<8x1xf32>
    %cst_37 = arith.constant 0.000000e+00 : f32
    %133 = vector.broadcast %cst_37 : f32 to vector<8x1xf32>
    %134 = arith.maximumf %132, %133 : vector<8x1xf32>
    %135 = arith.addf %110, %134 : vector<8x1xf32>
    %136 = vector.shape_cast %135 : vector<8x1xf32> to vector<1x8x1xf32>
    %cst_38 = arith.constant dense<0.000000e+00> : vector<1xf32>
    %137 = vector.multi_reduction <add>, %136, %cst_38 [1, 2] : vector<1x8x1xf32> to vector<1xf32>
    %138 = vector.shape_cast %137 : vector<1xf32> to vector<1x1x1xf32>
    %139 = vector.extract %138[0, 0, 0] : f32 from vector<1x1x1xf32>
    %cst_39 = arith.constant 3.125000e-02 : f32
    %140 = arith.mulf %139, %cst_39 : f32
    %141 = arith.mulf %19, %19 : vector<8x256xf32>
    %142 = vector.shape_cast %141 : vector<8x256xf32> to vector<1x8x256xf32>
    %cst_40 = arith.constant dense<0.000000e+00> : vector<1xf32>
    %143 = vector.multi_reduction <add>, %142, %cst_40 [1, 2] : vector<1x8x256xf32> to vector<1xf32>
    %144 = vector.shape_cast %143 : vector<1xf32> to vector<1x1x1xf32>
    %145 = vector.extract %144[0, 0, 0] : f32 from vector<1x1x1xf32>
    %146 = arith.mulf %27, %27 : vector<8x256xf32>
    %147 = vector.shape_cast %146 : vector<8x256xf32> to vector<1x8x256xf32>
    %cst_41 = arith.constant dense<0.000000e+00> : vector<1xf32>
    %148 = vector.multi_reduction <add>, %147, %cst_41 [1, 2] : vector<1x8x256xf32> to vector<1xf32>
    %149 = vector.shape_cast %148 : vector<1xf32> to vector<1x1x1xf32>
    %150 = vector.extract %149[0, 0, 0] : f32 from vector<1x1x1xf32>
    %151 = arith.addf %145, %150 : f32
    %152 = arith.mulf %1, %1 : vector<8x256xf32>
    %153 = vector.shape_cast %152 : vector<8x256xf32> to vector<1x8x256xf32>
    %cst_42 = arith.constant dense<0.000000e+00> : vector<1xf32>
    %154 = vector.multi_reduction <add>, %153, %cst_42 [1, 2] : vector<1x8x256xf32> to vector<1xf32>
    %155 = vector.shape_cast %154 : vector<1xf32> to vector<1x1x1xf32>
    %156 = vector.extract %155[0, 0, 0] : f32 from vector<1x1x1xf32>
    %157 = arith.addf %151, %156 : f32
    %cst_43 = arith.constant 0.00999999977 : f32
    %158 = arith.mulf %cst_43, %157 : f32
    %cst_44 = arith.constant 0.00130208337 : f32
    %159 = arith.mulf %158, %cst_44 : f32
    %160 = arith.addf %140, %159 : f32
    %c0_45 = arith.constant 0 : index
    %161 = memref.load %arg5[%c0_45] : memref<1xf32, #tpu.memory_space<smem>>
    memref.store %160, %arg5[%c0_45] : memref<1xf32, #tpu.memory_space<smem>>
    return
  }
  func.func @transform_0(%arg0: i32) -> (i32, i32) {
    %c0_i32 = arith.constant 0 : i32
    %c0_i32_0 = arith.constant 0 : i32
    %c0_i32_1 = arith.constant 0 : i32
    return %c0_i32, %c0_i32_0 : i32, i32
  }
  func.func @transform_1(%arg0: i32) -> (i32, i32) {
    %c0_i32 = arith.constant 0 : i32
    %c0_i32_0 = arith.constant 0 : i32
    %c0_i32_1 = arith.constant 0 : i32
    return %c0_i32, %c0_i32_0 : i32, i32
  }
  func.func @transform_2(%arg0: i32) -> (i32, i32) {
    %c0_i32 = arith.constant 0 : i32
    %c0_i32_0 = arith.constant 0 : i32
    %c0_i32_1 = arith.constant 0 : i32
    return %c0_i32, %c0_i32_0 : i32, i32
  }
  func.func @transform_3(%arg0: i32) -> (i32, i32) {
    %c0_i32 = arith.constant 0 : i32
    %c0_i32_0 = arith.constant 0 : i32
    %c0_i32_1 = arith.constant 0 : i32
    return %c0_i32, %c0_i32_0 : i32, i32
  }
  func.func @transform_4(%arg0: i32) -> i32 {
    %c0_i32 = arith.constant 0 : i32
    %c0_i32_0 = arith.constant 0 : i32
    return %c0_i32 : i32
  }
}

</mosaic_0001>

<llo_original>
// kernel: tpu_custom_call.1
$region0: #{tpu_custom_call.1}
  #allocation0 [shape = 'u32[]', space=smem, size = 0x4, offset = 0x4, fixed_abs, tag = 'smem constant byte address 0x4 - core index']
  #allocation1 [shape = 'u32[144,128]{1,0:T(1,128)}', space=vmem, size = 0x12000, scoped, tag = 'internal scratch']
  %s0 = inlined_call_operand.hbm [shape: f32[16,256], index: 0, kind: input, shape index: {}]
  %s1 = inlined_call_operand.vmem [shape: f32[8,256], index: 1, kind: input, shape index: {}]
  %s2 = inlined_call_operand.vmem [shape: s32[8,4], index: 2, kind: input, shape index: {}]
  %s3 = inlined_call_operand.vmem [shape: s32[8,4], index: 3, kind: input, shape index: {}]
  %s4 = inlined_call_operand.hbm [shape: f32[1], index: 4, kind: output, shape index: {}]
  %s5 = sld [smem:[#allocation0]]
  $region30: #{tpu_custom_call.1} parent=0
    _
  %s7 = ssub.s32 1, %s5
  %s8 = scalar_select 0, %s7, %s5
  $region1: #{tpu_custom_call.1} parent=0
    #allocation2 [shape = 'u8[16384]{0}', space=vmem, size = 0x4000, scoped, tag = 'input window, operand 0, single buffered']
    #allocation3 [shape = 's32[1]{0}', space=sflag, size = 0x4, scoped, tag = 'scoped memory for tpu_custom_call.1']
    #allocation4 [shape = 's32[1]{0}', space=sflag, size = 0x4, scoped, tag = 'scoped memory for tpu_custom_call.1']
    #allocation5 [shape = 'u8[512]{0}', space=smem, size = 0x200, scoped, tag = 'output window, operand 0, single buffered']
    %9 = vsyncpa [#allocation3], 0
    %10 = vsyncpa [#allocation4], 0
    // Predicated region
    $region2: #{tpu_custom_call.1} parent=1 // pred_check
      _
    $region3: #{tpu_custom_call.1} parent=1 // pred_check_branch
      %12 = sbr.rel (0) target = $region5
    $region4: #{tpu_custom_call.1} parent=1 // pred_region
      %s14 = ssub.s32 512, 512
      %15 = vsyncadd [#allocation3], %s14
      %s16 = sshll.u32 [#allocation2], 4
      %s17 = int_to_ptr.vmem [resolvable:$true] %s16
      %22 = dma.hbm_to_vmem [thread:$0]  %s0, 512, %s17, [#allocation3], 256, 256, 16
    $region5: #{tpu_custom_call.1} parent=1 // pred_fallthru
      _
    // Predicated region
    $region6: #{tpu_custom_call.1} parent=1 // pred_check
      _
    $region7: #{tpu_custom_call.1} parent=1 // pred_check_branch
      %24 = sbr.rel (0) target = $region9
    $region8: #{tpu_custom_call.1} parent=1 // pred_region
      _
    $region9: #{tpu_custom_call.1} parent=1 // pred_fallthru
      _
    // Predicated region
    $region10: #{tpu_custom_call.1} parent=1 // pred_check
      _
    $region11: #{tpu_custom_call.1} parent=1 // pred_check_branch
      %26 = sbr.rel (0) target = $region13
    $region12: #{tpu_custom_call.1} parent=1 // pred_region
      _
    $region13: #{tpu_custom_call.1} parent=1 // pred_fallthru
      _
    // Predicated region
    $region14: #{tpu_custom_call.1} parent=1 // pred_check
      _
    $region15: #{tpu_custom_call.1} parent=1 // pred_check_branch
      %28 = sbr.rel (0) target = $region17
    $region16: #{tpu_custom_call.1} parent=1 // pred_region
      _
    $region17: #{tpu_custom_call.1} parent=1 // pred_fallthru
      _
    // Predicated region
    $region18: #{tpu_custom_call.1} parent=1 // pred_check
      _
    $region19: #{tpu_custom_call.1} parent=1 // pred_check_branch
      %30 = sbr.rel (0) target = $region21
    $region20: #{tpu_custom_call.1} parent=1 // pred_region
      %31 = dma.done [#allocation3], 512
    $region21: #{tpu_custom_call.1} parent=1 // pred_fallthru
      _
    %v32 = vld [vmem:[#allocation2] sm:$0xff]
    %v33 = vld [vmem:[#allocation2 + $0x8] sm:$0xff]
    %v34 = vld [vmem:[#allocation2 + $0x10] sm:$0xff]
    %v35 = vld [vmem:[#allocation2 + $0x18] sm:$0xff]
    %v36 = vld [vmem:[%s1] sm:$0xff]
    %v37 = vld [vmem:[%s1 + $0x8] sm:$0xff]
    %v38 = vld [vmem:[%s2] sm:$0xff]
    %v39 = vld [vmem:[%s3] sm:$0xff]
    %v40 = vmul.f32 %v32, %v32
    %v41 = vmul.f32 %v33, %v33
    %v42 = vmul.f32 %v34, %v34
    %v43 = vmul.f32 %v35, %v35
    %v44 = vadd.f32 %v40, %v41
    %45 = vadd.xlane.f32.xlu0 %v44
    %v46 = vpop.xlane.xlu0 %45
    %v47 = vadd.f32 %v42, %v43
    %48 = vadd.xlane.f32.xlu0 %v47
    %v49 = vpop.xlane.xlu0 %48
    %v50 = vmax.f32 %v46, 1e-24
    %v51 = vmax.f32 %v49, 1e-24
    %v52 = vrsqrt.pop %v50
    %v53 = vrsqrt.pop %v51
    %v54 = vmul.f32 %v32, %v52
    %v55 = vmul.f32 %v33, %v52
    %v56 = vmul.f32 %v34, %v53
    %v57 = vmul.f32 %v35, %v53
    %v58 = vlaneseq
    %v59 = vand.u32 %v58, 127
    %v60 = vlaneseq
    %v61 = vshrl.u32 %v60, 7
    %v62 = vmul.u32 %v61, 2
    %vm63 = vcmp.eq.s32.totalorder %v59, %v62
    %v64 = vsel %vm63, 1, 0
    %v65 = vcvt.s32.f32 %v64
    %vm66 = vcmask 130048
    %v68 = vsel %vm66, %v65, 0
    %v70 = vand.u32 %v55, 4294901760
    %71 = vmatprep.subr.mxu0 %v70
    %v72 = vand.u32 %v54, 4294901760
    %73 = vmatpush1.msra.mxu0 %v72
    %v74 = vand.u32 %v57, 4294901760
    %75 = vmatprep.subr.mxu0 %v74
    %v76 = vand.u32 %v56, 4294901760
    %77 = vmatpush1.msra.mxu0 %v76
    %78 = vmatprep.subr.mxu0 0.0
    %79 = vmatpush1.msra.mxu0 0.0
    %80 = vmatprep.subr.mxu0 0.0
    %81 = vmatpush1.msra.mxu0 0.0
    %82 = vmatprep.subr.mxu0 0.0
    %83 = vmatpush1.msra.mxu0 0.0
    %84 = vmatprep.subr.mxu0 0.0
    %85 = vmatpush1.msra.mxu0 0.0
    %86 = vmatprep.subr.mxu0 0.0
    %87 = vmatpush1.msra.mxu0 0.0
    %88 = vmatprep.subr.mxu0 0.0
    %89 = vmatpush1.msra.mxu0 0.0
    %90 = vmatprep.subr.mxu0 0.0
    %91 = vmatpush1.msra.mxu0 0.0
    %92 = vmatprep.subr.mxu0 0.0
    %93 = vmatpush1.msra.mxu0 0.0
    %94 = vmatprep.subr.mxu0 0.0
    %95 = vmatpush1.msra.mxu0 0.0
    %96 = vmatprep.subr.mxu0 0.0
    %97 = vmatpush1.msra.mxu0 0.0
    %98 = vmatprep.subr.mxu0 0.0
    %99 = vmatpush1.msra.mxu0 0.0
    %100 = vmatprep.subr.mxu0 0.0
    %101 = vmatpush1.msra.mxu0 0.0
    %102 = vmatprep.subr.mxu0 0.0
    %103 = vmatpush1.msra.mxu0 0.0
    %104 = vmatprep.subr.mxu0 0.0
    %105 = vmatpush1.msra.mxu0 0.0
    %106 = vmatprep.subr.mxu0 0.0
    %107 = vmatpush1.msra.mxu0 0.0
    %108 = vmatprep.subr.mxu0 0.0
    %109 = vmatpush1.msra.mxu0 0.0
    %110 = vmatprep.subr.mxu0 0.0
    %111 = vmatpush1.msra.mxu0 0.0
    %112 = vmatprep.subr.mxu0 0.0
    %113 = vmatpush1.msra.mxu0 0.0
    %114 = vmatprep.subr.mxu0 0.0
    %115 = vmatpush1.msra.mxu0 0.0
    %116 = vmatprep.subr.mxu0 0.0
    %117 = vmatpush1.msra.mxu0 0.0
    %118 = vmatprep.subr.mxu0 0.0
    %119 = vmatpush1.msra.mxu0 0.0
    %120 = vmatprep.subr.mxu0 0.0
    %121 = vmatpush1.msra.mxu0 0.0
    %122 = vmatprep.subr.mxu0 0.0
    %123 = vmatpush1.msra.mxu0 0.0
    %124 = vmatprep.subr.mxu0 0.0
    %125 = vmatpush1.msra.mxu0 0.0
    %126 = vmatprep.subr.mxu0 0.0
    %127 = vmatpush1.msra.mxu0 0.0
    %128 = vmatprep.subr.mxu0 0.0
    %129 = vmatpush1.msra.mxu0 0.0
    %130 = vmatprep.subr.mxu0 0.0
    %131 = vmatpush1.msra.mxu0 0.0
    %132 = vmatprep.subr.mxu0 0.0
    %133 = vmatpush1.msra.mxu0 0.0
    %134 = vmatprep.subr.mxu0 0.0
    %135 = vmatpush1.msra.mxu0 0.0
    %136 = vmatprep.subr.mxu0 0.0
    %137 = vmatpush1.msra.mxu0 0.0
    %138 = vmatprep.mubr.f32.mxu0 0.0
    %v139 = vand.u32 %v68, 4294901760
    %v140 = vsub.f32 %v68, %v139
    %v141 = vand.u32 %v140, 4294901760
    %v142 = vsub.f32 %v140, %v141
    %v143 = vand.u32 %v142, 4294901760
    %144 = vmatmul.mubr.f32.gmra.mrb[0].mxu0 %v143
    %v145 = vpop.f32.mrb[0].mxu0
    %v146 = vadd.f32 0.0, %v145
    %v147 = vpop.f32.mrb[0].mxu0
    %v148 = vadd.f32 0.0, %v147
    %149 = vdwg.mxu0
    %v150 = vand.u32 %v55, 4294901760
    %v151 = vsub.f32 %v55, %v150
    %v152 = vand.u32 %v151, 4294901760
    %v153 = vsub.f32 %v151, %v152
    %v154 = vand.u32 %v153, 4294901760
    %155 = vmatprep.subr.mxu0 %v154
    %v156 = vand.u32 %v54, 4294901760
    %v157 = vsub.f32 %v54, %v156
    %v158 = vand.u32 %v157, 4294901760
    %v159 = vsub.f32 %v157, %v158
    %v160 = vand.u32 %v159, 4294901760
    %161 = vmatpush1.msra.mxu0 %v160
    %v162 = vand.u32 %v57, 4294901760
    %v163 = vsub.f32 %v57, %v162
    %v164 = vand.u32 %v163, 4294901760
    %v165 = vsub.f32 %v163, %v164
    %v166 = vand.u32 %v165, 4294901760
    %167 = vmatprep.subr.mxu0 %v166
    %v168 = vand.u32 %v56, 4294901760
    %v169 = vsub.f32 %v56, %v168
    %v170 = vand.u32 %v169, 4294901760
    %v171 = vsub.f32 %v169, %v170
    %v172 = vand.u32 %v171, 4294901760
    %173 = vmatpush1.msra.mxu0 %v172
    %174 = vmatprep.subr.mxu0 0.0
    %175 = vmatpush1.msra.mxu0 0.0
    %176 = vmatprep.subr.mxu0 0.0
    %177 = vmatpush1.msra.mxu0 0.0
    %178 = vmatprep.subr.mxu0 0.0
    %179 = vmatpush1.msra.mxu0 0.0
    %180 = vmatprep.subr.mxu0 0.0
    %181 = vmatpush1.msra.mxu0 0.0
    %182 = vmatprep.subr.mxu0 0.0
    %183 = vmatpush1.msra.mxu0 0.0
    %184 = vmatprep.subr.mxu0 0.0
    %185 = vmatpush1.msra.mxu0 0.0
    %186 = vmatprep.subr.mxu0 0.0
    %187 = vmatpush1.msra.mxu0 0.0
    %188 = vmatprep.subr.mxu0 0.0
    %189 = vmatpush1.msra.mxu0 0.0
    %190 = vmatprep.subr.mxu0 0.0
    %191 = vmatpush1.msra.mxu0 0.0
    %192 = vmatprep.subr.mxu0 0.0
    %193 = vmatpush1.msra.mxu0 0.0
    %194 = vmatprep.subr.mxu0 0.0
    %195 = vmatpush1.msra.mxu0 0.0
    %196 = vmatprep.subr.mxu0 0.0
    %197 = vmatpush1.msra.mxu0 0.0
    %198 = vmatprep.subr.mxu0 0.0
    %199 = vmatpush1.msra.mxu0 0.0
    %200 = vmatprep.subr.mxu0 0.0
    %201 = vmatpush1.msra.mxu0 0.0
    %202 = vmatprep.subr.mxu0 0.0
    %203 = vmatpush1.msra.mxu0 0.0
    %204 = vmatprep.subr.mxu0 0.0
    %205 = vmatpush1.msra.mxu0 0.0
    %206 = vmatprep.subr.mxu0 0.0
    %207 = vmatpush1.msra.mxu0 0.0
    %208 = vmatprep.subr.mxu0 0.0
    %209 = vmatpush1.msra.mxu0 0.0
    %210 = vmatprep.subr.mxu0 0.0
    %211 = vmatpush1.msra.mxu0 0.0
    %212 = vmatprep.subr.mxu0 0.0
    %213 = vmatpush1.msra.mxu0 0.0
    %214 = vmatprep.subr.mxu0 0.0
    %215 = vmatpush1.msra.mxu0 0.0
    %216 = vmatprep.subr.mxu0 0.0
    %217 = vmatpush1.msra.mxu0 0.0
    %218 = vmatprep.subr.mxu0 0.0
    %219 = vmatpush1.msra.mxu0 0.0
    %220 = vmatprep.subr.mxu0 0.0
    %221 = vmatpush1.msra.mxu0 0.0
    %222 = vmatprep.subr.mxu0 0.0
    %223 = vmatpush1.msra.mxu0 0.0
    %224 = vmatprep.subr.mxu0 0.0
    %225 = vmatpush1.msra.mxu0 0.0
    %226 = vmatprep.subr.mxu0 0.0
    %227 = vmatpush1.msra.mxu0 0.0
    %228 = vmatprep.subr.mxu0 0.0
    %229 = vmatpush1.msra.mxu0 0.0
    %230 = vmatprep.subr.mxu0 0.0
    %231 = vmatpush1.msra.mxu0 0.0
    %232 = vmatprep.subr.mxu0 0.0
    %233 = vmatpush1.msra.mxu0 0.0
    %234 = vmatprep.mubr.f32.mxu0 0.0
    %v235 = vand.u32 %v68, 4294901760
    %236 = vmatmul.mubr.f32.gmra.mrb[0].mxu0 %v235
    %v237 = vpop.f32.mrb[0].mxu0
    %v238 = vadd.f32 %v146, %v237
    %v239 = vpop.f32.mrb[0].mxu0
    %v240 = vadd.f32 %v148, %v239
    %241 = vdwg.mxu0
    %v242 = vand.u32 %v55, 4294901760
    %v243 = vsub.f32 %v55, %v242
    %244 = vmatprep.subr.mxu0 %v243
    %v245 = vand.u32 %v54, 4294901760
    %v246 = vsub.f32 %v54, %v245
    %247 = vmatpush1.msra.mxu0 %v246
    %v248 = vand.u32 %v57, 4294901760
    %v249 = vsub.f32 %v57, %v248
    %250 = vmatprep.subr.mxu0 %v249
    %v251 = vand.u32 %v56, 4294901760
    %v252 = vsub.f32 %v56, %v251
    %253 = vmatpush1.msra.mxu0 %v252
    %254 = vmatprep.subr.mxu0 0.0
    %255 = vmatpush1.msra.mxu0 0.0
    %256 = vmatprep.subr.mxu0 0.0
    %257 = vmatpush1.msra.mxu0 0.0
    %258 = vmatprep.subr.mxu0 0.0
    %259 = vmatpush1.msra.mxu0 0.0
    %260 = vmatprep.subr.mxu0 0.0
    %261 = vmatpush1.msra.mxu0 0.0
    %262 = vmatprep.subr.mxu0 0.0
    %263 = vmatpush1.msra.mxu0 0.0
    %264 = vmatprep.subr.mxu0 0.0
    %265 = vmatpush1.msra.mxu0 0.0
    %266 = vmatprep.subr.mxu0 0.0
    %267 = vmatpush1.msra.mxu0 0.0
    %268 = vmatprep.subr.mxu0 0.0
    %269 = vmatpush1.msra.mxu0 0.0
    %270 = vmatprep.subr.mxu0 0.0
    %271 = vmatpush1.msra.mxu0 0.0
    %272 = vmatprep.subr.mxu0 0.0
    %273 = vmatpush1.msra.mxu0 0.0
    %274 = vmatprep.subr.mxu0 0.0
    %275 = vmatpush1.msra.mxu0 0.0
    %276 = vmatprep.subr.mxu0 0.0
    %277 = vmatpush1.msra.mxu0 0.0
    %278 = vmatprep.subr.mxu0 0.0
    %279 = vmatpush1.msra.mxu0 0.0
    %280 = vmatprep.subr.mxu0 0.0
    %281 = vmatpush1.msra.mxu0 0.0
    %282 = vmatprep.subr.mxu0 0.0
    %283 = vmatpush1.msra.mxu0 0.0
    %284 = vmatprep.subr.mxu0 0.0
    %285 = vmatpush1.msra.mxu0 0.0
    %286 = vmatprep.subr.mxu0 0.0
    %287 = vmatpush1.msra.mxu0 0.0
    %288 = vmatprep.subr.mxu0 0.0
    %289 = vmatpush1.msra.mxu0 0.0
    %290 = vmatprep.subr.mxu0 0.0
    %291 = vmatpush1.msra.mxu0 0.0
    %292 = vmatprep.subr.mxu0 0.0
    %293 = vmatpush1.msra.mxu0 0.0
    %294 = vmatprep.subr.mxu0 0.0
    %295 = vmatpush1.msra.mxu0 0.0
    %296 = vmatprep.subr.mxu0 0.0
    %297 = vmatpush1.msra.mxu0 0.0
    %298 = vmatprep.subr.mxu0 0.0
    %299 = vmatpush1.msra.mxu0 0.0
    %300 = vmatprep.subr.mxu0 0.0
    %301 = vmatpush1.msra.mxu0 0.0
    %302 = vmatprep.subr.mxu0 0.0
    %303 = vmatpush1.msra.mxu0 0.0
    %304 = vmatprep.subr.mxu0 0.0
    %305 = vmatpush1.msra.mxu0 0.0
    %306 = vmatprep.subr.mxu0 0.0
    %307 = vmatpush1.msra.mxu0 0.0
    %308 = vmatprep.subr.mxu0 0.0
    %309 = vmatpush1.msra.mxu0 0.0
    %310 = vmatprep.subr.mxu0 0.0
    %311 = vmatpush1.msra.mxu0 0.0
    %312 = vmatprep.subr.mxu0 0.0
    %313 = vmatpush1.msra.mxu0 0.0
    %314 = vmatprep.mubr.f32.mxu0 0.0
    %v315 = vand.u32 %v68, 4294901760
    %v316 = vsub.f32 %v68, %v315
    %317 = vmatmul.mubr.f32.gmra.mrb[0].mxu0 %v316
    %v318 = vpop.f32.mrb[0].mxu0
    %v319 = vadd.f32 %v238, %v318
    %v320 = vpop.f32.mrb[0].mxu0
    %v321 = vadd.f32 %v240, %v320
    %322 = vdwg.mxu0
    %v323 = vand.u32 %v55, 4294901760
    %324 = vmatprep.subr.mxu0 %v323
    %v325 = vand.u32 %v54, 4294901760
    %326 = vmatpush1.msra.mxu0 %v325
    %v327 = vand.u32 %v57, 4294901760
    %328 = vmatprep.subr.mxu0 %v327
    %v329 = vand.u32 %v56, 4294901760
    %330 = vmatpush1.msra.mxu0 %v329
    %331 = vmatprep.subr.mxu0 0.0
    %332 = vmatpush1.msra.mxu0 0.0
    %333 = vmatprep.subr.mxu0 0.0
    %334 = vmatpush1.msra.mxu0 0.0
    %335 = vmatprep.subr.mxu0 0.0
    %336 = vmatpush1.msra.mxu0 0.0
    %337 = vmatprep.subr.mxu0 0.0
    %338 = vmatpush1.msra.mxu0 0.0
    %339 = vmatprep.subr.mxu0 0.0
    %340 = vmatpush1.msra.mxu0 0.0
    %341 = vmatprep.subr.mxu0 0.0
    %342 = vmatpush1.msra.mxu0 0.0
    %343 = vmatprep.subr.mxu0 0.0
    %344 = vmatpush1.msra.mxu0 0.0
    %345 = vmatprep.subr.mxu0 0.0
    %346 = vmatpush1.msra.mxu0 0.0
    %347 = vmatprep.subr.mxu0 0.0
    %348 = vmatpush1.msra.mxu0 0.0
    %349 = vmatprep.subr.mxu0 0.0
    %350 = vmatpush1.msra.mxu0 0.0
    %351 = vmatprep.subr.mxu0 0.0
    %352 = vmatpush1.msra.mxu0 0.0
    %353 = vmatprep.subr.mxu0 0.0
    %354 = vmatpush1.msra.mxu0 0.0
    %355 = vmatprep.subr.mxu0 0.0
    %356 = vmatpush1.msra.mxu0 0.0
    %357 = vmatprep.subr.mxu0 0.0
    %358 = vmatpush1.msra.mxu0 0.0
    %359 = vmatprep.subr.mxu0 0.0
    %360 = vmatpush1.msra.mxu0 0.0
    %361 = vmatprep.subr.mxu0 0.0
    %362 = vmatpush1.msra.mxu0 0.0
    %363 = vmatprep.subr.mxu0 0.0
    %364 = vmatpush1.msra.mxu0 0.0
    %365 = vmatprep.subr.mxu0 0.0
    %366 = vmatpush1.msra.mxu0 0.0
    %367 = vmatprep.subr.mxu0 0.0
    %368 = vmatpush1.msra.mxu0 0.0
    %369 = vmatprep.subr.mxu0 0.0
    %370 = vmatpush1.msra.mxu0 0.0
    %371 = vmatprep.subr.mxu0 0.0
    %372 = vmatpush1.msra.mxu0 0.0
    %373 = vmatprep.subr.mxu0 0.0
    %374 = vmatpush1.msra.mxu0 0.0
    %375 = vmatprep.subr.mxu0 0.0
    %376 = vmatpush1.msra.mxu0 0.0
    %377 = vmatprep.subr.mxu0 0.0
    %378 = vmatpush1.msra.mxu0 0.0
    %379 = vmatprep.subr.mxu0 0.0
    %380 = vmatpush1.msra.mxu0 0.0
    %381 = vmatprep.subr.mxu0 0.0
    %382 = vmatpush1.msra.mxu0 0.0
    %383 = vmatprep.subr.mxu0 0.0
    %384 = vmatpush1.msra.mxu0 0.0
    %385 = vmatprep.subr.mxu0 0.0
    %386 = vmatpush1.msra.mxu0 0.0
    %387 = vmatprep.subr.mxu0 0.0
    %388 = vmatpush1.msra.mxu0 0.0
    %389 = vmatprep.subr.mxu0 0.0
    %390 = vmatpush1.msra.mxu0 0.0
    %391 = vmatprep.mubr.f32.mxu0 0.0
    %v392 = vand.u32 %v68, 4294901760
    %v393 = vsub.f32 %v68, %v392
    %v394 = vand.u32 %v393, 4294901760
    %395 = vmatmul.mubr.f32.gmra.mrb[0].mxu0 %v394
    %v396 = vpop.f32.mrb[0].mxu0
    %v397 = vadd.f32 %v319, %v396
    %v398 = vpop.f32.mrb[0].mxu0
    %v399 = vadd.f32 %v321, %v398
    %400 = vdwg.mxu0
    %v401 = vand.u32 %v55, 4294901760
    %v402 = vsub.f32 %v55, %v401
    %v403 = vand.u32 %v402, 4294901760
    %404 = vmatprep.subr.mxu0 %v403
    %v405 = vand.u32 %v54, 4294901760
    %v406 = vsub.f32 %v54, %v405
    %v407 = vand.u32 %v406, 4294901760
    %408 = vmatpush1.msra.mxu0 %v407
    %v409 = vand.u32 %v57, 4294901760
    %v410 = vsub.f32 %v57, %v409
    %v411 = vand.u32 %v410, 4294901760
    %412 = vmatprep.subr.mxu0 %v411
    %v413 = vand.u32 %v56, 4294901760
    %v414 = vsub.f32 %v56, %v413
    %v415 = vand.u32 %v414, 4294901760
    %416 = vmatpush1.msra.mxu0 %v415
    %417 = vmatprep.subr.mxu0 0.0
    %418 = vmatpush1.msra.mxu0 0.0
    %419 = vmatprep.subr.mxu0 0.0
    %420 = vmatpush1.msra.mxu0 0.0
    %421 = vmatprep.subr.mxu0 0.0
    %422 = vmatpush1.msra.mxu0 0.0
    %423 = vmatprep.subr.mxu0 0.0
    %424 = vmatpush1.msra.mxu0 0.0
    %425 = vmatprep.subr.mxu0 0.0
    %426 = vmatpush1.msra.mxu0 0.0
    %427 = vmatprep.subr.mxu0 0.0
    %428 = vmatpush1.msra.mxu0 0.0
    %429 = vmatprep.subr.mxu0 0.0
    %430 = vmatpush1.msra.mxu0 0.0
    %431 = vmatprep.subr.mxu0 0.0
    %432 = vmatpush1.msra.mxu0 0.0
    %433 = vmatprep.subr.mxu0 0.0
    %434 = vmatpush1.msra.mxu0 0.0
    %435 = vmatprep.subr.mxu0 0.0
    %436 = vmatpush1.msra.mxu0 0.0
    %437 = vmatprep.subr.mxu0 0.0
    %438 = vmatpush1.msra.mxu0 0.0
    %439 = vmatprep.subr.mxu0 0.0
    %440 = vmatpush1.msra.mxu0 0.0
    %441 = vmatprep.subr.mxu0 0.0
    %442 = vmatpush1.msra.mxu0 0.0
    %443 = vmatprep.subr.mxu0 0.0
    %444 = vmatpush1.msra.mxu0 0.0
    %445 = vmatprep.subr.mxu0 0.0
    %446 = vmatpush1.msra.mxu0 0.0
    %447 = vmatprep.subr.mxu0 0.0
    %448 = vmatpush1.msra.mxu0 0.0
    %449 = vmatprep.subr.mxu0 0.0
    %450 = vmatpush1.msra.mxu0 0.0
    %451 = vmatprep.subr.mxu0 0.0
    %452 = vmatpush1.msra.mxu0 0.0
    %453 = vmatprep.subr.mxu0 0.0
    %454 = vmatpush1.msra.mxu0 0.0
    %455 = vmatprep.subr.mxu0 0.0
    %456 = vmatpush1.msra.mxu0 0.0
    %457 = vmatprep.subr.mxu0 0.0
    %458 = vmatpush1.msra.mxu0 0.0
    %459 = vmatprep.subr.mxu0 0.0
    %460 = vmatpush1.msra.mxu0 0.0
    %461 = vmatprep.subr.mxu0 0.0
    %462 = vmatpush1.msra.mxu0 0.0
    %463 = vmatprep.subr.mxu0 0.0
    %464 = vmatpush1.msra.mxu0 0.0
    %465 = vmatprep.subr.mxu0 0.0
    %466 = vmatpush1.msra.mxu0 0.0
    %467 = vmatprep.subr.mxu0 0.0
    %468 = vmatpush1.msra.mxu0 0.0
    %469 = vmatprep.subr.mxu0 0.0
    %470 = vmatpush1.msra.mxu0 0.0
    %471 = vmatprep.subr.mxu0 0.0
    %472 = vmatpush1.msra.mxu0 0.0
    %473 = vmatprep.subr.mxu0 0.0
    %474 = vmatpush1.msra.mxu0 0.0
    %475 = vmatprep.subr.mxu0 0.0
    %476 = vmatpush1.msra.mxu0 0.0
    %477 = vmatprep.mubr.f32.mxu0 0.0
    %v478 = vand.u32 %v68, 4294901760
    %479 = vmatmul.mubr.f32.gmra.mrb[0].mxu0 %v478
    %v480 = vpop.f32.mrb[0].mxu0
    %v481 = vadd.f32 %v397, %v480
    %v482 = vpop.f32.mrb[0].mxu0
    %v483 = vadd.f32 %v399, %v482
    %484 = vdwg.mxu0
    %v485 = vand.u32 %v55, 4294901760
    %486 = vmatprep.subr.mxu0 %v485
    %v487 = vand.u32 %v54, 4294901760
    %488 = vmatpush1.msra.mxu0 %v487
    %v489 = vand.u32 %v57, 4294901760
    %490 = vmatprep.subr.mxu0 %v489
    %v491 = vand.u32 %v56, 4294901760
    %492 = vmatpush1.msra.mxu0 %v491
    %493 = vmatprep.subr.mxu0 0.0
    %494 = vmatpush1.msra.mxu0 0.0
    %495 = vmatprep.subr.mxu0 0.0
    %496 = vmatpush1.msra.mxu0 0.0
    %497 = vmatprep.subr.mxu0 0.0
    %498 = vmatpush1.msra.mxu0 0.0
    %499 = vmatprep.subr.mxu0 0.0
    %500 = vmatpush1.msra.mxu0 0.0
    %501 = vmatprep.subr.mxu0 0.0
    %502 = vmatpush1.msra.mxu0 0.0
    %503 = vmatprep.subr.mxu0 0.0
    %504 = vmatpush1.msra.mxu0 0.0
    %505 = vmatprep.subr.mxu0 0.0
    %506 = vmatpush1.msra.mxu0 0.0
    %507 = vmatprep.subr.mxu0 0.0
    %508 = vmatpush1.msra.mxu0 0.0
    %509 = vmatprep.subr.mxu0 0.0
    %510 = vmatpush1.msra.mxu0 0.0
    %511 = vmatprep.subr.mxu0 0.0
    %512 = vmatpush1.msra.mxu0 0.0
    %513 = vmatprep.subr.mxu0 0.0
    %514 = vmatpush1.msra.mxu0 0.0
    %515 = vmatprep.subr.mxu0 0.0
    %516 = vmatpush1.msra.mxu0 0.0
    %517 = vmatprep.subr.mxu0 0.0
    %518 = vmatpush1.msra.mxu0 0.0
    %519 = vmatprep.subr.mxu0 0.0
    %520 = vmatpush1.msra.mxu0 0.0
    %521 = vmatprep.subr.mxu0 0.0
    %522 = vmatpush1.msra.mxu0 0.0
    %523 = vmatprep.subr.mxu0 0.0
    %524 = vmatpush1.msra.mxu0 0.0
    %525 = vmatprep.subr.mxu0 0.0
    %526 = vmatpush1.msra.mxu0 0.0
    %527 = vmatprep.subr.mxu0 0.0
    %528 = vmatpush1.msra.mxu0 0.0
    %529 = vmatprep.subr.mxu0 0.0
    %530 = vmatpush1.msra.mxu0 0.0
    %531 = vmatprep.subr.mxu0 0.0
    %532 = vmatpush1.msra.mxu0 0.0
    %533 = vmatprep.subr.mxu0 0.0
    %534 = vmatpush1.msra.mxu0 0.0
    %535 = vmatprep.subr.mxu0 0.0
    %536 = vmatpush1.msra.mxu0 0.0
    %537 = vmatprep.subr.mxu0 0.0
    %538 = vmatpush1.msra.mxu0 0.0
    %539 = vmatprep.subr.mxu0 0.0
    %540 = vmatpush1.msra.mxu0 0.0
    %541 = vmatprep.subr.mxu0 0.0
    %542 = vmatpush1.msra.mxu0 0.0
    %543 = vmatprep.subr.mxu0 0.0
    %544 = vmatpush1.msra.mxu0 0.0
    %545 = vmatprep.subr.mxu0 0.0
    %546 = vmatpush1.msra.mxu0 0.0
    %547 = vmatprep.subr.mxu0 0.0
    %548 = vmatpush1.msra.mxu0 0.0
    %549 = vmatprep.subr.mxu0 0.0
    %550 = vmatpush1.msra.mxu0 0.0
    %551 = vmatprep.subr.mxu0 0.0
    %552 = vmatpush1.msra.mxu0 0.0
    %553 = vmatprep.mubr.f32.mxu0 0.0
    %v554 = vand.u32 %v68, 4294901760
    %555 = vmatmul.mubr.f32.gmra.mrb[0].mxu0 %v554
    %v556 = vpop.f32.mrb[0].mxu0
    %v557 = vadd.f32 %v481, %v556
    %v558 = vpop.f32.mrb[0].mxu0
    %v559 = vadd.f32 %v483, %v558
    %560 = vdwg.mxu0
    %v561 = vadd.s32 %v62, 1
    %vm562 = vcmp.eq.s32.totalorder %v59, %v561
    %v563 = vsel %vm562, 1, 0
    %v564 = vcvt.s32.f32 %v563
    %v566 = vsel %vm66, %v564, 0
    %v568 = vand.u32 %v55, 4294901760
    %569 = vmatprep.subr.mxu0 %v568
    %v570 = vand.u32 %v54, 4294901760
    %571 = vmatpush1.msra.mxu0 %v570
    %v572 = vand.u32 %v57, 4294901760
    %573 = vmatprep.subr.mxu0 %v572
    %v574 = vand.u32 %v56, 4294901760
    %575 = vmatpush1.msra.mxu0 %v574
    %576 = vmatprep.subr.mxu0 0.0
    %577 = vmatpush1.msra.mxu0 0.0
    %578 = vmatprep.subr.mxu0 0.0
    %579 = vmatpush1.msra.mxu0 0.0
    %580 = vmatprep.subr.mxu0 0.0
    %581 = vmatpush1.msra.mxu0 0.0
    %582 = vmatprep.subr.mxu0 0.0
    %583 = vmatpush1.msra.mxu0 0.0
    %584 = vmatprep.subr.mxu0 0.0
    %585 = vmatpush1.msra.mxu0 0.0
    %586 = vmatprep.subr.mxu0 0.0
    %587 = vmatpush1.msra.mxu0 0.0
    %588 = vmatprep.subr.mxu0 0.0
    %589 = vmatpush1.msra.mxu0 0.0
    %590 = vmatprep.subr.mxu0 0.0
    %591 = vmatpush1.msra.mxu0 0.0
    %592 = vmatprep.subr.mxu0 0.0
    %593 = vmatpush1.msra.mxu0 0.0
    %594 = vmatprep.subr.mxu0 0.0
    %595 = vmatpush1.msra.mxu0 0.0
    %596 = vmatprep.subr.mxu0 0.0
    %597 = vmatpush1.msra.mxu0 0.0
    %598 = vmatprep.subr.mxu0 0.0
    %599 = vmatpush1.msra.mxu0 0.0
    %600 = vmatprep.subr.mxu0 0.0
    %601 = vmatpush1.msra.mxu0 0.0
    %602 = vmatprep.subr.mxu0 0.0
    %603 = vmatpush1.msra.mxu0 0.0
    %604 = vmatprep.subr.mxu0 0.0
    %605 = vmatpush1.msra.mxu0 0.0
    %606 = vmatprep.subr.mxu0 0.0
    %607 = vmatpush1.msra.mxu0 0.0
    %608 = vmatprep.subr.mxu0 0.0
    %609 = vmatpush1.msra.mxu0 0.0
    %610 = vmatprep.subr.mxu0 0.0
    %611 = vmatpush1.msra.mxu0 0.0
    %612 = vmatprep.subr.mxu0 0.0
    %613 = vmatpush1.msra.mxu0 0.0
    %614 = vmatprep.subr.mxu0 0.0
    %615 = vmatpush1.msra.mxu0 0.0
    %616 = vmatprep.subr.mxu0 0.0
    %617 = vmatpush1.msra.mxu0 0.0
    %618 = vmatprep.subr.mxu0 0.0
    %619 = vmatpush1.msra.mxu0 0.0
    %620 = vmatprep.subr.mxu0 0.0
    %621 = vmatpush1.msra.mxu0 0.0
    %622 = vmatprep.subr.mxu0 0.0
    %623 = vmatpush1.msra.mxu0 0.0
    %624 = vmatprep.subr.mxu0 0.0
    %625 = vmatpush1.msra.mxu0 0.0
    %626 = vmatprep.subr.mxu0 0.0
    %627 = vmatpush1.msra.mxu0 0.0
    %628 = vmatprep.subr.mxu0 0.0
    %629 = vmatpush1.msra.mxu0 0.0
    %630 = vmatprep.subr.mxu0 0.0
    %631 = vmatpush1.msra.mxu0 0.0
    %632 = vmatprep.subr.mxu0 0.0
    %633 = vmatpush1.msra.mxu0 0.0
    %634 = vmatprep.subr.mxu0 0.0
    %635 = vmatpush1.msra.mxu0 0.0
    %636 = vmatprep.mubr.f32.mxu0 0.0
    %v637 = vand.u32 %v566, 4294901760
    %v638 = vsub.f32 %v566, %v637
    %v639 = vand.u32 %v638, 4294901760
    %v640 = vsub.f32 %v638, %v639
    %v641 = vand.u32 %v640, 4294901760
    %642 = vmatmul.mubr.f32.gmra.mrb[0].mxu0 %v641
    %v643 = vpop.f32.mrb[0].mxu0
    %v644 = vadd.f32 0.0, %v643
    %v645 = vpop.f32.mrb[0].mxu0
    %v646 = vadd.f32 0.0, %v645
    %647 = vdwg.mxu0
    %v648 = vand.u32 %v55, 4294901760
    %v649 = vsub.f32 %v55, %v648
    %v650 = vand.u32 %v649, 4294901760
    %v651 = vsub.f32 %v649, %v650
    %v652 = vand.u32 %v651, 4294901760
    %653 = vmatprep.subr.mxu0 %v652
    %v654 = vand.u32 %v54, 4294901760
    %v655 = vsub.f32 %v54, %v654
    %v656 = vand.u32 %v655, 4294901760
    %v657 = vsub.f32 %v655, %v656
    %v658 = vand.u32 %v657, 4294901760
    %659 = vmatpush1.msra.mxu0 %v658
    %v660 = vand.u32 %v57, 4294901760
    %v661 = vsub.f32 %v57, %v660
    %v662 = vand.u32 %v661, 4294901760
    %v663 = vsub.f32 %v661, %v662
    %v664 = vand.u32 %v663, 4294901760
    %665 = vmatprep.subr.mxu0 %v664
    %v666 = vand.u32 %v56, 4294901760
    %v667 = vsub.f32 %v56, %v666
    %v668 = vand.u32 %v667, 4294901760
    %v669 = vsub.f32 %v667, %v668
    %v670 = vand.u32 %v669, 4294901760
    %671 = vmatpush1.msra.mxu0 %v670
    %672 = vmatprep.subr.mxu0 0.0
    %673 = vmatpush1.msra.mxu0 0.0
    %674 = vmatprep.subr.mxu0 0.0
    %675 = vmatpush1.msra.mxu0 0.0
    %676 = vmatprep.subr.mxu0 0.0
    %677 = vmatpush1.msra.mxu0 0.0
    %678 = vmatprep.subr.mxu0 0.0
    %679 = vmatpush1.msra.mxu0 0.0
    %680 = vmatprep.subr.mxu0 0.0
    %681 = vmatpush1.msra.mxu0 0.0
    %682 = vmatprep.subr.mxu0 0.0
    %683 = vmatpush1.msra.mxu0 0.0
    %684 = vmatprep.subr.mxu0 0.0
    %685 = vmatpush1.msra.mxu0 0.0
    %686 = vmatprep.subr.mxu0 0.0
    %687 = vmatpush1.msra.mxu0 0.0
    %688 = vmatprep.subr.mxu0 0.0
    %689 = vmatpush1.msra.mxu0 0.0
    %690 = vmatprep.subr.mxu0 0.0
    %691 = vmatpush1.msra.mxu0 0.0
    %692 = vmatprep.subr.mxu0 0.0
    %693 = vmatpush1.msra.mxu0 0.0
    %694 = vmatprep.subr.mxu0 0.0
    %695 = vmatpush1.msra.mxu0 0.0
    %696 = vmatprep.subr.mxu0 0.0
    %697 = vmatpush1.msra.mxu0 0.0
    %698 = vmatprep.subr.mxu0 0.0
    %699 = vmatpush1.msra.mxu0 0.0
    %700 = vmatprep.subr.mxu0 0.0
    %701 = vmatpush1.msra.mxu0 0.0
    %702 = vmatprep.subr.mxu0 0.0
    %703 = vmatpush1.msra.mxu0 0.0
    %704 = vmatprep.subr.mxu0 0.0
    %705 = vmatpush1.msra.mxu0 0.0
    %706 = vmatprep.subr.mxu0 0.0
    %707 = vmatpush1.msra.mxu0 0.0
    %708 = vmatprep.subr.mxu0 0.0
    %709 = vmatpush1.msra.mxu0 0.0
    %710 = vmatprep.subr.mxu0 0.0
    %711 = vmatpush1.msra.mxu0 0.0
    %712 = vmatprep.subr.mxu0 0.0
    %713 = vmatpush1.msra.mxu0 0.0
    %714 = vmatprep.subr.mxu0 0.0
    %715 = vmatpush1.msra.mxu0 0.0
    %716 = vmatprep.subr.mxu0 0.0
    %717 = vmatpush1.msra.mxu0 0.0
    %718 = vmatprep.subr.mxu0 0.0
    %719 = vmatpush1.msra.mxu0 0.0
    %720 = vmatprep.subr.mxu0 0.0
    %721 = vmatpush1.msra.mxu0 0.0
    %722 = vmatprep.subr.mxu0 0.0
    %723 = vmatpush1.msra.mxu0 0.0
    %724 = vmatprep.subr.mxu0 0.0
    %725 = vmatpush1.msra.mxu0 0.0
    %726 = vmatprep.subr.mxu0 0.0
    %727 = vmatpush1.msra.mxu0 0.0
    %728 = vmatprep.subr.mxu0 0.0
    %729 = vmatpush1.msra.mxu0 0.0
    %730 = vmatprep.subr.mxu0 0.0
    %731 = vmatpush1.msra.mxu0 0.0
    %732 = vmatprep.mubr.f32.mxu0 0.0
    %v733 = vand.u32 %v566, 4294901760
    %734 = vmatmul.mubr.f32.gmra.mrb[0].mxu0 %v733
    %v735 = vpop.f32.mrb[0].mxu0
    %v736 = vadd.f32 %v644, %v735
    %v737 = vpop.f32.mrb[0].mxu0
    %v738 = vadd.f32 %v646, %v737
    %739 = vdwg.mxu0
    %v740 = vand.u32 %v55, 4294901760
    %v741 = vsub.f32 %v55, %v740
    %742 = vmatprep.subr.mxu0 %v741
    %v743 = vand.u32 %v54, 4294901760
    %v744 = vsub.f32 %v54, %v743
    %745 = vmatpush1.msra.mxu0 %v744
    %v746 = vand.u32 %v57, 4294901760
    %v747 = vsub.f32 %v57, %v746
    %748 = vmatprep.subr.mxu0 %v747
    %v749 = vand.u32 %v56, 4294901760
    %v750 = vsub.f32 %v56, %v749
    %751 = vmatpush1.msra.mxu0 %v750
    %752 = vmatprep.subr.mxu0 0.0
    %753 = vmatpush1.msra.mxu0 0.0
    %754 = vmatprep.subr.mxu0 0.0
    %755 = vmatpush1.msra.mxu0 0.0
    %756 = vmatprep.subr.mxu0 0.0
    %757 = vmatpush1.msra.mxu0 0.0
    %758 = vmatprep.subr.mxu0 0.0
    %759 = vmatpush1.msra.mxu0 0.0
    %760 = vmatprep.subr.mxu0 0.0
    %761 = vmatpush1.msra.mxu0 0.0
    %762 = vmatprep.subr.mxu0 0.0
    %763 = vmatpush1.msra.mxu0 0.0
    %764 = vmatprep.subr.mxu0 0.0
    %765 = vmatpush1.msra.mxu0 0.0
    %766 = vmatprep.subr.mxu0 0.0
    %767 = vmatpush1.msra.mxu0 0.0
    %768 = vmatprep.subr.mxu0 0.0
    %769 = vmatpush1.msra.mxu0 0.0
    %770 = vmatprep.subr.mxu0 0.0
    %771 = vmatpush1.msra.mxu0 0.0
    %772 = vmatprep.subr.mxu0 0.0
    %773 = vmatpush1.msra.mxu0 0.0
    %774 = vmatprep.subr.mxu0 0.0
    %775 = vmatpush1.msra.mxu0 0.0
    %776 = vmatprep.subr.mxu0 0.0
    %777 = vmatpush1.msra.mxu0 0.0
    %778 = vmatprep.subr.mxu0 0.0
    %779 = vmatpush1.msra.mxu0 0.0
    %780 = vmatprep.subr.mxu0 0.0
    %781 = vmatpush1.msra.mxu0 0.0
    %782 = vmatprep.subr.mxu0 0.0
    %783 = vmatpush1.msra.mxu0 0.0
    %784 = vmatprep.subr.mxu0 0.0
    %785 = vmatpush1.msra.mxu0 0.0
    %786 = vmatprep.subr.mxu0 0.0
    %787 = vmatpush1.msra.mxu0 0.0
    %788 = vmatprep.subr.mxu0 0.0
    %789 = vmatpush1.msra.mxu0 0.0
    %790 = vmatprep.subr.mxu0 0.0
    %791 = vmatpush1.msra.mxu0 0.0
    %792 = vmatprep.subr.mxu0 0.0
    %793 = vmatpush1.msra.mxu0 0.0
    %794 = vmatprep.subr.mxu0 0.0
    %795 = vmatpush1.msra.mxu0 0.0
    %796 = vmatprep.subr.mxu0 0.0
    %797 = vmatpush1.msra.mxu0 0.0
    %798 = vmatprep.subr.mxu0 0.0
    %799 = vmatpush1.msra.mxu0 0.0
    %800 = vmatprep.subr.mxu0 0.0
    %801 = vmatpush1.msra.mxu0 0.0
    %802 = vmatprep.subr.mxu0 0.0
    %803 = vmatpush1.msra.mxu0 0.0
    %804 = vmatprep.subr.mxu0 0.0
    %805 = vmatpush1.msra.mxu0 0.0
    %806 = vmatprep.subr.mxu0 0.0
    %807 = vmatpush1.msra.mxu0 0.0
    %808 = vmatprep.subr.mxu0 0.0
    %809 = vmatpush1.msra.mxu0 0.0
    %810 = vmatprep.subr.mxu0 0.0
    %811 = vmatpush1.msra.mxu0 0.0
    %812 = vmatprep.mubr.f32.mxu0 0.0
    %v813 = vand.u32 %v566, 4294901760
    %v814 = vsub.f32 %v566, %v813
    %815 = vmatmul.mubr.f32.gmra.mrb[0].mxu0 %v814
    %v816 = vpop.f32.mrb[0].mxu0
    %v817 = vadd.f32 %v736, %v816
    %v818 = vpop.f32.mrb[0].mxu0
    %v819 = vadd.f32 %v738, %v818
    %820 = vdwg.mxu0
    %v821 = vand.u32 %v55, 4294901760
    %822 = vmatprep.subr.mxu0 %v821
    %v823 = vand.u32 %v54, 4294901760
    %824 = vmatpush1.msra.mxu0 %v823
    %v825 = vand.u32 %v57, 4294901760
    %826 = vmatprep.subr.mxu0 %v825
    %v827 = vand.u32 %v56, 4294901760
    %828 = vmatpush1.msra.mxu0 %v827
    %829 = vmatprep.subr.mxu0 0.0
    %830 = vmatpush1.msra.mxu0 0.0
    %831 = vmatprep.subr.mxu0 0.0
    %832 = vmatpush1.msra.mxu0 0.0
    %833 = vmatprep.subr.mxu0 0.0
    %834 = vmatpush1.msra.mxu0 0.0
    %835 = vmatprep.subr.mxu0 0.0
    %836 = vmatpush1.msra.mxu0 0.0
    %837 = vmatprep.subr.mxu0 0.0
    %838 = vmatpush1.msra.mxu0 0.0
    %839 = vmatprep.subr.mxu0 0.0
    %840 = vmatpush1.msra.mxu0 0.0
    %841 = vmatprep.subr.mxu0 0.0
    %842 = vmatpush1.msra.mxu0 0.0
    %843 = vmatprep.subr.mxu0 0.0
    %844 = vmatpush1.msra.mxu0 0.0
    %845 = vmatprep.subr.mxu0 0.0
    %846 = vmatpush1.msra.mxu0 0.0
    %847 = vmatprep.subr.mxu0 0.0
    %848 = vmatpush1.msra.mxu0 0.0
    %849 = vmatprep.subr.mxu0 0.0
    %850 = vmatpush1.msra.mxu0 0.0
    %851 = vmatprep.subr.mxu0 0.0
    %852 = vmatpush1.msra.mxu0 0.0
    %853 = vmatprep.subr.mxu0 0.0
    %854 = vmatpush1.msra.mxu0 0.0
    %855 = vmatprep.subr.mxu0 0.0
    %856 = vmatpush1.msra.mxu0 0.0
    %857 = vmatprep.subr.mxu0 0.0
    %858 = vmatpush1.msra.mxu0 0.0
    %859 = vmatprep.subr.mxu0 0.0
    %860 = vmatpush1.msra.mxu0 0.0
    %861 = vmatprep.subr.mxu0 0.0
    %862 = vmatpush1.msra.mxu0 0.0
    %863 = vmatprep.subr.mxu0 0.0
    %864 = vmatpush1.msra.mxu0 0.0
    %865 = vmatprep.subr.mxu0 0.0
    %866 = vmatpush1.msra.mxu0 0.0
    %867 = vmatprep.subr.mxu0 0.0
    %868 = vmatpush1.msra.mxu0 0.0
    %869 = vmatprep.subr.mxu0 0.0
    %870 = vmatpush1.msra.mxu0 0.0
    %871 = vmatprep.subr.mxu0 0.0
    %872 = vmatpush1.msra.mxu0 0.0
    %873 = vmatprep.subr.mxu0 0.0
    %874 = vmatpush1.msra.mxu0 0.0
    %875 = vmatprep.subr.mxu0 0.0
    %876 = vmatpush1.msra.mxu0 0.0
    %877 = vmatprep.subr.mxu0 0.0
    %878 = vmatpush1.msra.mxu0 0.0
    %879 = vmatprep.subr.mxu0 0.0
    %880 = vmatpush1.msra.mxu0 0.0
    %881 = vmatprep.subr.mxu0 0.0
    %882 = vmatpush1.msra.mxu0 0.0
    %883 = vmatprep.subr.mxu0 0.0
    %884 = vmatpush1.msra.mxu0 0.0
    %885 = vmatprep.subr.mxu0 0.0
    %886 = vmatpush1.msra.mxu0 0.0
    %887 = vmatprep.subr.mxu0 0.0
    %888 = vmatpush1.msra.mxu0 0.0
    %889 = vmatprep.mubr.f32.mxu0 0.0
    %v890 = vand.u32 %v566, 4294901760
    %v891 = vsub.f32 %v566, %v890
    %v892 = vand.u32 %v891, 4294901760
    %893 = vmatmul.mubr.f32.gmra.mrb[0].mxu0 %v892
    %v894 = vpop.f32.mrb[0].mxu0
    %v895 = vadd.f32 %v817, %v894
    %v896 = vpop.f32.mrb[0].mxu0
    %v897 = vadd.f32 %v819, %v896
    %898 = vdwg.mxu0
    %v899 = vand.u32 %v55, 4294901760
    %v900 = vsub.f32 %v55, %v899
    %v901 = vand.u32 %v900, 4294901760
    %902 = vmatprep.subr.mxu0 %v901
    %v903 = vand.u32 %v54, 4294901760
    %v904 = vsub.f32 %v54, %v903
    %v905 = vand.u32 %v904, 4294901760
    %906 = vmatpush1.msra.mxu0 %v905
    %v907 = vand.u32 %v57, 4294901760
    %v908 = vsub.f32 %v57, %v907
    %v909 = vand.u32 %v908, 4294901760
    %910 = vmatprep.subr.mxu0 %v909
    %v911 = vand.u32 %v56, 4294901760
    %v912 = vsub.f32 %v56, %v911
    %v913 = vand.u32 %v912, 4294901760
    %914 = vmatpush1.msra.mxu0 %v913
    %915 = vmatprep.subr.mxu0 0.0
    %916 = vmatpush1.msra.mxu0 0.0
    %917 = vmatprep.subr.mxu0 0.0
    %918 = vmatpush1.msra.mxu0 0.0
    %919 = vmatprep.subr.mxu0 0.0
    %920 = vmatpush1.msra.mxu0 0.0
    %921 = vmatprep.subr.mxu0 0.0
    %922 = vmatpush1.msra.mxu0 0.0
    %923 = vmatprep.subr.mxu0 0.0
    %924 = vmatpush1.msra.mxu0 0.0
    %925 = vmatprep.subr.mxu0 0.0
    %926 = vmatpush1.msra.mxu0 0.0
    %927 = vmatprep.subr.mxu0 0.0
    %928 = vmatpush1.msra.mxu0 0.0
    %929 = vmatprep.subr.mxu0 0.0
    %930 = vmatpush1.msra.mxu0 0.0
    %931 = vmatprep.subr.mxu0 0.0
    %932 = vmatpush1.msra.mxu0 0.0
    %933 = vmatprep.subr.mxu0 0.0
    %934 = vmatpush1.msra.mxu0 0.0
    %935 = vmatprep.subr.mxu0 0.0
    %936 = vmatpush1.msra.mxu0 0.0
    %937 = vmatprep.subr.mxu0 0.0
    %938 = vmatpush1.msra.mxu0 0.0
    %939 = vmatprep.subr.mxu0 0.0
    %940 = vmatpush1.msra.mxu0 0.0
    %941 = vmatprep.subr.mxu0 0.0
    %942 = vmatpush1.msra.mxu0 0.0
    %943 = vmatprep.subr.mxu0 0.0
    %944 = vmatpush1.msra.mxu0 0.0
    %945 = vmatprep.subr.mxu0 0.0
    %946 = vmatpush1.msra.mxu0 0.0
    %947 = vmatprep.subr.mxu0 0.0
    %948 = vmatpush1.msra.mxu0 0.0
    %949 = vmatprep.subr.mxu0 0.0
    %950 = vmatpush1.msra.mxu0 0.0
    %951 = vmatprep.subr.mxu0 0.0
    %952 = vmatpush1.msra.mxu0 0.0
    %953 = vmatprep.subr.mxu0 0.0
    %954 = vmatpush1.msra.mxu0 0.0
    %955 = vmatprep.subr.mxu0 0.0
    %956 = vmatpush1.msra.mxu0 0.0
    %957 = vmatprep.subr.mxu0 0.0
    %958 = vmatpush1.msra.mxu0 0.0
    %959 = vmatprep.subr.mxu0 0.0
    %960 = vmatpush1.msra.mxu0 0.0
    %961 = vmatprep.subr.mxu0 0.0
    %962 = vmatpush1.msra.mxu0 0.0
    %963 = vmatprep.subr.mxu0 0.0
    %964 = vmatpush1.msra.mxu0 0.0
    %965 = vmatprep.subr.mxu0 0.0
    %966 = vmatpush1.msra.mxu0 0.0
    %967 = vmatprep.subr.mxu0 0.0
    %968 = vmatpush1.msra.mxu0 0.0
    %969 = vmatprep.subr.mxu0 0.0
    %970 = vmatpush1.msra.mxu0 0.0
    %971 = vmatprep.subr.mxu0 0.0
    %972 = vmatpush1.msra.mxu0 0.0
    %973 = vmatprep.subr.mxu0 0.0
    %974 = vmatpush1.msra.mxu0 0.0
    %975 = vmatprep.mubr.f32.mxu0 0.0
    %v976 = vand.u32 %v566, 4294901760
    %977 = vmatmul.mubr.f32.gmra.mrb[0].mxu0 %v976
    %v978 = vpop.f32.mrb[0].mxu0
    %v979 = vadd.f32 %v895, %v978
    %v980 = vpop.f32.mrb[0].mxu0
    %v981 = vadd.f32 %v897, %v980
    %982 = vdwg.mxu0
    %v983 = vand.u32 %v55, 4294901760
    %984 = vmatprep.subr.mxu0 %v983
    %v985 = vand.u32 %v54, 4294901760
    %986 = vmatpush1.msra.mxu0 %v985
    %v987 = vand.u32 %v57, 4294901760
    %988 = vmatprep.subr.mxu0 %v987
    %v989 = vand.u32 %v56, 4294901760
    %990 = vmatpush1.msra.mxu0 %v989
    %991 = vmatprep.subr.mxu0 0.0
    %992 = vmatpush1.msra.mxu0 0.0
    %993 = vmatprep.subr.mxu0 0.0
    %994 = vmatpush1.msra.mxu0 0.0
    %995 = vmatprep.subr.mxu0 0.0
    %996 = vmatpush1.msra.mxu0 0.0
    %997 = vmatprep.subr.mxu0 0.0
    %998 = vmatpush1.msra.mxu0 0.0
    %999 = vmatprep.subr.mxu0 0.0
    %1000 = vmatpush1.msra.mxu0 0.0
    %1001 = vmatprep.subr.mxu0 0.0
    %1002 = vmatpush1.msra.mxu0 0.0
    %1003 = vmatprep.subr.mxu0 0.0
    %1004 = vmatpush1.msra.mxu0 0.0
    %1005 = vmatprep.subr.mxu0 0.0
    %1006 = vmatpush1.msra.mxu0 0.0
    %1007 = vmatprep.subr.mxu0 0.0
    %1008 = vmatpush1.msra.mxu0 0.0
    %1009 = vmatprep.subr.mxu0 0.0
    %1010 = vmatpush1.msra.mxu0 0.0
    %1011 = vmatprep.subr.mxu0 0.0
    %1012 = vmatpush1.msra.mxu0 0.0
    %1013 = vmatprep.subr.mxu0 0.0
    %1014 = vmatpush1.msra.mxu0 0.0
    %1015 = vmatprep.subr.mxu0 0.0
    %1016 = vmatpush1.msra.mxu0 0.0
    %1017 = vmatprep.subr.mxu0 0.0
    %1018 = vmatpush1.msra.mxu0 0.0
    %1019 = vmatprep.subr.mxu0 0.0
    %1020 = vmatpush1.msra.mxu0 0.0
    %1021 = vmatprep.subr.mxu0 0.0
    %1022 = vmatpush1.msra.mxu0 0.0
    %1023 = vmatprep.subr.mxu0 0.0
    %1024 = vmatpush1.msra.mxu0 0.0
    %1025 = vmatprep.subr.mxu0 0.0
    %1026 = vmatpush1.msra.mxu0 0.0
    %1027 = vmatprep.subr.mxu0 0.0
    %1028 = vmatpush1.msra.mxu0 0.0
    %1029 = vmatprep.subr.mxu0 0.0
    %1030 = vmatpush1.msra.mxu0 0.0
    %1031 = vmatprep.subr.mxu0 0.0
    %1032 = vmatpush1.msra.mxu0 0.0
    %1033 = vmatprep.subr.mxu0 0.0
    %1034 = vmatpush1.msra.mxu0 0.0
    %1035 = vmatprep.subr.mxu0 0.0
    %1036 = vmatpush1.msra.mxu0 0.0
    %1037 = vmatprep.subr.mxu0 0.0
    %1038 = vmatpush1.msra.mxu0 0.0
    %1039 = vmatprep.subr.mxu0 0.0
    %1040 = vmatpush1.msra.mxu0 0.0
    %1041 = vmatprep.subr.mxu0 0.0
    %1042 = vmatpush1.msra.mxu0 0.0
    %1043 = vmatprep.subr.mxu0 0.0
    %1044 = vmatpush1.msra.mxu0 0.0
    %1045 = vmatprep.subr.mxu0 0.0
    %1046 = vmatpush1.msra.mxu0 0.0
    %1047 = vmatprep.subr.mxu0 0.0
    %1048 = vmatpush1.msra.mxu0 0.0
    %1049 = vmatprep.subr.mxu0 0.0
    %1050 = vmatpush1.msra.mxu0 0.0
    %1051 = vmatprep.mubr.f32.mxu0 0.0
    %v1052 = vand.u32 %v566, 4294901760
    %1053 = vmatmul.mubr.f32.gmra.mrb[0].mxu0 %v1052
    %v1054 = vpop.f32.mrb[0].mxu0
    %v1055 = vadd.f32 %v979, %v1054
    %v1056 = vpop.f32.mrb[0].mxu0
    %v1057 = vadd.f32 %v981, %v1056
    %1058 = vdwg.mxu0
    %v1059 = vadd.f32 %v557, %v36
    %v1060 = vadd.f32 %v559, %v37
    %v1061 = vsub.f32 %v1059, %v1055
    %v1062 = vsub.f32 %v1060, %v1057
    %v1063 = vand.u32 2147483647, %v1061
    %v1064 = vand.u32 2147483647, %v1062
    %v1065 = vadd.f32 %v1063, %v1064
    %1066 = vadd.xlane.f32.xlu0 %v1065
    %v1067 = vpop.xlane.xlu0 %1066
    %v1068 = vsub.f32 0.0, %v1067
    %1069 = vset.pattern.permute.xlu0 0
    %1070 = vperm.xlu0 %1069, %v38
    %v1071 = vpop.permute.xlu0 %1070
    %vm1072 = vcmp.eq.s32.totalorder %v59, %v1071
    %v1073 = vsel %vm1072, 1, 0
    %v1074 = vcvt.s32.f32 %v1073
    %1075 = vset.pattern.permute.xlu0 0
    %1076 = vperm.xlu0 %1075, %v39
    %v1077 = vpop.permute.xlu0 %1076
    %vm1078 = vcmp.eq.s32.totalorder %v59, %v1077
    %v1079 = vsel %vm1078, 1, 0
    %v1080 = vcvt.s32.f32 %v1079
    %v1082 = vsel %vm66, %v1080, 0
    %v1084 = vand.u32 %v55, 4294901760
    %1085 = vmatprep.subr.mxu0 %v1084
    %v1086 = vand.u32 %v54, 4294901760
    %1087 = vmatpush1.msra.mxu0 %v1086
    %v1088 = vand.u32 %v57, 4294901760
    %1089 = vmatprep.subr.mxu0 %v1088
    %v1090 = vand.u32 %v56, 4294901760
    %1091 = vmatpush1.msra.mxu0 %v1090
    %1092 = vmatprep.subr.mxu0 0.0
    %1093 = vmatpush1.msra.mxu0 0.0
    %1094 = vmatprep.subr.mxu0 0.0
    %1095 = vmatpush1.msra.mxu0 0.0
    %1096 = vmatprep.subr.mxu0 0.0
    %1097 = vmatpush1.msra.mxu0 0.0
    %1098 = vmatprep.subr.mxu0 0.0
    %1099 = vmatpush1.msra.mxu0 0.0
    %1100 = vmatprep.subr.mxu0 0.0
    %1101 = vmatpush1.msra.mxu0 0.0
    %1102 = vmatprep.subr.mxu0 0.0
    %1103 = vmatpush1.msra.mxu0 0.0
    %1104 = vmatprep.subr.mxu0 0.0
    %1105 = vmatpush1.msra.mxu0 0.0
    %1106 = vmatprep.subr.mxu0 0.0
    %1107 = vmatpush1.msra.mxu0 0.0
    %1108 = vmatprep.subr.mxu0 0.0
    %1109 = vmatpush1.msra.mxu0 0.0
    %1110 = vmatprep.subr.mxu0 0.0
    %1111 = vmatpush1.msra.mxu0 0.0
    %1112 = vmatprep.subr.mxu0 0.0
    %1113 = vmatpush1.msra.mxu0 0.0
    %1114 = vmatprep.subr.mxu0 0.0
    %1115 = vmatpush1.msra.mxu0 0.0
    %1116 = vmatprep.subr.mxu0 0.0
    %1117 = vmatpush1.msra.mxu0 0.0
    %1118 = vmatprep.subr.mxu0 0.0
    %1119 = vmatpush1.msra.mxu0 0.0
    %1120 = vmatprep.subr.mxu0 0.0
    %1121 = vmatpush1.msra.mxu0 0.0
    %1122 = vmatprep.subr.mxu0 0.0
    %1123 = vmatpush1.msra.mxu0 0.0
    %1124 = vmatprep.subr.mxu0 0.0
    %1125 = vmatpush1.msra.mxu0 0.0
    %1126 = vmatprep.subr.mxu0 0.0
    %1127 = vmatpush1.msra.mxu0 0.0
    %1128 = vmatprep.subr.mxu0 0.0
    %1129 = vmatpush1.msra.mxu0 0.0
    %1130 = vmatprep.subr.mxu0 0.0
    %1131 = vmatpush1.msra.mxu0 0.0
    %1132 = vmatprep.subr.mxu0 0.0
    %1133 = vmatpush1.msra.mxu0 0.0
    %1134 = vmatprep.subr.mxu0 0.0
    %1135 = vmatpush1.msra.mxu0 0.0
    %1136 = vmatprep.subr.mxu0 0.0
    %1137 = vmatpush1.msra.mxu0 0.0
    %1138 = vmatprep.subr.mxu0 0.0
    %1139 = vmatpush1.msra.mxu0 0.0
    %1140 = vmatprep.subr.mxu0 0.0
    %1141 = vmatpush1.msra.mxu0 0.0
    %1142 = vmatprep.subr.mxu0 0.0
    %1143 = vmatpush1.msra.mxu0 0.0
    %1144 = vmatprep.subr.mxu0 0.0
    %1145 = vmatpush1.msra.mxu0 0.0
    %1146 = vmatprep.subr.mxu0 0.0
    %1147 = vmatpush1.msra.mxu0 0.0
    %1148 = vmatprep.subr.mxu0 0.0
    %1149 = vmatpush1.msra.mxu0 0.0
    %1150 = vmatprep.subr.mxu0 0.0
    %1151 = vmatpush1.msra.mxu0 0.0
    %1152 = vmatprep.mubr.f32.mxu0 0.0
    %v1153 = vand.u32 %v1082, 4294901760
    %v1154 = vsub.f32 %v1082, %v1153
    %v1155 = vand.u32 %v1154, 4294901760
    %v1156 = vsub.f32 %v1154, %v1155
    %v1157 = vand.u32 %v1156, 4294901760
    %1158 = vmatmul.mubr.f32.gmra.mrb[0].mxu0 %v1157
    %v1159 = vpop.f32.mrb[0].mxu0
    %v1160 = vadd.f32 0.0, %v1159
    %v1161 = vpop.f32.mrb[0].mxu0
    %v1162 = vadd.f32 0.0, %v1161
    %1163 = vdwg.mxu0
    %v1164 = vand.u32 %v55, 4294901760
    %v1165 = vsub.f32 %v55, %v1164
    %v1166 = vand.u32 %v1165, 4294901760
    %v1167 = vsub.f32 %v1165, %v1166
    %v1168 = vand.u32 %v1167, 4294901760
    %1169 = vmatprep.subr.mxu0 %v1168
    %v1170 = vand.u32 %v54, 4294901760
    %v1171 = vsub.f32 %v54, %v1170
    %v1172 = vand.u32 %v1171, 4294901760
    %v1173 = vsub.f32 %v1171, %v1172
    %v1174 = vand.u32 %v1173, 4294901760
    %1175 = vmatpush1.msra.mxu0 %v1174
    %v1176 = vand.u32 %v57, 4294901760
    %v1177 = vsub.f32 %v57, %v1176
    %v1178 = vand.u32 %v1177, 4294901760
    %v1179 = vsub.f32 %v1177, %v1178
    %v1180 = vand.u32 %v1179, 4294901760
    %1181 = vmatprep.subr.mxu0 %v1180
    %v1182 = vand.u32 %v56, 4294901760
    %v1183 = vsub.f32 %v56, %v1182
    %v1184 = vand.u32 %v1183, 4294901760
    %v1185 = vsub.f32 %v1183, %v1184
    %v1186 = vand.u32 %v1185, 4294901760
    %1187 = vmatpush1.msra.mxu0 %v1186
    %1188 = vmatprep.subr.mxu0 0.0
    %1189 = vmatpush1.msra.mxu0 0.0
    %1190 = vmatprep.subr.mxu0 0.0
    %1191 = vmatpush1.msra.mxu0 0.0
    %1192 = vmatprep.subr.mxu0 0.0
    %1193 = vmatpush1.msra.mxu0 0.0
    %1194 = vmatprep.subr.mxu0 0.0
    %1195 = vmatpush1.msra.mxu0 0.0
    %1196 = vmatprep.subr.mxu0 0.0
    %1197 = vmatpush1.msra.mxu0 0.0
    %1198 = vmatprep.subr.mxu0 0.0
    %1199 = vmatpush1.msra.mxu0 0.0
    %1200 = vmatprep.subr.mxu0 0.0
    %1201 = vmatpush1.msra.mxu0 0.0
    %1202 = vmatprep.subr.mxu0 0.0
    %1203 = vmatpush1.msra.mxu0 0.0
    %1204 = vmatprep.subr.mxu0 0.0
    %1205 = vmatpush1.msra.mxu0 0.0
    %1206 = vmatprep.subr.mxu0 0.0
    %1207 = vmatpush1.msra.mxu0 0.0
    %1208 = vmatprep.subr.mxu0 0.0
    %1209 = vmatpush1.msra.mxu0 0.0
    %1210 = vmatprep.subr.mxu0 0.0
    %1211 = vmatpush1.msra.mxu0 0.0
    %1212 = vmatprep.subr.mxu0 0.0
    %1213 = vmatpush1.msra.mxu0 0.0
    %1214 = vmatprep.subr.mxu0 0.0
    %1215 = vmatpush1.msra.mxu0 0.0
    %1216 = vmatprep.subr.mxu0 0.0
    %1217 = vmatpush1.msra.mxu0 0.0
    %1218 = vmatprep.subr.mxu0 0.0
    %1219 = vmatpush1.msra.mxu0 0.0
    %1220 = vmatprep.subr.mxu0 0.0
    %1221 = vmatpush1.msra.mxu0 0.0
    %1222 = vmatprep.subr.mxu0 0.0
    %1223 = vmatpush1.msra.mxu0 0.0
    %1224 = vmatprep.subr.mxu0 0.0
    %1225 = vmatpush1.msra.mxu0 0.0
    %1226 = vmatprep.subr.mxu0 0.0
    %1227 = vmatpush1.msra.mxu0 0.0
    %1228 = vmatprep.subr.mxu0 0.0
    %1229 = vmatpush1.msra.mxu0 0.0
    %1230 = vmatprep.subr.mxu0 0.0
    %1231 = vmatpush1.msra.mxu0 0.0
    %1232 = vmatprep.subr.mxu0 0.0
    %1233 = vmatpush1.msra.mxu0 0.0
    %1234 = vmatprep.subr.mxu0 0.0
    %1235 = vmatpush1.msra.mxu0 0.0
    %1236 = vmatprep.subr.mxu0 0.0
    %1237 = vmatpush1.msra.mxu0 0.0
    %1238 = vmatprep.subr.mxu0 0.0
    %1239 = vmatpush1.msra.mxu0 0.0
    %1240 = vmatprep.subr.mxu0 0.0
    %1241 = vmatpush1.msra.mxu0 0.0
    %1242 = vmatprep.subr.mxu0 0.0
    %1243 = vmatpush1.msra.mxu0 0.0
    %1244 = vmatprep.subr.mxu0 0.0
    %1245 = vmatpush1.msra.mxu0 0.0
    %1246 = vmatprep.subr.mxu0 0.0
    %1247 = vmatpush1.msra.mxu0 0.0
    %1248 = vmatprep.mubr.f32.mxu0 0.0
    %v1249 = vand.u32 %v1082, 4294901760
    %1250 = vmatmul.mubr.f32.gmra.mrb[0].mxu0 %v1249
    %v1251 = vpop.f32.mrb[0].mxu0
    %v1252 = vadd.f32 %v1160, %v1251
    %v1253 = vpop.f32.mrb[0].mxu0
    %v1254 = vadd.f32 %v1162, %v1253
    %1255 = vdwg.mxu0
    %v1256 = vand.u32 %v55, 4294901760
    %v1257 = vsub.f32 %v55, %v1256
    %1258 = vmatprep.subr.mxu0 %v1257
    %v1259 = vand.u32 %v54, 4294901760
    %v1260 = vsub.f32 %v54, %v1259
    %1261 = vmatpush1.msra.mxu0 %v1260
    %v1262 = vand.u32 %v57, 4294901760
    %v1263 = vsub.f32 %v57, %v1262
    %1264 = vmatprep.subr.mxu0 %v1263
    %v1265 = vand.u32 %v56, 4294901760
    %v1266 = vsub.f32 %v56, %v1265
    %1267 = vmatpush1.msra.mxu0 %v1266
    %1268 = vmatprep.subr.mxu0 0.0
    %1269 = vmatpush1.msra.mxu0 0.0
    %1270 = vmatprep.subr.mxu0 0.0
    %1271 = vmatpush1.msra.mxu0 0.0
    %1272 = vmatprep.subr.mxu0 0.0
    %1273 = vmatpush1.msra.mxu0 0.0
    %1274 = vmatprep.subr.mxu0 0.0
    %1275 = vmatpush1.msra.mxu0 0.0
    %1276 = vmatprep.subr.mxu0 0.0
    %1277 = vmatpush1.msra.mxu0 0.0
    %1278 = vmatprep.subr.mxu0 0.0
    %1279 = vmatpush1.msra.mxu0 0.0
    %1280 = vmatprep.subr.mxu0 0.0
    %1281 = vmatpush1.msra.mxu0 0.0
    %1282 = vmatprep.subr.mxu0 0.0
    %1283 = vmatpush1.msra.mxu0 0.0
    %1284 = vmatprep.subr.mxu0 0.0
    %1285 = vmatpush1.msra.mxu0 0.0
    %1286 = vmatprep.subr.mxu0 0.0
    %1287 = vmatpush1.msra.mxu0 0.0
    %1288 = vmatprep.subr.mxu0 0.0
    %1289 = vmatpush1.msra.mxu0 0.0
    %1290 = vmatprep.subr.mxu0 0.0
    %1291 = vmatpush1.msra.mxu0 0.0
    %1292 = vmatprep.subr.mxu0 0.0
    %1293 = vmatpush1.msra.mxu0 0.0
    %1294 = vmatprep.subr.mxu0 0.0
    %1295 = vmatpush1.msra.mxu0 0.0
    %1296 = vmatprep.subr.mxu0 0.0
    %1297 = vmatpush1.msra.mxu0 0.0
    %1298 = vmatprep.subr.mxu0 0.0
    %1299 = vmatpush1.msra.mxu0 0.0
    %1300 = vmatprep.subr.mxu0 0.0
    %1301 = vmatpush1.msra.mxu0 0.0
    %1302 = vmatprep.subr.mxu0 0.0
    %1303 = vmatpush1.msra.mxu0 0.0
    %1304 = vmatprep.subr.mxu0 0.0
    %1305 = vmatpush1.msra.mxu0 0.0
    %1306 = vmatprep.subr.mxu0 0.0
    %1307 = vmatpush1.msra.mxu0 0.0
    %1308 = vmatprep.subr.mxu0 0.0
    %1309 = vmatpush1.msra.mxu0 0.0
    %1310 = vmatprep.subr.mxu0 0.0
    %1311 = vmatpush1.msra.mxu0 0.0
    %1312 = vmatprep.subr.mxu0 0.0
    %1313 = vmatpush1.msra.mxu0 0.0
    %1314 = vmatprep.subr.mxu0 0.0
    %1315 = vmatpush1.msra.mxu0 0.0
    %1316 = vmatprep.subr.mxu0 0.0
    %1317 = vmatpush1.msra.mxu0 0.0
    %1318 = vmatprep.subr.mxu0 0.0
    %1319 = vmatpush1.msra.mxu0 0.0
    %1320 = vmatprep.subr.mxu0 0.0
    %1321 = vmatpush1.msra.mxu0 0.0
    %1322 = vmatprep.subr.mxu0 0.0
    %1323 = vmatpush1.msra.mxu0 0.0
    %1324 = vmatprep.subr.mxu0 0.0
    %1325 = vmatpush1.msra.mxu0 0.0
    %1326 = vmatprep.subr.mxu0 0.0
    %1327 = vmatpush1.msra.mxu0 0.0
    %1328 = vmatprep.mubr.f32.mxu0 0.0
    %v1329 = vand.u32 %v1082, 4294901760
    %v1330 = vsub.f32 %v1082, %v1329
    %1331 = vmatmul.mubr.f32.gmra.mrb[0].mxu0 %v1330
    %v1332 = vpop.f32.mrb[0].mxu0
    %v1333 = vadd.f32 %v1252, %v1332
    %v1334 = vpop.f32.mrb[0].mxu0
    %v1335 = vadd.f32 %v1254, %v1334
    %1336 = vdwg.mxu0
    %v1337 = vand.u32 %v55, 4294901760
    %1338 = vmatprep.subr.mxu0 %v1337
    %v1339 = vand.u32 %v54, 4294901760
    %1340 = vmatpush1.msra.mxu0 %v1339
    %v1341 = vand.u32 %v57, 4294901760
    %1342 = vmatprep.subr.mxu0 %v1341
    %v1343 = vand.u32 %v56, 4294901760
    %1344 = vmatpush1.msra.mxu0 %v1343
    %1345 = vmatprep.subr.mxu0 0.0
    %1346 = vmatpush1.msra.mxu0 0.0
    %1347 = vmatprep.subr.mxu0 0.0
    %1348 = vmatpush1.msra.mxu0 0.0
    %1349 = vmatprep.subr.mxu0 0.0
    %1350 = vmatpush1.msra.mxu0 0.0
    %1351 = vmatprep.subr.mxu0 0.0
    %1352 = vmatpush1.msra.mxu0 0.0
    %1353 = vmatprep.subr.mxu0 0.0
    %1354 = vmatpush1.msra.mxu0 0.0
    %1355 = vmatprep.subr.mxu0 0.0
    %1356 = vmatpush1.msra.mxu0 0.0
    %1357 = vmatprep.subr.mxu0 0.0
    %1358 = vmatpush1.msra.mxu0 0.0
    %1359 = vmatprep.subr.mxu0 0.0
    %1360 = vmatpush1.msra.mxu0 0.0
    %1361 = vmatprep.subr.mxu0 0.0
    %1362 = vmatpush1.msra.mxu0 0.0
    %1363 = vmatprep.subr.mxu0 0.0
    %1364 = vmatpush1.msra.mxu0 0.0
    %1365 = vmatprep.subr.mxu0 0.0
    %1366 = vmatpush1.msra.mxu0 0.0
    %1367 = vmatprep.subr.mxu0 0.0
    %1368 = vmatpush1.msra.mxu0 0.0
    %1369 = vmatprep.subr.mxu0 0.0
    %1370 = vmatpush1.msra.mxu0 0.0
    %1371 = vmatprep.subr.mxu0 0.0
    %1372 = vmatpush1.msra.mxu0 0.0
    %1373 = vmatprep.subr.mxu0 0.0
    %1374 = vmatpush1.msra.mxu0 0.0
    %1375 = vmatprep.subr.mxu0 0.0
    %1376 = vmatpush1.msra.mxu0 0.0
    %1377 = vmatprep.subr.mxu0 0.0
    %1378 = vmatpush1.msra.mxu0 0.0
    %1379 = vmatprep.subr.mxu0 0.0
    %1380 = vmatpush1.msra.mxu0 0.0
    %1381 = vmatprep.subr.mxu0 0.0
    %1382 = vmatpush1.msra.mxu0 0.0
    %1383 = vmatprep.subr.mxu0 0.0
    %1384 = vmatpush1.msra.mxu0 0.0
    %1385 = vmatprep.subr.mxu0 0.0
    %1386 = vmatpush1.msra.mxu0 0.0
    %1387 = vmatprep.subr.mxu0 0.0
    %1388 = vmatpush1.msra.mxu0 0.0
    %1389 = vmatprep.subr.mxu0 0.0
    %1390 = vmatpush1.msra.mxu0 0.0
    %1391 = vmatprep.subr.mxu0 0.0
    %1392 = vmatpush1.msra.mxu0 0.0
    %1393 = vmatprep.subr.mxu0 0.0
    %1394 = vmatpush1.msra.mxu0 0.0
    %1395 = vmatprep.subr.mxu0 0.0
    %1396 = vmatpush1.msra.mxu0 0.0
    %1397 = vmatprep.subr.mxu0 0.0
    %1398 = vmatpush1.msra.mxu0 0.0
    %1399 = vmatprep.subr.mxu0 0.0
    %1400 = vmatpush1.msra.mxu0 0.0
    %1401 = vmatprep.subr.mxu0 0.0
    %1402 = vmatpush1.msra.mxu0 0.0
    %1403 = vmatprep.subr.mxu0 0.0
    %1404 = vmatpush1.msra.mxu0 0.0
    %1405 = vmatprep.mubr.f32.mxu0 0.0
    %v1406 = vand.u32 %v1082, 4294901760
    %v1407 = vsub.f32 %v1082, %v1406
    %v1408 = vand.u32 %v1407, 4294901760
    %1409 = vmatmul.mubr.f32.gmra.mrb[0].mxu0 %v1408
    %v1410 = vpop.f32.mrb[0].mxu0
    %v1411 = vadd.f32 %v1333, %v1410
    %v1412 = vpop.f32.mrb[0].mxu0
    %v1413 = vadd.f32 %v1335, %v1412
    %1414 = vdwg.mxu0
    %v1415 = vand.u32 %v55, 4294901760
    %v1416 = vsub.f32 %v55, %v1415
    %v1417 = vand.u32 %v1416, 4294901760
    %1418 = vmatprep.subr.mxu0 %v1417
    %v1419 = vand.u32 %v54, 4294901760
    %v1420 = vsub.f32 %v54, %v1419
    %v1421 = vand.u32 %v1420, 4294901760
    %1422 = vmatpush1.msra.mxu0 %v1421
    %v1423 = vand.u32 %v57, 4294901760
    %v1424 = vsub.f32 %v57, %v1423
    %v1425 = vand.u32 %v1424, 4294901760
    %1426 = vmatprep.subr.mxu0 %v1425
    %v1427 = vand.u32 %v56, 4294901760
    %v1428 = vsub.f32 %v56, %v1427
    %v1429 = vand.u32 %v1428, 4294901760
    %1430 = vmatpush1.msra.mxu0 %v1429
    %1431 = vmatprep.subr.mxu0 0.0
    %1432 = vmatpush1.msra.mxu0 0.0
    %1433 = vmatprep.subr.mxu0 0.0
    %1434 = vmatpush1.msra.mxu0 0.0
    %1435 = vmatprep.subr.mxu0 0.0
    %1436 = vmatpush1.msra.mxu0 0.0
    %1437 = vmatprep.subr.mxu0 0.0
    %1438 = vmatpush1.msra.mxu0 0.0
    %1439 = vmatprep.subr.mxu0 0.0
    %1440 = vmatpush1.msra.mxu0 0.0
    %1441 = vmatprep.subr.mxu0 0.0
    %1442 = vmatpush1.msra.mxu0 0.0
    %1443 = vmatprep.subr.mxu0 0.0
    %1444 = vmatpush1.msra.mxu0 0.0
    %1445 = vmatprep.subr.mxu0 0.0
    %1446 = vmatpush1.msra.mxu0 0.0
    %1447 = vmatprep.subr.mxu0 0.0
    %1448 = vmatpush1.msra.mxu0 0.0
    %1449 = vmatprep.subr.mxu0 0.0
    %1450 = vmatpush1.msra.mxu0 0.0
    %1451 = vmatprep.subr.mxu0 0.0
    %1452 = vmatpush1.msra.mxu0 0.0
    %1453 = vmatprep.subr.mxu0 0.0
    %1454 = vmatpush1.msra.mxu0 0.0
    %1455 = vmatprep.subr.mxu0 0.0
    %1456 = vmatpush1.msra.mxu0 0.0
    %1457 = vmatprep.subr.mxu0 0.0
    %1458 = vmatpush1.msra.mxu0 0.0
    %1459 = vmatprep.subr.mxu0 0.0
    %1460 = vmatpush1.msra.mxu0 0.0
    %1461 = vmatprep.subr.mxu0 0.0
    %1462 = vmatpush1.msra.mxu0 0.0
    %1463 = vmatprep.subr.mxu0 0.0
    %1464 = vmatpush1.msra.mxu0 0.0
    %1465 = vmatprep.subr.mxu0 0.0
    %1466 = vmatpush1.msra.mxu0 0.0
    %1467 = vmatprep.subr.mxu0 0.0
    %1468 = vmatpush1.msra.mxu0 0.0
    %1469 = vmatprep.subr.mxu0 0.0
    %1470 = vmatpush1.msra.mxu0 0.0
    %1471 = vmatprep.subr.mxu0 0.0
    %1472 = vmatpush1.msra.mxu0 0.0
    %1473 = vmatprep.subr.mxu0 0.0
    %1474 = vmatpush1.msra.mxu0 0.0
    %1475 = vmatprep.subr.mxu0 0.0
    %1476 = vmatpush1.msra.mxu0 0.0
    %1477 = vmatprep.subr.mxu0 0.0
    %1478 = vmatpush1.msra.mxu0 0.0
    %1479 = vmatprep.subr.mxu0 0.0
    %1480 = vmatpush1.msra.mxu0 0.0
    %1481 = vmatprep.subr.mxu0 0.0
    %1482 = vmatpush1.msra.mxu0 0.0
    %1483 = vmatprep.subr.mxu0 0.0
    %1484 = vmatpush1.msra.mxu0 0.0
    %1485 = vmatprep.subr.mxu0 0.0
    %1486 = vmatpush1.msra.mxu0 0.0
    %1487 = vmatprep.subr.mxu0 0.0
    %1488 = vmatpush1.msra.mxu0 0.0
    %1489 = vmatprep.subr.mxu0 0.0
    %1490 = vmatpush1.msra.mxu0 0.0
    %1491 = vmatprep.mubr.f32.mxu0 0.0
    %v1492 = vand.u32 %v1082, 4294901760
    %1493 = vmatmul.mubr.f32.gmra.mrb[0].mxu0 %v1492
    %v1494 = vpop.f32.mrb[0].mxu0
    %v1495 = vadd.f32 %v1411, %v1494
    %v1496 = vpop.f32.mrb[0].mxu0
    %v1497 = vadd.f32 %v1413, %v1496
    %1498 = vdwg.mxu0
    %v1499 = vand.u32 %v55, 4294901760
    %1500 = vmatprep.subr.mxu0 %v1499
    %v1501 = vand.u32 %v54, 4294901760
    %1502 = vmatpush1.msra.mxu0 %v1501
    %v1503 = vand.u32 %v57, 4294901760
    %1504 = vmatprep.subr.mxu0 %v1503
    %v1505 = vand.u32 %v56, 4294901760
    %1506 = vmatpush1.msra.mxu0 %v1505
    %1507 = vmatprep.subr.mxu0 0.0
    %1508 = vmatpush1.msra.mxu0 0.0
    %1509 = vmatprep.subr.mxu0 0.0
    %1510 = vmatpush1.msra.mxu0 0.0
    %1511 = vmatprep.subr.mxu0 0.0
    %1512 = vmatpush1.msra.mxu0 0.0
    %1513 = vmatprep.subr.mxu0 0.0
    %1514 = vmatpush1.msra.mxu0 0.0
    %1515 = vmatprep.subr.mxu0 0.0
    %1516 = vmatpush1.msra.mxu0 0.0
    %1517 = vmatprep.subr.mxu0 0.0
    %1518 = vmatpush1.msra.mxu0 0.0
    %1519 = vmatprep.subr.mxu0 0.0
    %1520 = vmatpush1.msra.mxu0 0.0
    %1521 = vmatprep.subr.mxu0 0.0
    %1522 = vmatpush1.msra.mxu0 0.0
    %1523 = vmatprep.subr.mxu0 0.0
    %1524 = vmatpush1.msra.mxu0 0.0
    %1525 = vmatprep.subr.mxu0 0.0
    %1526 = vmatpush1.msra.mxu0 0.0
    %1527 = vmatprep.subr.mxu0 0.0
    %1528 = vmatpush1.msra.mxu0 0.0
    %1529 = vmatprep.subr.mxu0 0.0
    %1530 = vmatpush1.msra.mxu0 0.0
    %1531 = vmatprep.subr.mxu0 0.0
    %1532 = vmatpush1.msra.mxu0 0.0
    %1533 = vmatprep.subr.mxu0 0.0
    %1534 = vmatpush1.msra.mxu0 0.0
    %1535 = vmatprep.subr.mxu0 0.0
    %1536 = vmatpush1.msra.mxu0 0.0
    %1537 = vmatprep.subr.mxu0 0.0
    %1538 = vmatpush1.msra.mxu0 0.0
    %1539 = vmatprep.subr.mxu0 0.0
    %1540 = vmatpush1.msra.mxu0 0.0
    %1541 = vmatprep.subr.mxu0 0.0
    %1542 = vmatpush1.msra.mxu0 0.0
    %1543 = vmatprep.subr.mxu0 0.0
    %1544 = vmatpush1.msra.mxu0 0.0
    %1545 = vmatprep.subr.mxu0 0.0
    %1546 = vmatpush1.msra.mxu0 0.0
    %1547 = vmatprep.subr.mxu0 0.0
    %1548 = vmatpush1.msra.mxu0 0.0
    %1549 = vmatprep.subr.mxu0 0.0
    %1550 = vmatpush1.msra.mxu0 0.0
    %1551 = vmatprep.subr.mxu0 0.0
    %1552 = vmatpush1.msra.mxu0 0.0
    %1553 = vmatprep.subr.mxu0 0.0
    %1554 = vmatpush1.msra.mxu0 0.0
    %1555 = vmatprep.subr.mxu0 0.0
    %1556 = vmatpush1.msra.mxu0 0.0
    %1557 = vmatprep.subr.mxu0 0.0
    %1558 = vmatpush1.msra.mxu0 0.0
    %1559 = vmatprep.subr.mxu0 0.0
    %1560 = vmatpush1.msra.mxu0 0.0
    %1561 = vmatprep.subr.mxu0 0.0
    %1562 = vmatpush1.msra.mxu0 0.0
    %1563 = vmatprep.subr.mxu0 0.0
    %1564 = vmatpush1.msra.mxu0 0.0
    %1565 = vmatprep.subr.mxu0 0.0
    %1566 = vmatpush1.msra.mxu0 0.0
    %1567 = vmatprep.mubr.f32.mxu0 0.0
    %v1568 = vand.u32 %v1082, 4294901760
    %1569 = vmatmul.mubr.f32.gmra.mrb[0].mxu0 %v1568
    %v1570 = vpop.f32.mrb[0].mxu0
    %v1571 = vadd.f32 %v1495, %v1570
    %v1572 = vpop.f32.mrb[0].mxu0
    %v1573 = vadd.f32 %v1497, %v1572
    %1574 = vdwg.mxu0
    %v1576 = vsel %vm66, %v1074, 0
    %v1578 = vand.u32 %v55, 4294901760
    %1579 = vmatprep.subr.mxu0 %v1578
    %v1580 = vand.u32 %v54, 4294901760
    %1581 = vmatpush1.msra.mxu0 %v1580
    %v1582 = vand.u32 %v57, 4294901760
    %1583 = vmatprep.subr.mxu0 %v1582
    %v1584 = vand.u32 %v56, 4294901760
    %1585 = vmatpush1.msra.mxu0 %v1584
    %1586 = vmatprep.subr.mxu0 0.0
    %1587 = vmatpush1.msra.mxu0 0.0
    %1588 = vmatprep.subr.mxu0 0.0
    %1589 = vmatpush1.msra.mxu0 0.0
    %1590 = vmatprep.subr.mxu0 0.0
    %1591 = vmatpush1.msra.mxu0 0.0
    %1592 = vmatprep.subr.mxu0 0.0
    %1593 = vmatpush1.msra.mxu0 0.0
    %1594 = vmatprep.subr.mxu0 0.0
    %1595 = vmatpush1.msra.mxu0 0.0
    %1596 = vmatprep.subr.mxu0 0.0
    %1597 = vmatpush1.msra.mxu0 0.0
    %1598 = vmatprep.subr.mxu0 0.0
    %1599 = vmatpush1.msra.mxu0 0.0
    %1600 = vmatprep.subr.mxu0 0.0
    %1601 = vmatpush1.msra.mxu0 0.0
    %1602 = vmatprep.subr.mxu0 0.0
    %1603 = vmatpush1.msra.mxu0 0.0
    %1604 = vmatprep.subr.mxu0 0.0
    %1605 = vmatpush1.msra.mxu0 0.0
    %1606 = vmatprep.subr.mxu0 0.0
    %1607 = vmatpush1.msra.mxu0 0.0
    %1608 = vmatprep.subr.mxu0 0.0
    %1609 = vmatpush1.msra.mxu0 0.0
    %1610 = vmatprep.subr.mxu0 0.0
    %1611 = vmatpush1.msra.mxu0 0.0
    %1612 = vmatprep.subr.mxu0 0.0
    %1613 = vmatpush1.msra.mxu0 0.0
    %1614 = vmatprep.subr.mxu0 0.0
    %1615 = vmatpush1.msra.mxu0 0.0
    %1616 = vmatprep.subr.mxu0 0.0
    %1617 = vmatpush1.msra.mxu0 0.0
    %1618 = vmatprep.subr.mxu0 0.0
    %1619 = vmatpush1.msra.mxu0 0.0
    %1620 = vmatprep.subr.mxu0 0.0
    %1621 = vmatpush1.msra.mxu0 0.0
    %1622 = vmatprep.subr.mxu0 0.0
    %1623 = vmatpush1.msra.mxu0 0.0
    %1624 = vmatprep.subr.mxu0 0.0
    %1625 = vmatpush1.msra.mxu0 0.0
    %1626 = vmatprep.subr.mxu0 0.0
    %1627 = vmatpush1.msra.mxu0 0.0
    %1628 = vmatprep.subr.mxu0 0.0
    %1629 = vmatpush1.msra.mxu0 0.0
    %1630 = vmatprep.subr.mxu0 0.0
    %1631 = vmatpush1.msra.mxu0 0.0
    %1632 = vmatprep.subr.mxu0 0.0
    %1633 = vmatpush1.msra.mxu0 0.0
    %1634 = vmatprep.subr.mxu0 0.0
    %1635 = vmatpush1.msra.mxu0 0.0
    %1636 = vmatprep.subr.mxu0 0.0
    %1637 = vmatpush1.msra.mxu0 0.0
    %1638 = vmatprep.subr.mxu0 0.0
    %1639 = vmatpush1.msra.mxu0 0.0
    %1640 = vmatprep.subr.mxu0 0.0
    %1641 = vmatpush1.msra.mxu0 0.0
    %1642 = vmatprep.subr.mxu0 0.0
    %1643 = vmatpush1.msra.mxu0 0.0
    %1644 = vmatprep.subr.mxu0 0.0
    %1645 = vmatpush1.msra.mxu0 0.0
    %1646 = vmatprep.mubr.f32.mxu0 0.0
    %v1647 = vand.u32 %v1576, 4294901760
    %v1648 = vsub.f32 %v1576, %v1647
    %v1649 = vand.u32 %v1648, 4294901760
    %v1650 = vsub.f32 %v1648, %v1649
    %v1651 = vand.u32 %v1650, 4294901760
    %1652 = vmatmul.mubr.f32.gmra.mrb[0].mxu0 %v1651
    %v1653 = vpop.f32.mrb[0].mxu0
    %v1654 = vadd.f32 %v36, %v1653
    %v1655 = vpop.f32.mrb[0].mxu0
    %v1656 = vadd.f32 %v37, %v1655
    %1657 = vdwg.mxu0
    %v1658 = vand.u32 %v55, 4294901760
    %v1659 = vsub.f32 %v55, %v1658
    %v1660 = vand.u32 %v1659, 4294901760
    %v1661 = vsub.f32 %v1659, %v1660
    %v1662 = vand.u32 %v1661, 4294901760
    %1663 = vmatprep.subr.mxu0 %v1662
    %v1664 = vand.u32 %v54, 4294901760
    %v1665 = vsub.f32 %v54, %v1664
    %v1666 = vand.u32 %v1665, 4294901760
    %v1667 = vsub.f32 %v1665, %v1666
    %v1668 = vand.u32 %v1667, 4294901760
    %1669 = vmatpush1.msra.mxu0 %v1668
    %v1670 = vand.u32 %v57, 4294901760
    %v1671 = vsub.f32 %v57, %v1670
    %v1672 = vand.u32 %v1671, 4294901760
    %v1673 = vsub.f32 %v1671, %v1672
    %v1674 = vand.u32 %v1673, 4294901760
    %1675 = vmatprep.subr.mxu0 %v1674
    %v1676 = vand.u32 %v56, 4294901760
    %v1677 = vsub.f32 %v56, %v1676
    %v1678 = vand.u32 %v1677, 4294901760
    %v1679 = vsub.f32 %v1677, %v1678
    %v1680 = vand.u32 %v1679, 4294901760
    %1681 = vmatpush1.msra.mxu0 %v1680
    %1682 = vmatprep.subr.mxu0 0.0
    %1683 = vmatpush1.msra.mxu0 0.0
    %1684 = vmatprep.subr.mxu0 0.0
    %1685 = vmatpush1.msra.mxu0 0.0
    %1686 = vmatprep.subr.mxu0 0.0
    %1687 = vmatpush1.msra.mxu0 0.0
    %1688 = vmatprep.subr.mxu0 0.0
    %1689 = vmatpush1.msra.mxu0 0.0
    %1690 = vmatprep.subr.mxu0 0.0
    %1691 = vmatpush1.msra.mxu0 0.0
    %1692 = vmatprep.subr.mxu0 0.0
    %1693 = vmatpush1.msra.mxu0 0.0
    %1694 = vmatprep.subr.mxu0 0.0
    %1695 = vmatpush1.msra.mxu0 0.0
    %1696 = vmatprep.subr.mxu0 0.0
    %1697 = vmatpush1.msra.mxu0 0.0
    %1698 = vmatprep.subr.mxu0 0.0
    %1699 = vmatpush1.msra.mxu0 0.0
    %1700 = vmatprep.subr.mxu0 0.0
    %1701 = vmatpush1.msra.mxu0 0.0
    %1702 = vmatprep.subr.mxu0 0.0
    %1703 = vmatpush1.msra.mxu0 0.0
    %1704 = vmatprep.subr.mxu0 0.0
    %1705 = vmatpush1.msra.mxu0 0.0
    %1706 = vmatprep.subr.mxu0 0.0
    %1707 = vmatpush1.msra.mxu0 0.0
    %1708 = vmatprep.subr.mxu0 0.0
    %1709 = vmatpush1.msra.mxu0 0.0
    %1710 = vmatprep.subr.mxu0 0.0
    %1711 = vmatpush1.msra.mxu0 0.0
    %1712 = vmatprep.subr.mxu0 0.0
    %1713 = vmatpush1.msra.mxu0 0.0
    %1714 = vmatprep.subr.mxu0 0.0
    %1715 = vmatpush1.msra.mxu0 0.0
    %1716 = vmatprep.subr.mxu0 0.0
    %1717 = vmatpush1.msra.mxu0 0.0
    %1718 = vmatprep.subr.mxu0 0.0
    %1719 = vmatpush1.msra.mxu0 0.0
    %1720 = vmatprep.subr.mxu0 0.0
    %1721 = vmatpush1.msra.mxu0 0.0
    %1722 = vmatprep.subr.mxu0 0.0
    %1723 = vmatpush1.msra.mxu0 0.0
    %1724 = vmatprep.subr.mxu0 0.0
    %1725 = vmatpush1.msra.mxu0 0.0
    %1726 = vmatprep.subr.mxu0 0.0
    %1727 = vmatpush1.msra.mxu0 0.0
    %1728 = vmatprep.subr.mxu0 0.0
    %1729 = vmatpush1.msra.mxu0 0.0
    %1730 = vmatprep.subr.mxu0 0.0
    %1731 = vmatpush1.msra.mxu0 0.0
    %1732 = vmatprep.subr.mxu0 0.0
    %1733 = vmatpush1.msra.mxu0 0.0
    %1734 = vmatprep.subr.mxu0 0.0
    %1735 = vmatpush1.msra.mxu0 0.0
    %1736 = vmatprep.subr.mxu0 0.0
    %1737 = vmatpush1.msra.mxu0 0.0
    %1738 = vmatprep.subr.mxu0 0.0
    %1739 = vmatpush1.msra.mxu0 0.0
    %1740 = vmatprep.subr.mxu0 0.0
    %1741 = vmatpush1.msra.mxu0 0.0
    %1742 = vmatprep.mubr.f32.mxu0 0.0
    %v1743 = vand.u32 %v1576, 4294901760
    %1744 = vmatmul.mubr.f32.gmra.mrb[0].mxu0 %v1743
    %v1745 = vpop.f32.mrb[0].mxu0
    %v1746 = vadd.f32 %v1654, %v1745
    %v1747 = vpop.f32.mrb[0].mxu0
    %v1748 = vadd.f32 %v1656, %v1747
    %1749 = vdwg.mxu0
    %v1750 = vand.u32 %v55, 4294901760
    %v1751 = vsub.f32 %v55, %v1750
    %1752 = vmatprep.subr.mxu0 %v1751
    %v1753 = vand.u32 %v54, 4294901760
    %v1754 = vsub.f32 %v54, %v1753
    %1755 = vmatpush1.msra.mxu0 %v1754
    %v1756 = vand.u32 %v57, 4294901760
    %v1757 = vsub.f32 %v57, %v1756
    %1758 = vmatprep.subr.mxu0 %v1757
    %v1759 = vand.u32 %v56, 4294901760
    %v1760 = vsub.f32 %v56, %v1759
    %1761 = vmatpush1.msra.mxu0 %v1760
    %1762 = vmatprep.subr.mxu0 0.0
    %1763 = vmatpush1.msra.mxu0 0.0
    %1764 = vmatprep.subr.mxu0 0.0
    %1765 = vmatpush1.msra.mxu0 0.0
    %1766 = vmatprep.subr.mxu0 0.0
    %1767 = vmatpush1.msra.mxu0 0.0
    %1768 = vmatprep.subr.mxu0 0.0
    %1769 = vmatpush1.msra.mxu0 0.0
    %1770 = vmatprep.subr.mxu0 0.0
    %1771 = vmatpush1.msra.mxu0 0.0
    %1772 = vmatprep.subr.mxu0 0.0
    %1773 = vmatpush1.msra.mxu0 0.0
    %1774 = vmatprep.subr.mxu0 0.0
    %1775 = vmatpush1.msra.mxu0 0.0
    %1776 = vmatprep.subr.mxu0 0.0
    %1777 = vmatpush1.msra.mxu0 0.0
    %1778 = vmatprep.subr.mxu0 0.0
    %1779 = vmatpush1.msra.mxu0 0.0
    %1780 = vmatprep.subr.mxu0 0.0
    %1781 = vmatpush1.msra.mxu0 0.0
    %1782 = vmatprep.subr.mxu0 0.0
    %1783 = vmatpush1.msra.mxu0 0.0
    %1784 = vmatprep.subr.mxu0 0.0
    %1785 = vmatpush1.msra.mxu0 0.0
    %1786 = vmatprep.subr.mxu0 0.0
    %1787 = vmatpush1.msra.mxu0 0.0
    %1788 = vmatprep.subr.mxu0 0.0
    %1789 = vmatpush1.msra.mxu0 0.0
    %1790 = vmatprep.subr.mxu0 0.0
    %1791 = vmatpush1.msra.mxu0 0.0
    %1792 = vmatprep.subr.mxu0 0.0
    %1793 = vmatpush1.msra.mxu0 0.0
    %1794 = vmatprep.subr.mxu0 0.0
    %1795 = vmatpush1.msra.mxu0 0.0
    %1796 = vmatprep.subr.mxu0 0.0
    %1797 = vmatpush1.msra.mxu0 0.0
    %1798 = vmatprep.subr.mxu0 0.0
    %1799 = vmatpush1.msra.mxu0 0.0
    %1800 = vmatprep.subr.mxu0 0.0
    %1801 = vmatpush1.msra.mxu0 0.0
    %1802 = vmatprep.subr.mxu0 0.0
    %1803 = vmatpush1.msra.mxu0 0.0
    %1804 = vmatprep.subr.mxu0 0.0
    %1805 = vmatpush1.msra.mxu0 0.0
    %1806 = vmatprep.subr.mxu0 0.0
    %1807 = vmatpush1.msra.mxu0 0.0
    %1808 = vmatprep.subr.mxu0 0.0
    %1809 = vmatpush1.msra.mxu0 0.0
    %1810 = vmatprep.subr.mxu0 0.0
    %1811 = vmatpush1.msra.mxu0 0.0
    %1812 = vmatprep.subr.mxu0 0.0
    %1813 = vmatpush1.msra.mxu0 0.0
    %1814 = vmatprep.subr.mxu0 0.0
    %1815 = vmatpush1.msra.mxu0 0.0
    %1816 = vmatprep.subr.mxu0 0.0
    %1817 = vmatpush1.msra.mxu0 0.0
    %1818 = vmatprep.subr.mxu0 0.0
    %1819 = vmatpush1.msra.mxu0 0.0
    %1820 = vmatprep.subr.mxu0 0.0
    %1821 = vmatpush1.msra.mxu0 0.0
    %1822 = vmatprep.mubr.f32.mxu0 0.0
    %v1823 = vand.u32 %v1576, 4294901760
    %v1824 = vsub.f32 %v1576, %v1823
    %1825 = vmatmul.mubr.f32.gmra.mrb[0].mxu0 %v1824
    %v1826 = vpop.f32.mrb[0].mxu0
    %v1827 = vadd.f32 %v1746, %v1826
    %v1828 = vpop.f32.mrb[0].mxu0
    %v1829 = vadd.f32 %v1748, %v1828
    %1830 = vdwg.mxu0
    %v1831 = vand.u32 %v55, 4294901760
    %1832 = vmatprep.subr.mxu0 %v1831
    %v1833 = vand.u32 %v54, 4294901760
    %1834 = vmatpush1.msra.mxu0 %v1833
    %v1835 = vand.u32 %v57, 4294901760
    %1836 = vmatprep.subr.mxu0 %v1835
    %v1837 = vand.u32 %v56, 4294901760
    %1838 = vmatpush1.msra.mxu0 %v1837
    %1839 = vmatprep.subr.mxu0 0.0
    %1840 = vmatpush1.msra.mxu0 0.0
    %1841 = vmatprep.subr.mxu0 0.0
    %1842 = vmatpush1.msra.mxu0 0.0
    %1843 = vmatprep.subr.mxu0 0.0
    %1844 = vmatpush1.msra.mxu0 0.0
    %1845 = vmatprep.subr.mxu0 0.0
    %1846 = vmatpush1.msra.mxu0 0.0
    %1847 = vmatprep.subr.mxu0 0.0
    %1848 = vmatpush1.msra.mxu0 0.0
    %1849 = vmatprep.subr.mxu0 0.0
    %1850 = vmatpush1.msra.mxu0 0.0
    %1851 = vmatprep.subr.mxu0 0.0
    %1852 = vmatpush1.msra.mxu0 0.0
    %1853 = vmatprep.subr.mxu0 0.0
    %1854 = vmatpush1.msra.mxu0 0.0
    %1855 = vmatprep.subr.mxu0 0.0
    %1856 = vmatpush1.msra.mxu0 0.0
    %1857 = vmatprep.subr.mxu0 0.0
    %1858 = vmatpush1.msra.mxu0 0.0
    %1859 = vmatprep.subr.mxu0 0.0
    %1860 = vmatpush1.msra.mxu0 0.0
    %1861 = vmatprep.subr.mxu0 0.0
    %1862 = vmatpush1.msra.mxu0 0.0
    %1863 = vmatprep.subr.mxu0 0.0
    %1864 = vmatpush1.msra.mxu0 0.0
    %1865 = vmatprep.subr.mxu0 0.0
    %1866 = vmatpush1.msra.mxu0 0.0
    %1867 = vmatprep.subr.mxu0 0.0
    %1868 = vmatpush1.msra.mxu0 0.0
    %1869 = vmatprep.subr.mxu0 0.0
    %1870 = vmatpush1.msra.mxu0 0.0
    %1871 = vmatprep.subr.mxu0 0.0
    %1872 = vmatpush1.msra.mxu0 0.0
    %1873 = vmatprep.subr.mxu0 0.0
    %1874 = vmatpush1.msra.mxu0 0.0
    %1875 = vmatprep.subr.mxu0 0.0
    %1876 = vmatpush1.msra.mxu0 0.0
    %1877 = vmatprep.subr.mxu0 0.0
    %1878 = vmatpush1.msra.mxu0 0.0
    %1879 = vmatprep.subr.mxu0 0.0
    %1880 = vmatpush1.msra.mxu0 0.0
    %1881 = vmatprep.subr.mxu0 0.0
    %1882 = vmatpush1.msra.mxu0 0.0
    %1883 = vmatprep.subr.mxu0 0.0
    %1884 = vmatpush1.msra.mxu0 0.0
    %1885 = vmatprep.subr.mxu0 0.0
    %1886 = vmatpush1.msra.mxu0 0.0
    %1887 = vmatprep.subr.mxu0 0.0
    %1888 = vmatpush1.msra.mxu0 0.0
    %1889 = vmatprep.subr.mxu0 0.0
    %1890 = vmatpush1.msra.mxu0 0.0
    %1891 = vmatprep.subr.mxu0 0.0
    %1892 = vmatpush1.msra.mxu0 0.0
    %1893 = vmatprep.subr.mxu0 0.0
    %1894 = vmatpush1.msra.mxu0 0.0
    %1895 = vmatprep.subr.mxu0 0.0
    %1896 = vmatpush1.msra.mxu0 0.0
    %1897 = vmatprep.subr.mxu0 0.0
    %1898 = vmatpush1.msra.mxu0 0.0
    %1899 = vmatprep.mubr.f32.mxu0 0.0
    %v1900 = vand.u32 %v1576, 4294901760
    %v1901 = vsub.f32 %v1576, %v1900
    %v1902 = vand.u32 %v1901, 4294901760
    %1903 = vmatmul.mubr.f32.gmra.mrb[0].mxu0 %v1902
    %v1904 = vpop.f32.mrb[0].mxu0
    %v1905 = vadd.f32 %v1827, %v1904
    %v1906 = vpop.f32.mrb[0].mxu0
    %v1907 = vadd.f32 %v1829, %v1906
    %1908 = vdwg.mxu0
    %v1909 = vand.u32 %v55, 4294901760
    %v1910 = vsub.f32 %v55, %v1909
    %v1911 = vand.u32 %v1910, 4294901760
    %1912 = vmatprep.subr.mxu0 %v1911
    %v1913 = vand.u32 %v54, 4294901760
    %v1914 = vsub.f32 %v54, %v1913
    %v1915 = vand.u32 %v1914, 4294901760
    %1916 = vmatpush1.msra.mxu0 %v1915
    %v1917 = vand.u32 %v57, 4294901760
    %v1918 = vsub.f32 %v57, %v1917
    %v1919 = vand.u32 %v1918, 4294901760
    %1920 = vmatprep.subr.mxu0 %v1919
    %v1921 = vand.u32 %v56, 4294901760
    %v1922 = vsub.f32 %v56, %v1921
    %v1923 = vand.u32 %v1922, 4294901760
    %1924 = vmatpush1.msra.mxu0 %v1923
    %1925 = vmatprep.subr.mxu0 0.0
    %1926 = vmatpush1.msra.mxu0 0.0
    %1927 = vmatprep.subr.mxu0 0.0
    %1928 = vmatpush1.msra.mxu0 0.0
    %1929 = vmatprep.subr.mxu0 0.0
    %1930 = vmatpush1.msra.mxu0 0.0
    %1931 = vmatprep.subr.mxu0 0.0
    %1932 = vmatpush1.msra.mxu0 0.0
    %1933 = vmatprep.subr.mxu0 0.0
    %1934 = vmatpush1.msra.mxu0 0.0
    %1935 = vmatprep.subr.mxu0 0.0
    %1936 = vmatpush1.msra.mxu0 0.0
    %1937 = vmatprep.subr.mxu0 0.0
    %1938 = vmatpush1.msra.mxu0 0.0
    %1939 = vmatprep.subr.mxu0 0.0
    %1940 = vmatpush1.msra.mxu0 0.0
    %1941 = vmatprep.subr.mxu0 0.0
    %1942 = vmatpush1.msra.mxu0 0.0
    %1943 = vmatprep.subr.mxu0 0.0
    %1944 = vmatpush1.msra.mxu0 0.0
    %1945 = vmatprep.subr.mxu0 0.0
    %1946 = vmatpush1.msra.mxu0 0.0
    %1947 = vmatprep.subr.mxu0 0.0
    %1948 = vmatpush1.msra.mxu0 0.0
    %1949 = vmatprep.subr.mxu0 0.0
    %1950 = vmatpush1.msra.mxu0 0.0
    %1951 = vmatprep.subr.mxu0 0.0
    %1952 = vmatpush1.msra.mxu0 0.0
    %1953 = vmatprep.subr.mxu0 0.0
    %1954 = vmatpush1.msra.mxu0 0.0
    %1955 = vmatprep.subr.mxu0 0.0
    %1956 = vmatpush1.msra.mxu0 0.0
    %1957 = vmatprep.subr.mxu0 0.0
    %1958 = vmatpush1.msra.mxu0 0.0
    %1959 = vmatprep.subr.mxu0 0.0
    %1960 = vmatpush1.msra.mxu0 0.0
    %1961 = vmatprep.subr.mxu0 0.0
    %1962 = vmatpush1.msra.mxu0 0.0
    %1963 = vmatprep.subr.mxu0 0.0
    %1964 = vmatpush1.msra.mxu0 0.0
    %1965 = vmatprep.subr.mxu0 0.0
    %1966 = vmatpush1.msra.mxu0 0.0
    %1967 = vmatprep.subr.mxu0 0.0
    %1968 = vmatpush1.msra.mxu0 0.0
    %1969 = vmatprep.subr.mxu0 0.0
    %1970 = vmatpush1.msra.mxu0 0.0
    %1971 = vmatprep.subr.mxu0 0.0
    %1972 = vmatpush1.msra.mxu0 0.0
    %1973 = vmatprep.subr.mxu0 0.0
    %1974 = vmatpush1.msra.mxu0 0.0
    %1975 = vmatprep.subr.mxu0 0.0
    %1976 = vmatpush1.msra.mxu0 0.0
    %1977 = vmatprep.subr.mxu0 0.0
    %1978 = vmatpush1.msra.mxu0 0.0
    %1979 = vmatprep.subr.mxu0 0.0
    %1980 = vmatpush1.msra.mxu0 0.0
    %1981 = vmatprep.subr.mxu0 0.0
    %1982 = vmatpush1.msra.mxu0 0.0
    %1983 = vmatprep.subr.mxu0 0.0
    %1984 = vmatpush1.msra.mxu0 0.0
    %1985 = vmatprep.mubr.f32.mxu0 0.0
    %v1986 = vand.u32 %v1576, 4294901760
    %1987 = vmatmul.mubr.f32.gmra.mrb[0].mxu0 %v1986
    %v1988 = vpop.f32.mrb[0].mxu0
    %v1989 = vadd.f32 %v1905, %v1988
    %v1990 = vpop.f32.mrb[0].mxu0
    %v1991 = vadd.f32 %v1907, %v1990
    %1992 = vdwg.mxu0
    %v1993 = vand.u32 %v55, 4294901760
    %1994 = vmatprep.subr.mxu0 %v1993
    %v1995 = vand.u32 %v54, 4294901760
    %1996 = vmatpush1.msra.mxu0 %v1995
    %v1997 = vand.u32 %v57, 4294901760
    %1998 = vmatprep.subr.mxu0 %v1997
    %v1999 = vand.u32 %v56, 4294901760
    %2000 = vmatpush1.msra.mxu0 %v1999
    %2001 = vmatprep.subr.mxu0 0.0
    %2002 = vmatpush1.msra.mxu0 0.0
    %2003 = vmatprep.subr.mxu0 0.0
    %2004 = vmatpush1.msra.mxu0 0.0
    %2005 = vmatprep.subr.mxu0 0.0
    %2006 = vmatpush1.msra.mxu0 0.0
    %2007 = vmatprep.subr.mxu0 0.0
    %2008 = vmatpush1.msra.mxu0 0.0
    %2009 = vmatprep.subr.mxu0 0.0
    %2010 = vmatpush1.msra.mxu0 0.0
    %2011 = vmatprep.subr.mxu0 0.0
    %2012 = vmatpush1.msra.mxu0 0.0
    %2013 = vmatprep.subr.mxu0 0.0
    %2014 = vmatpush1.msra.mxu0 0.0
    %2015 = vmatprep.subr.mxu0 0.0
    %2016 = vmatpush1.msra.mxu0 0.0
    %2017 = vmatprep.subr.mxu0 0.0
    %2018 = vmatpush1.msra.mxu0 0.0
    %2019 = vmatprep.subr.mxu0 0.0
    %2020 = vmatpush1.msra.mxu0 0.0
    %2021 = vmatprep.subr.mxu0 0.0
    %2022 = vmatpush1.msra.mxu0 0.0
    %2023 = vmatprep.subr.mxu0 0.0
    %2024 = vmatpush1.msra.mxu0 0.0
    %2025 = vmatprep.subr.mxu0 0.0
    %2026 = vmatpush1.msra.mxu0 0.0
    %2027 = vmatprep.subr.mxu0 0.0
    %2028 = vmatpush1.msra.mxu0 0.0
    %2029 = vmatprep.subr.mxu0 0.0
    %2030 = vmatpush1.msra.mxu0 0.0
    %2031 = vmatprep.subr.mxu0 0.0
    %2032 = vmatpush1.msra.mxu0 0.0
    %2033 = vmatprep.subr.mxu0 0.0
    %2034 = vmatpush1.msra.mxu0 0.0
    %2035 = vmatprep.subr.mxu0 0.0
    %2036 = vmatpush1.msra.mxu0 0.0
    %2037 = vmatprep.subr.mxu0 0.0
    %2038 = vmatpush1.msra.mxu0 0.0
    %2039 = vmatprep.subr.mxu0 0.0
    %2040 = vmatpush1.msra.mxu0 0.0
    %2041 = vmatprep.subr.mxu0 0.0
    %2042 = vmatpush1.msra.mxu0 0.0
    %2043 = vmatprep.subr.mxu0 0.0
    %2044 = vmatpush1.msra.mxu0 0.0
    %2045 = vmatprep.subr.mxu0 0.0
    %2046 = vmatpush1.msra.mxu0 0.0
    %2047 = vmatprep.subr.mxu0 0.0
    %2048 = vmatpush1.msra.mxu0 0.0
    %2049 = vmatprep.subr.mxu0 0.0
    %2050 = vmatpush1.msra.mxu0 0.0
    %2051 = vmatprep.subr.mxu0 0.0
    %2052 = vmatpush1.msra.mxu0 0.0
    %2053 = vmatprep.subr.mxu0 0.0
    %2054 = vmatpush1.msra.mxu0 0.0
    %2055 = vmatprep.subr.mxu0 0.0
    %2056 = vmatpush1.msra.mxu0 0.0
    %2057 = vmatprep.subr.mxu0 0.0
    %2058 = vmatpush1.msra.mxu0 0.0
    %2059 = vmatprep.subr.mxu0 0.0
    %2060 = vmatpush1.msra.mxu0 0.0
    %2061 = vmatprep.mubr.f32.mxu0 0.0
    %v2062 = vand.u32 %v1576, 4294901760
    %2063 = vmatmul.mubr.f32.gmra.mrb[0].mxu0 %v2062
    %v2064 = vpop.f32.mrb[0].mxu0
    %v2065 = vadd.f32 %v1989, %v2064
    %v2066 = vpop.f32.mrb[0].mxu0
    %v2067 = vadd.f32 %v1991, %v2066
    %2068 = vdwg.mxu0
    %v2069 = vsub.f32 %v2065, %v1571
    %v2070 = vsub.f32 %v2067, %v1573
    %v2071 = vand.u32 2147483647, %v2069
    %v2072 = vand.u32 2147483647, %v2070
    %v2073 = vadd.f32 %v2071, %v2072
    %2074 = vadd.xlane.f32.xlu0 %v2073
    %v2075 = vpop.xlane.xlu0 %2074
    %v2076 = vsub.f32 0.0, %v2075
    %v2077 = vsub.f32 1.0, %v1068
    %v2078 = vadd.f32 %v2077, %v2076
    %v2079 = vmax.f32 %v2078, 0.0
    %v2080 = vadd.f32 %v2079, 0.0
    %2081 = vset.pattern.permute.xlu0 1
    %2082 = vperm.xlu0 %2081, %v38
    %v2083 = vpop.permute.xlu0 %2082
    %vm2084 = vcmp.eq.s32.totalorder %v59, %v2083
    %v2085 = vsel %vm2084, 1, 0
    %v2086 = vcvt.s32.f32 %v2085
    %2087 = vset.pattern.permute.xlu0 1
    %2088 = vperm.xlu0 %2087, %v39
    %v2089 = vpop.permute.xlu0 %2088
    %vm2090 = vcmp.eq.s32.totalorder %v59, %v2089
    %v2091 = vsel %vm2090, 1, 0
    %v2092 = vcvt.s32.f32 %v2091
    %v2094 = vsel %vm66, %v2092, 0
    %v2096 = vand.u32 %v55, 4294901760
    %2097 = vmatprep.subr.mxu0 %v2096
    %v2098 = vand.u32 %v54, 4294901760
    %2099 = vmatpush1.msra.mxu0 %v2098
    %v2100 = vand.u32 %v57, 4294901760
    %2101 = vmatprep.subr.mxu0 %v2100
    %v2102 = vand.u32 %v56, 4294901760
    %2103 = vmatpush1.msra.mxu0 %v2102
    %2104 = vmatprep.subr.mxu0 0.0
    %2105 = vmatpush1.msra.mxu0 0.0
    %2106 = vmatprep.subr.mxu0 0.0
    %2107 = vmatpush1.msra.mxu0 0.0
    %2108 = vmatprep.subr.mxu0 0.0
    %2109 = vmatpush1.msra.mxu0 0.0
    %2110 = vmatprep.subr.mxu0 0.0
    %2111 = vmatpush1.msra.mxu0 0.0
    %2112 = vmatprep.subr.mxu0 0.0
    %2113 = vmatpush1.msra.mxu0 0.0
    %2114 = vmatprep.subr.mxu0 0.0
    %2115 = vmatpush1.msra.mxu0 0.0
    %2116 = vmatprep.subr.mxu0 0.0
    %2117 = vmatpush1.msra.mxu0 0.0
    %2118 = vmatprep.subr.mxu0 0.0
    %2119 = vmatpush1.msra.mxu0 0.0
    %2120 = vmatprep.subr.mxu0 0.0
    %2121 = vmatpush1.msra.mxu0 0.0
    %2122 = vmatprep.subr.mxu0 0.0
    %2123 = vmatpush1.msra.mxu0 0.0
    %2124 = vmatprep.subr.mxu0 0.0
    %2125 = vmatpush1.msra.mxu0 0.0
    %2126 = vmatprep.subr.mxu0 0.0
    %2127 = vmatpush1.msra.mxu0 0.0
    %2128 = vmatprep.subr.mxu0 0.0
    %2129 = vmatpush1.msra.mxu0 0.0
    %2130 = vmatprep.subr.mxu0 0.0
    %2131 = vmatpush1.msra.mxu0 0.0
    %2132 = vmatprep.subr.mxu0 0.0
    %2133 = vmatpush1.msra.mxu0 0.0
    %2134 = vmatprep.subr.mxu0 0.0
    %2135 = vmatpush1.msra.mxu0 0.0
    %2136 = vmatprep.subr.mxu0 0.0
    %2137 = vmatpush1.msra.mxu0 0.0
    %2138 = vmatprep.subr.mxu0 0.0
    %2139 = vmatpush1.msra.mxu0 0.0
    %2140 = vmatprep.subr.mxu0 0.0
    %2141 = vmatpush1.msra.mxu0 0.0
    %2142 = vmatprep.subr.mxu0 0.0
    %2143 = vmatpush1.msra.mxu0 0.0
    %2144 = vmatprep.subr.mxu0 0.0
    %2145 = vmatpush1.msra.mxu0 0.0
    %2146 = vmatprep.subr.mxu0 0.0
    %2147 = vmatpush1.msra.mxu0 0.0
    %2148 = vmatprep.subr.mxu0 0.0
    %2149 = vmatpush1.msra.mxu0 0.0
    %2150 = vmatprep.subr.mxu0 0.0
    %2151 = vmatpush1.msra.mxu0 0.0
    %2152 = vmatprep.subr.mxu0 0.0
    %2153 = vmatpush1.msra.mxu0 0.0
    %2154 = vmatprep.subr.mxu0 0.0
    %2155 = vmatpush1.msra.mxu0 0.0
    %2156 = vmatprep.subr.mxu0 0.0
    %2157 = vmatpush1.msra.mxu0 0.0
    %2158 = vmatprep.subr.mxu0 0.0
    %2159 = vmatpush1.msra.mxu0 0.0
    %2160 = vmatprep.subr.mxu0 0.0
    %2161 = vmatpush1.msra.mxu0 0.0
    %2162 = vmatprep.subr.mxu0 0.0
    %2163 = vmatpush1.msra.mxu0 0.0
    %2164 = vmatprep.mubr.f32.mxu0 0.0
    %v2165 = vand.u32 %v2094, 4294901760
    %v2166 = vsub.f32 %v2094, %v2165
    %v2167 = vand.u32 %v2166, 4294901760
    %v2168 = vsub.f32 %v2166, %v2167
    %v2169 = vand.u32 %v2168, 4294901760
    %2170 = vmatmul.mubr.f32.gmra.mrb[0].mxu0 %v2169
    %v2171 = vpop.f32.mrb[0].mxu0
    %v2172 = vadd.f32 0.0, %v2171
    %v2173 = vpop.f32.mrb[0].mxu0
    %v2174 = vadd.f32 0.0, %v2173
    %2175 = vdwg.mxu0
    %v2176 = vand.u32 %v55, 4294901760
    %v2177 = vsub.f32 %v55, %v2176
    %v2178 = vand.u32 %v2177, 4294901760
    %v2179 = vsub.f32 %v2177, %v2178
    %v2180 = vand.u32 %v2179, 4294901760
    %2181 = vmatprep.subr.mxu0 %v2180
    %v2182 = vand.u32 %v54, 4294901760
    %v2183 = vsub.f32 %v54, %v2182
    %v2184 = vand.u32 %v2183, 4294901760
    %v2185 = vsub.f32 %v2183, %v2184
    %v2186 = vand.u32 %v2185, 4294901760
    %2187 = vmatpush1.msra.mxu0 %v2186
    %v2188 = vand.u32 %v57, 4294901760
    %v2189 = vsub.f32 %v57, %v2188
    %v2190 = vand.u32 %v2189, 4294901760
    %v2191 = vsub.f32 %v2189, %v2190
    %v2192 = vand.u32 %v2191, 4294901760
    %2193 = vmatprep.subr.mxu0 %v2192
    %v2194 = vand.u32 %v56, 4294901760
    %v2195 = vsub.f32 %v56, %v2194
    %v2196 = vand.u32 %v2195, 4294901760
    %v2197 = vsub.f32 %v2195, %v2196
    %v2198 = vand.u32 %v2197, 4294901760
    %2199 = vmatpush1.msra.mxu0 %v2198
    %2200 = vmatprep.subr.mxu0 0.0
    %2201 = vmatpush1.msra.mxu0 0.0
    %2202 = vmatprep.subr.mxu0 0.0
    %2203 = vmatpush1.msra.mxu0 0.0
    %2204 = vmatprep.subr.mxu0 0.0
    %2205 = vmatpush1.msra.mxu0 0.0
    %2206 = vmatprep.subr.mxu0 0.0
    %2207 = vmatpush1.msra.mxu0 0.0
    %2208 = vmatprep.subr.mxu0 0.0
    %2209 = vmatpush1.msra.mxu0 0.0
    %2210 = vmatprep.subr.mxu0 0.0
    %2211 = vmatpush1.msra.mxu0 0.0
    %2212 = vmatprep.subr.mxu0 0.0
    %2213 = vmatpush1.msra.mxu0 0.0
    %2214 = vmatprep.subr.mxu0 0.0
    %2215 = vmatpush1.msra.mxu0 0.0
    %2216 = vmatprep.subr.mxu0 0.0
    %2217 = vmatpush1.msra.mxu0 0.0
    %2218 = vmatprep.subr.mxu0 0.0
    %2219 = vmatpush1.msra.mxu0 0.0
    %2220 = vmatprep.subr.mxu0 0.0
    %2221 = vmatpush1.msra.mxu0 0.0
    %2222 = vmatprep.subr.mxu0 0.0
    %2223 = vmatpush1.msra.mxu0 0.0
    %2224 = vmatprep.subr.mxu0 0.0
    %2225 = vmatpush1.msra.mxu0 0.0
    %2226 = vmatprep.subr.mxu0 0.0
    %2227 = vmatpush1.msra.mxu0 0.0
    %2228 = vmatprep.subr.mxu0 0.0
    %2229 = vmatpush1.msra.mxu0 0.0
    %2230 = vmatprep.subr.mxu0 0.0
    %2231 = vmatpush1.msra.mxu0 0.0
    %2232 = vmatprep.subr.mxu0 0.0
    %2233 = vmatpush1.msra.mxu0 0.0
    %2234 = vmatprep.subr.mxu0 0.0
    %2235 = vmatpush1.msra.mxu0 0.0
    %2236 = vmatprep.subr.mxu0 0.0
    %2237 = vmatpush1.msra.mxu0 0.0
    %2238 = vmatprep.subr.mxu0 0.0
    %2239 = vmatpush1.msra.mxu0 0.0
    %2240 = vmatprep.subr.mxu0 0.0
    %2241 = vmatpush1.msra.mxu0 0.0
    %2242 = vmatprep.subr.mxu0 0.0
    %2243 = vmatpush1.msra.mxu0 0.0
    %2244 = vmatprep.subr.mxu0 0.0
    %2245 = vmatpush1.msra.mxu0 0.0
    %2246 = vmatprep.subr.mxu0 0.0
    %2247 = vmatpush1.msra.mxu0 0.0
    %2248 = vmatprep.subr.mxu0 0.0
    %2249 = vmatpush1.msra.mxu0 0.0
    %2250 = vmatprep.subr.mxu0 0.0
    %2251 = vmatpush1.msra.mxu0 0.0
    %2252 = vmatprep.subr.mxu0 0.0
    %2253 = vmatpush1.msra.mxu0 0.0
    %2254 = vmatprep.subr.mxu0 0.0
    %2255 = vmatpush1.msra.mxu0 0.0
    %2256 = vmatprep.subr.mxu0 0.0
    %2257 = vmatpush1.msra.mxu0 0.0
    %2258 = vmatprep.subr.mxu0 0.0
    %2259 = vmatpush1.msra.mxu0 0.0
    %2260 = vmatprep.mubr.f32.mxu0 0.0
    %v2261 = vand.u32 %v2094, 4294901760
    %2262 = vmatmul.mubr.f32.gmra.mrb[0].mxu0 %v2261
    %v2263 = vpop.f32.mrb[0].mxu0
    %v2264 = vadd.f32 %v2172, %v2263
    %v2265 = vpop.f32.mrb[0].mxu0
    %v2266 = vadd.f32 %v2174, %v2265
    %2267 = vdwg.mxu0
    %v2268 = vand.u32 %v55, 4294901760
    %v2269 = vsub.f32 %v55, %v2268
    %2270 = vmatprep.subr.mxu0 %v2269
    %v2271 = vand.u32 %v54, 4294901760
    %v2272 = vsub.f32 %v54, %v2271
    %2273 = vmatpush1.msra.mxu0 %v2272
    %v2274 = vand.u32 %v57, 4294901760
    %v2275 = vsub.f32 %v57, %v2274
    %2276 = vmatprep.subr.mxu0 %v2275
    %v2277 = vand.u32 %v56, 4294901760
    %v2278 = vsub.f32 %v56, %v2277
    %2279 = vmatpush1.msra.mxu0 %v2278
    %2280 = vmatprep.subr.mxu0 0.0
    %2281 = vmatpush1.msra.mxu0 0.0
    %2282 = vmatprep.subr.mxu0 0.0
    %2283 = vmatpush1.msra.mxu0 0.0
    %2284 = vmatprep.subr.mxu0 0.0
    %2285 = vmatpush1.msra.mxu0 0.0
    %2286 = vmatprep.subr.mxu0 0.0
    %2287 = vmatpush1.msra.mxu0 0.0
    %2288 = vmatprep.subr.mxu0 0.0
    %2289 = vmatpush1.msra.mxu0 0.0
    %2290 = vmatprep.subr.mxu0 0.0
    %2291 = vmatpush1.msra.mxu0 0.0
    %2292 = vmatprep.subr.mxu0 0.0
    %2293 = vmatpush1.msra.mxu0 0.0
    %2294 = vmatprep.subr.mxu0 0.0
    %2295 = vmatpush1.msra.mxu0 0.0
    %2296 = vmatprep.subr.mxu0 0.0
    %2297 = vmatpush1.msra.mxu0 0.0
    %2298 = vmatprep.subr.mxu0 0.0
    %2299 = vmatpush1.msra.mxu0 0.0
    %2300 = vmatprep.subr.mxu0 0.0
    %2301 = vmatpush1.msra.mxu0 0.0
    %2302 = vmatprep.subr.mxu0 0.0
    %2303 = vmatpush1.msra.mxu0 0.0
    %2304 = vmatprep.subr.mxu0 0.0
    %2305 = vmatpush1.msra.mxu0 0.0
    %2306 = vmatprep.subr.mxu0 0.0
    %2307 = vmatpush1.msra.mxu0 0.0
    %2308 = vmatprep.subr.mxu0 0.0
    %2309 = vmatpush1.msra.mxu0 0.0
    %2310 = vmatprep.subr.mxu0 0.0
    %2311 = vmatpush1.msra.mxu0 0.0
    %2312 = vmatprep.subr.mxu0 0.0
    %2313 = vmatpush1.msra.mxu0 0.0
    %2314 = vmatprep.subr.mxu0 0.0
    %2315 = vmatpush1.msra.mxu0 0.0
    %2316 = vmatprep.subr.mxu0 0.0
    %2317 = vmatpush1.msra.mxu0 0.0
    %2318 = vmatprep.subr.mxu0 0.0
    %2319 = vmatpush1.msra.mxu0 0.0
    %2320 = vmatprep.subr.mxu0 0.0
    %2321 = vmatpush1.msra.mxu0 0.0
    %2322 = vmatprep.subr.mxu0 0.0
    %2323 = vmatpush1.msra.mxu0 0.0
    %2324 = vmatprep.subr.mxu0 0.0
    %2325 = vmatpush1.msra.mxu0 0.0
    %2326 = vmatprep.subr.mxu0 0.0
    %2327 = vmatpush1.msra.mxu0 0.0
    %2328 = vmatprep.subr.mxu0 0.0
    %2329 = vmatpush1.msra.mxu0 0.0
    %2330 = vmatprep.subr.mxu0 0.0
    %2331 = vmatpush1.msra.mxu0 0.0
    %2332 = vmatprep.subr.mxu0 0.0
    %2333 = vmatpush1.msra.mxu0 0.0
    %2334 = vmatprep.subr.mxu0 0.0
    %2335 = vmatpush1.msra.mxu0 0.0
    %2336 = vmatprep.subr.mxu0 0.0
    %2337 = vmatpush1.msra.mxu0 0.0
    %2338 = vmatprep.subr.mxu0 0.0
    %2339 = vmatpush1.msra.mxu0 0.0
    %2340 = vmatprep.mubr.f32.mxu0 0.0
    %v2341 = vand.u32 %v2094, 4294901760
    %v2342 = vsub.f32 %v2094, %v2341
    %2343 = vmatmul.mubr.f32.gmra.mrb[0].mxu0 %v2342
    %v2344 = vpop.f32.mrb[0].mxu0
    %v2345 = vadd.f32 %v2264, %v2344
    %v2346 = vpop.f32.mrb[0].mxu0
    %v2347 = vadd.f32 %v2266, %v2346
    %2348 = vdwg.mxu0
    %v2349 = vand.u32 %v55, 4294901760
    %2350 = vmatprep.subr.mxu0 %v2349
    %v2351 = vand.u32 %v54, 4294901760
    %2352 = vmatpush1.msra.mxu0 %v2351
    %v2353 = vand.u32 %v57, 4294901760
    %2354 = vmatprep.subr.mxu0 %v2353
    %v2355 = vand.u32 %v56, 4294901760
    %2356 = vmatpush1.msra.mxu0 %v2355
    %2357 = vmatprep.subr.mxu0 0.0
    %2358 = vmatpush1.msra.mxu0 0.0
    %2359 = vmatprep.subr.mxu0 0.0
    %2360 = vmatpush1.msra.mxu0 0.0
    %2361 = vmatprep.subr.mxu0 0.0
    %2362 = vmatpush1.msra.mxu0 0.0
    %2363 = vmatprep.subr.mxu0 0.0
    %2364 = vmatpush1.msra.mxu0 0.0
    %2365 = vmatprep.subr.mxu0 0.0
    %2366 = vmatpush1.msra.mxu0 0.0
    %2367 = vmatprep.subr.mxu0 0.0
    %2368 = vmatpush1.msra.mxu0 0.0
    %2369 = vmatprep.subr.mxu0 0.0
    %2370 = vmatpush1.msra.mxu0 0.0
    %2371 = vmatprep.subr.mxu0 0.0
    %2372 = vmatpush1.msra.mxu0 0.0
    %2373 = vmatprep.subr.mxu0 0.0
    %2374 = vmatpush1.msra.mxu0 0.0
    %2375 = vmatprep.subr.mxu0 0.0
    %2376 = vmatpush1.msra.mxu0 0.0
    %2377 = vmatprep.subr.mxu0 0.0
    %2378 = vmatpush1.msra.mxu0 0.0
    %2379 = vmatprep.subr.mxu0 0.0
    %2380 = vmatpush1.msra.mxu0 0.0
    %2381 = vmatprep.subr.mxu0 0.0
    %2382 = vmatpush1.msra.mxu0 0.0
    %2383 = vmatprep.subr.mxu0 0.0
    %2384 = vmatpush1.msra.mxu0 0.0
    %2385 = vmatprep.subr.mxu0 0.0
    %2386 = vmatpush1.msra.mxu0 0.0
    %2387 = vmatprep.subr.mxu0 0.0
    %2388 = vmatpush1.msra.mxu0 0.0
    %2389 = vmatprep.subr.mxu0 0.0
    %2390 = vmatpush1.msra.mxu0 0.0
    %2391 = vmatprep.subr.mxu0 0.0
    %2392 = vmatpush1.msra.mxu0 0.0
    %2393 = vmatprep.subr.mxu0 0.0
    %2394 = vmatpush1.msra.mxu0 0.0
    %2395 = vmatprep.subr.mxu0 0.0
    %2396 = vmatpush1.msra.mxu0 0.0
    %2397 = vmatprep.subr.mxu0 0.0
    %2398 = vmatpush1.msra.mxu0 0.0
    %2399 = vmatprep.subr.mxu0 0.0
    %2400 = vmatpush1.msra.mxu0 0.0
    %2401 = vmatprep.subr.mxu0 0.0
    %2402 = vmatpush1.msra.mxu0 0.0
    %2403 = vmatprep.subr.mxu0 0.0
    %2404 = vmatpush1.msra.mxu0 0.0
    %2405 = vmatprep.subr.mxu0 0.0
    %2406 = vmatpush1.msra.mxu0 0.0
    %2407 = vmatprep.subr.mxu0 0.0
    %2408 = vmatpush1.msra.mxu0 0.0
    %2409 = vmatprep.subr.mxu0 0.0
    %2410 = vmatpush1.msra.mxu0 0.0
    %2411 = vmatprep.subr.mxu0 0.0
    %2412 = vmatpush1.msra.mxu0 0.0
    %2413 = vmatprep.subr.mxu0 0.0
    %2414 = vmatpush1.msra.mxu0 0.0
    %2415 = vmatprep.subr.mxu0 0.0
    %2416 = vmatpush1.msra.mxu0 0.0
    %2417 = vmatprep.mubr.f32.mxu0 0.0
    %v2418 = vand.u32 %v2094, 4294901760
    %v2419 = vsub.f32 %v2094, %v2418
    %v2420 = vand.u32 %v2419, 4294901760
    %2421 = vmatmul.mubr.f32.gmra.mrb[0].mxu0 %v2420
    %v2422 = vpop.f32.mrb[0].mxu0
    %v2423 = vadd.f32 %v2345, %v2422
    %v2424 = vpop.f32.mrb[0].mxu0
    %v2425 = vadd.f32 %v2347, %v2424
    %2426 = vdwg.mxu0
    %v2427 = vand.u32 %v55, 4294901760
    %v2428 = vsub.f32 %v55, %v2427
    %v2429 = vand.u32 %v2428, 4294901760
    %2430 = vmatprep.subr.mxu0 %v2429
    %v2431 = vand.u32 %v54, 4294901760
    %v2432 = vsub.f32 %v54, %v2431
    %v2433 = vand.u32 %v2432, 4294901760
    %2434 = vmatpush1.msra.mxu0 %v2433
    %v2435 = vand.u32 %v57, 4294901760
    %v2436 = vsub.f32 %v57, %v2435
    %v2437 = vand.u32 %v2436, 4294901760
    %2438 = vmatprep.subr.mxu0 %v2437
    %v2439 = vand.u32 %v56, 4294901760
    %v2440 = vsub.f32 %v56, %v2439
    %v2441 = vand.u32 %v2440, 4294901760
    %2442 = vmatpush1.msra.mxu0 %v2441
    %2443 = vmatprep.subr.mxu0 0.0
    %2444 = vmatpush1.msra.mxu0 0.0
    %2445 = vmatprep.subr.mxu0 0.0
    %2446 = vmatpush1.msra.mxu0 0.0
    %2447 = vmatprep.subr.mxu0 0.0
    %2448 = vmatpush1.msra.mxu0 0.0
    %2449 = vmatprep.subr.mxu0 0.0
    %2450 = vmatpush1.msra.mxu0 0.0
    %2451 = vmatprep.subr.mxu0 0.0
    %2452 = vmatpush1.msra.mxu0 0.0
    %2453 = vmatprep.subr.mxu0 0.0
    %2454 = vmatpush1.msra.mxu0 0.0
    %2455 = vmatprep.subr.mxu0 0.0
    %2456 = vmatpush1.msra.mxu0 0.0
    %2457 = vmatprep.subr.mxu0 0.0
    %2458 = vmatpush1.msra.mxu0 0.0
    %2459 = vmatprep.subr.mxu0 0.0
    %2460 = vmatpush1.msra.mxu0 0.0
    %2461 = vmatprep.subr.mxu0 0.0
    %2462 = vmatpush1.msra.mxu0 0.0
    %2463 = vmatprep.subr.mxu0 0.0
    %2464 = vmatpush1.msra.mxu0 0.0
    %2465 = vmatprep.subr.mxu0 0.0
    %2466 = vmatpush1.msra.mxu0 0.0
    %2467 = vmatprep.subr.mxu0 0.0
    %2468 = vmatpush1.msra.mxu0 0.0
    %2469 = vmatprep.subr.mxu0 0.0
    %2470 = vmatpush1.msra.mxu0 0.0
    %2471 = vmatprep.subr.mxu0 0.0
    %2472 = vmatpush1.msra.mxu0 0.0
    %2473 = vmatprep.subr.mxu0 0.0
    %2474 = vmatpush1.msra.mxu0 0.0
    %2475 = vmatprep.subr.mxu0 0.0
    %2476 = vmatpush1.msra.mxu0 0.0
    %2477 = vmatprep.subr.mxu0 0.0
    %2478 = vmatpush1.msra.mxu0 0.0
    %2479 = vmatprep.subr.mxu0 0.0
    %2480 = vmatpush1.msra.mxu0 0.0
    %2481 = vmatprep.subr.mxu0 0.0
    %2482 = vmatpush1.msra.mxu0 0.0
    %2483 = vmatprep.subr.mxu0 0.0
    %2484 = vmatpush1.msra.mxu0 0.0
    %2485 = vmatprep.subr.mxu0 0.0
    %2486 = vmatpush1.msra.mxu0 0.0
    %2487 = vmatprep.subr.mxu0 0.0
    %2488 = vmatpush1.msra.mxu0 0.0
    %2489 = vmatprep.subr.mxu0 0.0
    %2490 = vmatpush1.msra.mxu0 0.0
    %2491 = vmatprep.subr.mxu0 0.0
    %2492 = vmatpush1.msra.mxu0 0.0
    %2493 = vmatprep.subr.mxu0 0.0
    %2494 = vmatpush1.msra.mxu0 0.0
    %2495 = vmatprep.subr.mxu0 0.0
    %2496 = vmatpush1.msra.mxu0 0.0
    %2497 = vmatprep.subr.mxu0 0.0
    %2498 = vmatpush1.msra.mxu0 0.0
    %2499 = vmatprep.subr.mxu0 0.0
    %2500 = vmatpush1.msra.mxu0 0.0
    %2501 = vmatprep.subr.mxu0 0.0
    %2502 = vmatpush1.msra.mxu0 0.0
    %2503 = vmatprep.mubr.f32.mxu0 0.0
    %v2504 = vand.u32 %v2094, 4294901760
    %2505 = vmatmul.mubr.f32.gmra.mrb[0].mxu0 %v2504
    %v2506 = vpop.f32.mrb[0].mxu0
    %v2507 = vadd.f32 %v2423, %v2506
    %v2508 = vpop.f32.mrb[0].mxu0
    %v2509 = vadd.f32 %v2425, %v2508
    %2510 = vdwg.mxu0
    %v2511 = vand.u32 %v55, 4294901760
    %2512 = vmatprep.subr.mxu0 %v2511
    %v2513 = vand.u32 %v54, 4294901760
    %2514 = vmatpush1.msra.mxu0 %v2513
    %v2515 = vand.u32 %v57, 4294901760
    %2516 = vmatprep.subr.mxu0 %v2515
    %v2517 = vand.u32 %v56, 4294901760
    %2518 = vmatpush1.msra.mxu0 %v2517
    %2519 = vmatprep.subr.mxu0 0.0
    %2520 = vmatpush1.msra.mxu0 0.0
    %2521 = vmatprep.subr.mxu0 0.0
    %2522 = vmatpush1.msra.mxu0 0.0
    %2523 = vmatprep.subr.mxu0 0.0
    %2524 = vmatpush1.msra.mxu0 0.0
    %2525 = vmatprep.subr.mxu0 0.0
    %2526 = vmatpush1.msra.mxu0 0.0
    %2527 = vmatprep.subr.mxu0 0.0
    %2528 = vmatpush1.msra.mxu0 0.0
    %2529 = vmatprep.subr.mxu0 0.0
    %2530 = vmatpush1.msra.mxu0 0.0
    %2531 = vmatprep.subr.mxu0 0.0
    %2532 = vmatpush1.msra.mxu0 0.0
    %2533 = vmatprep.subr.mxu0 0.0
    %2534 = vmatpush1.msra.mxu0 0.0
    %2535 = vmatprep.subr.mxu0 0.0
    %2536 = vmatpush1.msra.mxu0 0.0
    %2537 = vmatprep.subr.mxu0 0.0
    %2538 = vmatpush1.msra.mxu0 0.0
    %2539 = vmatprep.subr.mxu0 0.0
    %2540 = vmatpush1.msra.mxu0 0.0
    %2541 = vmatprep.subr.mxu0 0.0
    %2542 = vmatpush1.msra.mxu0 0.0
    %2543 = vmatprep.subr.mxu0 0.0
    %2544 = vmatpush1.msra.mxu0 0.0
    %2545 = vmatprep.subr.mxu0 0.0
    %2546 = vmatpush1.msra.mxu0 0.0
    %2547 = vmatprep.subr.mxu0 0.0
    %2548 = vmatpush1.msra.mxu0 0.0
    %2549 = vmatprep.subr.mxu0 0.0
    %2550 = vmatpush1.msra.mxu0 0.0
    %2551 = vmatprep.subr.mxu0 0.0
    %2552 = vmatpush1.msra.mxu0 0.0
    %2553 = vmatprep.subr.mxu0 0.0
    %2554 = vmatpush1.msra.mxu0 0.0
    %2555 = vmatprep.subr.mxu0 0.0
    %2556 = vmatpush1.msra.mxu0 0.0
    %2557 = vmatprep.subr.mxu0 0.0
    %2558 = vmatpush1.msra.mxu0 0.0
    %2559 = vmatprep.subr.mxu0 0.0
    %2560 = vmatpush1.msra.mxu0 0.0
    %2561 = vmatprep.subr.mxu0 0.0
    %2562 = vmatpush1.msra.mxu0 0.0
    %2563 = vmatprep.subr.mxu0 0.0
    %2564 = vmatpush1.msra.mxu0 0.0
    %2565 = vmatprep.subr.mxu0 0.0
    %2566 = vmatpush1.msra.mxu0 0.0
    %2567 = vmatprep.subr.mxu0 0.0
    %2568 = vmatpush1.msra.mxu0 0.0
    %2569 = vmatprep.subr.mxu0 0.0
    %2570 = vmatpush1.msra.mxu0 0.0
    %2571 = vmatprep.subr.mxu0 0.0
    %2572 = vmatpush1.msra.mxu0 0.0
    %2573 = vmatprep.subr.mxu0 0.0
    %2574 = vmatpush1.msra.mxu0 0.0
    %2575 = vmatprep.subr.mxu0 0.0
    %2576 = vmatpush1.msra.mxu0 0.0
    %2577 = vmatprep.subr.mxu0 0.0
    %2578 = vmatpush1.msra.mxu0 0.0
    %2579 = vmatprep.mubr.f32.mxu0 0.0
    %v2580 = vand.u32 %v2094, 4294901760
    %2581 = vmatmul.mubr.f32.gmra.mrb[0].mxu0 %v2580
    %v2582 = vpop.f32.mrb[0].mxu0
    %v2583 = vadd.f32 %v2507, %v2582
    %v2584 = vpop.f32.mrb[0].mxu0
    %v2585 = vadd.f32 %v2509, %v2584
    %2586 = vdwg.mxu0
    %v2588 = vsel %vm66, %v2086, 0
    %v2590 = vand.u32 %v55, 4294901760
    %2591 = vmatprep.subr.mxu0 %v2590
    %v2592 = vand.u32 %v54, 4294901760
    %2593 = vmatpush1.msra.mxu0 %v2592
    %v2594 = vand.u32 %v57, 4294901760
    %2595 = vmatprep.subr.mxu0 %v2594
    %v2596 = vand.u32 %v56, 4294901760
    %2597 = vmatpush1.msra.mxu0 %v2596
    %2598 = vmatprep.subr.mxu0 0.0
    %2599 = vmatpush1.msra.mxu0 0.0
    %2600 = vmatprep.subr.mxu0 0.0
    %2601 = vmatpush1.msra.mxu0 0.0
    %2602 = vmatprep.subr.mxu0 0.0
    %2603 = vmatpush1.msra.mxu0 0.0
    %2604 = vmatprep.subr.mxu0 0.0
    %2605 = vmatpush1.msra.mxu0 0.0
    %2606 = vmatprep.subr.mxu0 0.0
    %2607 = vmatpush1.msra.mxu0 0.0
    %2608 = vmatprep.subr.mxu0 0.0
    %2609 = vmatpush1.msra.mxu0 0.0
    %2610 = vmatprep.subr.mxu0 0.0
    %2611 = vmatpush1.msra.mxu0 0.0
    %2612 = vmatprep.subr.mxu0 0.0
    %2613 = vmatpush1.msra.mxu0 0.0
    %2614 = vmatprep.subr.mxu0 0.0
    %2615 = vmatpush1.msra.mxu0 0.0
    %2616 = vmatprep.subr.mxu0 0.0
    %2617 = vmatpush1.msra.mxu0 0.0
    %2618 = vmatprep.subr.mxu0 0.0
    %2619 = vmatpush1.msra.mxu0 0.0
    %2620 = vmatprep.subr.mxu0 0.0
    %2621 = vmatpush1.msra.mxu0 0.0
    %2622 = vmatprep.subr.mxu0 0.0
    %2623 = vmatpush1.msra.mxu0 0.0
    %2624 = vmatprep.subr.mxu0 0.0
    %2625 = vmatpush1.msra.mxu0 0.0
    %2626 = vmatprep.subr.mxu0 0.0
    %2627 = vmatpush1.msra.mxu0 0.0
    %2628 = vmatprep.subr.mxu0 0.0
    %2629 = vmatpush1.msra.mxu0 0.0
    %2630 = vmatprep.subr.mxu0 0.0
    %2631 = vmatpush1.msra.mxu0 0.0
    %2632 = vmatprep.subr.mxu0 0.0
    %2633 = vmatpush1.msra.mxu0 0.0
    %2634 = vmatprep.subr.mxu0 0.0
    %2635 = vmatpush1.msra.mxu0 0.0
    %2636 = vmatprep.subr.mxu0 0.0
    %2637 = vmatpush1.msra.mxu0 0.0
    %2638 = vmatprep.subr.mxu0 0.0
    %2639 = vmatpush1.msra.mxu0 0.0
    %2640 = vmatprep.subr.mxu0 0.0
    %2641 = vmatpush1.msra.mxu0 0.0
    %2642 = vmatprep.subr.mxu0 0.0
    %2643 = vmatpush1.msra.mxu0 0.0
    %2644 = vmatprep.subr.mxu0 0.0
    %2645 = vmatpush1.msra.mxu0 0.0
    %2646 = vmatprep.subr.mxu0 0.0
    %2647 = vmatpush1.msra.mxu0 0.0
    %2648 = vmatprep.subr.mxu0 0.0
    %2649 = vmatpush1.msra.mxu0 0.0
    %2650 = vmatprep.subr.mxu0 0.0
    %2651 = vmatpush1.msra.mxu0 0.0
    %2652 = vmatprep.subr.mxu0 0.0
    %2653 = vmatpush1.msra.mxu0 0.0
    %2654 = vmatprep.subr.mxu0 0.0
    %2655 = vmatpush1.msra.mxu0 0.0
    %2656 = vmatprep.subr.mxu0 0.0
    %2657 = vmatpush1.msra.mxu0 0.0
    %2658 = vmatprep.mubr.f32.mxu0 0.0
    %v2659 = vand.u32 %v2588, 4294901760
    %v2660 = vsub.f32 %v2588, %v2659
    %v2661 = vand.u32 %v2660, 4294901760
    %v2662 = vsub.f32 %v2660, %v2661
    %v2663 = vand.u32 %v2662, 4294901760
    %2664 = vmatmul.mubr.f32.gmra.mrb[0].mxu0 %v2663
    %v2665 = vpop.f32.mrb[0].mxu0
    %v2666 = vadd.f32 %v36, %v2665
    %v2667 = vpop.f32.mrb[0].mxu0
    %v2668 = vadd.f32 %v37, %v2667
    %2669 = vdwg.mxu0
    %v2670 = vand.u32 %v55, 4294901760
    %v2671 = vsub.f32 %v55, %v2670
    %v2672 = vand.u32 %v2671, 4294901760
    %v2673 = vsub.f32 %v2671, %v2672
    %v2674 = vand.u32 %v2673, 4294901760
    %2675 = vmatprep.subr.mxu0 %v2674
    %v2676 = vand.u32 %v54, 4294901760
    %v2677 = vsub.f32 %v54, %v2676
    %v2678 = vand.u32 %v2677, 4294901760
    %v2679 = vsub.f32 %v2677, %v2678
    %v2680 = vand.u32 %v2679, 4294901760
    %2681 = vmatpush1.msra.mxu0 %v2680
    %v2682 = vand.u32 %v57, 4294901760
    %v2683 = vsub.f32 %v57, %v2682
    %v2684 = vand.u32 %v2683, 4294901760
    %v2685 = vsub.f32 %v2683, %v2684
    %v2686 = vand.u32 %v2685, 4294901760
    %2687 = vmatprep.subr.mxu0 %v2686
    %v2688 = vand.u32 %v56, 4294901760
    %v2689 = vsub.f32 %v56, %v2688
    %v2690 = vand.u32 %v2689, 4294901760
    %v2691 = vsub.f32 %v2689, %v2690
    %v2692 = vand.u32 %v2691, 4294901760
    %2693 = vmatpush1.msra.mxu0 %v2692
    %2694 = vmatprep.subr.mxu0 0.0
    %2695 = vmatpush1.msra.mxu0 0.0
    %2696 = vmatprep.subr.mxu0 0.0
    %2697 = vmatpush1.msra.mxu0 0.0
    %2698 = vmatprep.subr.mxu0 0.0
    %2699 = vmatpush1.msra.mxu0 0.0
    %2700 = vmatprep.subr.mxu0 0.0
    %2701 = vmatpush1.msra.mxu0 0.0
    %2702 = vmatprep.subr.mxu0 0.0
    %2703 = vmatpush1.msra.mxu0 0.0
    %2704 = vmatprep.subr.mxu0 0.0
    %2705 = vmatpush1.msra.mxu0 0.0
    %2706 = vmatprep.subr.mxu0 0.0
    %2707 = vmatpush1.msra.mxu0 0.0
    %2708 = vmatprep.subr.mxu0 0.0
    %2709 = vmatpush1.msra.mxu0 0.0
    %2710 = vmatprep.subr.mxu0 0.0
    %2711 = vmatpush1.msra.mxu0 0.0
    %2712 = vmatprep.subr.mxu0 0.0
    %2713 = vmatpush1.msra.mxu0 0.0
    %2714 = vmatprep.subr.mxu0 0.0
    %2715 = vmatpush1.msra.mxu0 0.0
    %2716 = vmatprep.subr.mxu0 0.0
    %2717 = vmatpush1.msra.mxu0 0.0
    %2718 = vmatprep.subr.mxu0 0.0
    %2719 = vmatpush1.msra.mxu0 0.0
    %2720 = vmatprep.subr.mxu0 0.0
    %2721 = vmatpush1.msra.mxu0 0.0
    %2722 = vmatprep.subr.mxu0 0.0
    %2723 = vmatpush1.msra.mxu0 0.0
    %2724 = vmatprep.subr.mxu0 0.0
    %2725 = vmatpush1.msra.mxu0 0.0
    %2726 = vmatprep.subr.mxu0 0.0
    %2727 = vmatpush1.msra.mxu0 0.0
    %2728 = vmatprep.subr.mxu0 0.0
    %2729 = vmatpush1.msra.mxu0 0.0
    %2730 = vmatprep.subr.mxu0 0.0
    %2731 = vmatpush1.msra.mxu0 0.0
    %2732 = vmatprep.subr.mxu0 0.0
    %2733 = vmatpush1.msra.mxu0 0.0
    %2734 = vmatprep.subr.mxu0 0.0
    %2735 = vmatpush1.msra.mxu0 0.0
    %2736 = vmatprep.subr.mxu0 0.0
    %2737 = vmatpush1.msra.mxu0 0.0
    %2738 = vmatprep.subr.mxu0 0.0
    %2739 = vmatpush1.msra.mxu0 0.0
    %2740 = vmatprep.subr.mxu0 0.0
    %2741 = vmatpush1.msra.mxu0 0.0
    %2742 = vmatprep.subr.mxu0 0.0
    %2743 = vmatpush1.msra.mxu0 0.0
    %2744 = vmatprep.subr.mxu0 0.0
    %2745 = vmatpush1.msra.mxu0 0.0
    %2746 = vmatprep.subr.mxu0 0.0
    %2747 = vmatpush1.msra.mxu0 0.0
    %2748 = vmatprep.subr.mxu0 0.0
    %2749 = vmatpush1.msra.mxu0 0.0
    %2750 = vmatprep.subr.mxu0 0.0
    %2751 = vmatpush1.msra.mxu0 0.0
    %2752 = vmatprep.subr.mxu0 0.0
    %2753 = vmatpush1.msra.mxu0 0.0
    %2754 = vmatprep.mubr.f32.mxu0 0.0
    %v2755 = vand.u32 %v2588, 4294901760
    %2756 = vmatmul.mubr.f32.gmra.mrb[0].mxu0 %v2755
    %v2757 = vpop.f32.mrb[0].mxu0
    %v2758 = vadd.f32 %v2666, %v2757
    %v2759 = vpop.f32.mrb[0].mxu0
    %v2760 = vadd.f32 %v2668, %v2759
    %2761 = vdwg.mxu0
    %v2762 = vand.u32 %v55, 4294901760
    %v2763 = vsub.f32 %v55, %v2762
    %2764 = vmatprep.subr.mxu0 %v2763
    %v2765 = vand.u32 %v54, 4294901760
    %v2766 = vsub.f32 %v54, %v2765
    %2767 = vmatpush1.msra.mxu0 %v2766
    %v2768 = vand.u32 %v57, 4294901760
    %v2769 = vsub.f32 %v57, %v2768
    %2770 = vmatprep.subr.mxu0 %v2769
    %v2771 = vand.u32 %v56, 4294901760
    %v2772 = vsub.f32 %v56, %v2771
    %2773 = vmatpush1.msra.mxu0 %v2772
    %2774 = vmatprep.subr.mxu0 0.0
    %2775 = vmatpush1.msra.mxu0 0.0
    %2776 = vmatprep.subr.mxu0 0.0
    %2777 = vmatpush1.msra.mxu0 0.0
    %2778 = vmatprep.subr.mxu0 0.0
    %2779 = vmatpush1.msra.mxu0 0.0
    %2780 = vmatprep.subr.mxu0 0.0
    %2781 = vmatpush1.msra.mxu0 0.0
    %2782 = vmatprep.subr.mxu0 0.0
    %2783 = vmatpush1.msra.mxu0 0.0
    %2784 = vmatprep.subr.mxu0 0.0
    %2785 = vmatpush1.msra.mxu0 0.0
    %2786 = vmatprep.subr.mxu0 0.0
    %2787 = vmatpush1.msra.mxu0 0.0
    %2788 = vmatprep.subr.mxu0 0.0
    %2789 = vmatpush1.msra.mxu0 0.0
    %2790 = vmatprep.subr.mxu0 0.0
    %2791 = vmatpush1.msra.mxu0 0.0
    %2792 = vmatprep.subr.mxu0 0.0
    %2793 = vmatpush1.msra.mxu0 0.0
    %2794 = vmatprep.subr.mxu0 0.0
    %2795 = vmatpush1.msra.mxu0 0.0
    %2796 = vmatprep.subr.mxu0 0.0
    %2797 = vmatpush1.msra.mxu0 0.0
    %2798 = vmatprep.subr.mxu0 0.0
    %2799 = vmatpush1.msra.mxu0 0.0
    %2800 = vmatprep.subr.mxu0 0.0
    %2801 = vmatpush1.msra.mxu0 0.0
    %2802 = vmatprep.subr.mxu0 0.0
    %2803 = vmatpush1.msra.mxu0 0.0
    %2804 = vmatprep.subr.mxu0 0.0
    %2805 = vmatpush1.msra.mxu0 0.0
    %2806 = vmatprep.subr.mxu0 0.0
    %2807 = vmatpush1.msra.mxu0 0.0
    %2808 = vmatprep.subr.mxu0 0.0
    %2809 = vmatpush1.msra.mxu0 0.0
    %2810 = vmatprep.subr.mxu0 0.0
    %2811 = vmatpush1.msra.mxu0 0.0
    %2812 = vmatprep.subr.mxu0 0.0
    %2813 = vmatpush1.msra.mxu0 0.0
    %2814 = vmatprep.subr.mxu0 0.0
    %2815 = vmatpush1.msra.mxu0 0.0
    %2816 = vmatprep.subr.mxu0 0.0
    %2817 = vmatpush1.msra.mxu0 0.0
    %2818 = vmatprep.subr.mxu0 0.0
    %2819 = vmatpush1.msra.mxu0 0.0
    %2820 = vmatprep.subr.mxu0 0.0
    %2821 = vmatpush1.msra.mxu0 0.0
    %2822 = vmatprep.subr.mxu0 0.0
    %2823 = vmatpush1.msra.mxu0 0.0
    %2824 = vmatprep.subr.mxu0 0.0
    %2825 = vmatpush1.msra.mxu0 0.0
    %2826 = vmatprep.subr.mxu0 0.0
    %2827 = vmatpush1.msra.mxu0 0.0
    %2828 = vmatprep.subr.mxu0 0.0
    %2829 = vmatpush1.msra.mxu0 0.0
    %2830 = vmatprep.subr.mxu0 0.0
    %2831 = vmatpush1.msra.mxu0 0.0
    %2832 = vmatprep.subr.mxu0 0.0
    %2833 = vmatpush1.msra.mxu0 0.0
    %2834 = vmatprep.mubr.f32.mxu0 0.0
    %v2835 = vand.u32 %v2588, 4294901760
    %v2836 = vsub.f32 %v2588, %v2835
    %2837 = vmatmul.mubr.f32.gmra.mrb[0].mxu0 %v2836
    %v2838 = vpop.f32.mrb[0].mxu0
    %v2839 = vadd.f32 %v2758, %v2838
    %v2840 = vpop.f32.mrb[0].mxu0
    %v2841 = vadd.f32 %v2760, %v2840
    %2842 = vdwg.mxu0
    %v2843 = vand.u32 %v55, 4294901760
    %2844 = vmatprep.subr.mxu0 %v2843
    %v2845 = vand.u32 %v54, 4294901760
    %2846 = vmatpush1.msra.mxu0 %v2845
    %v2847 = vand.u32 %v57, 4294901760
    %2848 = vmatprep.subr.mxu0 %v2847
    %v2849 = vand.u32 %v56, 4294901760
    %2850 = vmatpush1.msra.mxu0 %v2849
    %2851 = vmatprep.subr.mxu0 0.0
    %2852 = vmatpush1.msra.mxu0 0.0
    %2853 = vmatprep.subr.mxu0 0.0
    %2854 = vmatpush1.msra.mxu0 0.0
    %2855 = vmatprep.subr.mxu0 0.0
    %2856 = vmatpush1.msra.mxu0 0.0
    %2857 = vmatprep.subr.mxu0 0.0
    %2858 = vmatpush1.msra.mxu0 0.0
    %2859 = vmatprep.subr.mxu0 0.0
    %2860 = vmatpush1.msra.mxu0 0.0
    %2861 = vmatprep.subr.mxu0 0.0
    %2862 = vmatpush1.msra.mxu0 0.0
    %2863 = vmatprep.subr.mxu0 0.0
    %2864 = vmatpush1.msra.mxu0 0.0
    %2865 = vmatprep.subr.mxu0 0.0
    %2866 = vmatpush1.msra.mxu0 0.0
    %2867 = vmatprep.subr.mxu0 0.0
    %2868 = vmatpush1.msra.mxu0 0.0
    %2869 = vmatprep.subr.mxu0 0.0
    %2870 = vmatpush1.msra.mxu0 0.0
    %2871 = vmatprep.subr.mxu0 0.0
    %2872 = vmatpush1.msra.mxu0 0.0
    %2873 = vmatprep.subr.mxu0 0.0
    %2874 = vmatpush1.msra.mxu0 0.0
    %2875 = vmatprep.subr.mxu0 0.0
    %2876 = vmatpush1.msra.mxu0 0.0
    %2877 = vmatprep.subr.mxu0 0.0
    %2878 = vmatpush1.msra.mxu0 0.0
    %2879 = vmatprep.subr.mxu0 0.0
    %2880 = vmatpush1.msra.mxu0 0.0
    %2881 = vmatprep.subr.mxu0 0.0
    %2882 = vmatpush1.msra.mxu0 0.0
    %2883 = vmatprep.subr.mxu0 0.0
    %2884 = vmatpush1.msra.mxu0 0.0
    %2885 = vmatprep.subr.mxu0 0.0
    %2886 = vmatpush1.msra.mxu0 0.0
    %2887 = vmatprep.subr.mxu0 0.0
    %2888 = vmatpush1.msra.mxu0 0.0
    %2889 = vmatprep.subr.mxu0 0.0
    %2890 = vmatpush1.msra.mxu0 0.0
    %2891 = vmatprep.subr.mxu0 0.0
    %2892 = vmatpush1.msra.mxu0 0.0
    %2893 = vmatprep.subr.mxu0 0.0
    %2894 = vmatpush1.msra.mxu0 0.0
    %2895 = vmatprep.subr.mxu0 0.0
    %2896 = vmatpush1.msra.mxu0 0.0
    %2897 = vmatprep.subr.mxu0 0.0
    %2898 = vmatpush1.msra.mxu0 0.0
    %2899 = vmatprep.subr.mxu0 0.0
    %2900 = vmatpush1.msra.mxu0 0.0
    %2901 = vmatprep.subr.mxu0 0.0
    %2902 = vmatpush1.msra.mxu0 0.0
    %2903 = vmatprep.subr.mxu0 0.0
    %2904 = vmatpush1.msra.mxu0 0.0
    %2905 = vmatprep.subr.mxu0 0.0
    %2906 = vmatpush1.msra.mxu0 0.0
    %2907 = vmatprep.subr.mxu0 0.0
    %2908 = vmatpush1.msra.mxu0 0.0
    %2909 = vmatprep.subr.mxu0 0.0
    %2910 = vmatpush1.msra.mxu0 0.0
    %2911 = vmatprep.mubr.f32.mxu0 0.0
    %v2912 = vand.u32 %v2588, 4294901760
    %v2913 = vsub.f32 %v2588, %v2912
    %v2914 = vand.u32 %v2913, 4294901760
    %2915 = vmatmul.mubr.f32.gmra.mrb[0].mxu0 %v2914
    %v2916 = vpop.f32.mrb[0].mxu0
    %v2917 = vadd.f32 %v2839, %v2916
    %v2918 = vpop.f32.mrb[0].mxu0
    %v2919 = vadd.f32 %v2841, %v2918
    %2920 = vdwg.mxu0
    %v2921 = vand.u32 %v55, 4294901760
    %v2922 = vsub.f32 %v55, %v2921
    %v2923 = vand.u32 %v2922, 4294901760
    %2924 = vmatprep.subr.mxu0 %v2923
    %v2925 = vand.u32 %v54, 4294901760
    %v2926 = vsub.f32 %v54, %v2925
    %v2927 = vand.u32 %v2926, 4294901760
    %2928 = vmatpush1.msra.mxu0 %v2927
    %v2929 = vand.u32 %v57, 4294901760
    %v2930 = vsub.f32 %v57, %v2929
    %v2931 = vand.u32 %v2930, 4294901760
    %2932 = vmatprep.subr.mxu0 %v2931
    %v2933 = vand.u32 %v56, 4294901760
    %v2934 = vsub.f32 %v56, %v2933
    %v2935 = vand.u32 %v2934, 4294901760
    %2936 = vmatpush1.msra.mxu0 %v2935
    %2937 = vmatprep.subr.mxu0 0.0
    %2938 = vmatpush1.msra.mxu0 0.0
    %2939 = vmatprep.subr.mxu0 0.0
    %2940 = vmatpush1.msra.mxu0 0.0
    %2941 = vmatprep.subr.mxu0 0.0
    %2942 = vmatpush1.msra.mxu0 0.0
    %2943 = vmatprep.subr.mxu0 0.0
    %2944 = vmatpush1.msra.mxu0 0.0
    %2945 = vmatprep.subr.mxu0 0.0
    %2946 = vmatpush1.msra.mxu0 0.0
    %2947 = vmatprep.subr.mxu0 0.0
    %2948 = vmatpush1.msra.mxu0 0.0
    %2949 = vmatprep.subr.mxu0 0.0
    %2950 = vmatpush1.msra.mxu0 0.0
    %2951 = vmatprep.subr.mxu0 0.0
    %2952 = vmatpush1.msra.mxu0 0.0
    %2953 = vmatprep.subr.mxu0 0.0
    %2954 = vmatpush1.msra.mxu0 0.0
    %2955 = vmatprep.subr.mxu0 0.0
    %2956 = vmatpush1.msra.mxu0 0.0
    %2957 = vmatprep.subr.mxu0 0.0
    %2958 = vmatpush1.msra.mxu0 0.0
    %2959 = vmatprep.subr.mxu0 0.0
    %2960 = vmatpush1.msra.mxu0 0.0
    %2961 = vmatprep.subr.mxu0 0.0
    %2962 = vmatpush1.msra.mxu0 0.0
    %2963 = vmatprep.subr.mxu0 0.0
    %2964 = vmatpush1.msra.mxu0 0.0
    %2965 = vmatprep.subr.mxu0 0.0
    %2966 = vmatpush1.msra.mxu0 0.0
    %2967 = vmatprep.subr.mxu0 0.0
    %2968 = vmatpush1.msra.mxu0 0.0
    %2969 = vmatprep.subr.mxu0 0.0
    %2970 = vmatpush1.msra.mxu0 0.0
    %2971 = vmatprep.subr.mxu0 0.0
    %2972 = vmatpush1.msra.mxu0 0.0
    %2973 = vmatprep.subr.mxu0 0.0
    %2974 = vmatpush1.msra.mxu0 0.0
    %2975 = vmatprep.subr.mxu0 0.0
    %2976 = vmatpush1.msra.mxu0 0.0
    %2977 = vmatprep.subr.mxu0 0.0
    %2978 = vmatpush1.msra.mxu0 0.0
    %2979 = vmatprep.subr.mxu0 0.0
    %2980 = vmatpush1.msra.mxu0 0.0
    %2981 = vmatprep.subr.mxu0 0.0
    %2982 = vmatpush1.msra.mxu0 0.0
    %2983 = vmatprep.subr.mxu0 0.0
    %2984 = vmatpush1.msra.mxu0 0.0
    %2985 = vmatprep.subr.mxu0 0.0
    %2986 = vmatpush1.msra.mxu0 0.0
    %2987 = vmatprep.subr.mxu0 0.0
    %2988 = vmatpush1.msra.mxu0 0.0
    %2989 = vmatprep.subr.mxu0 0.0
    %2990 = vmatpush1.msra.mxu0 0.0
    %2991 = vmatprep.subr.mxu0 0.0
    %2992 = vmatpush1.msra.mxu0 0.0
    %2993 = vmatprep.subr.mxu0 0.0
    %2994 = vmatpush1.msra.mxu0 0.0
    %2995 = vmatprep.subr.mxu0 0.0
    %2996 = vmatpush1.msra.mxu0 0.0
    %2997 = vmatprep.mubr.f32.mxu0 0.0
    %v2998 = vand.u32 %v2588, 4294901760
    %2999 = vmatmul.mubr.f32.gmra.mrb[0].mxu0 %v2998
    %v3000 = vpop.f32.mrb[0].mxu0
    %v3001 = vadd.f32 %v2917, %v3000
    %v3002 = vpop.f32.mrb[0].mxu0
    %v3003 = vadd.f32 %v2919, %v3002
    %3004 = vdwg.mxu0
    %v3005 = vand.u32 %v55, 4294901760
    %3006 = vmatprep.subr.mxu0 %v3005
    %v3007 = vand.u32 %v54, 4294901760
    %3008 = vmatpush1.msra.mxu0 %v3007
    %v3009 = vand.u32 %v57, 4294901760
    %3010 = vmatprep.subr.mxu0 %v3009
    %v3011 = vand.u32 %v56, 4294901760
    %3012 = vmatpush1.msra.mxu0 %v3011
    %3013 = vmatprep.subr.mxu0 0.0
    %3014 = vmatpush1.msra.mxu0 0.0
    %3015 = vmatprep.subr.mxu0 0.0
    %3016 = vmatpush1.msra.mxu0 0.0
    %3017 = vmatprep.subr.mxu0 0.0
    %3018 = vmatpush1.msra.mxu0 0.0
    %3019 = vmatprep.subr.mxu0 0.0
    %3020 = vmatpush1.msra.mxu0 0.0
    %3021 = vmatprep.subr.mxu0 0.0
    %3022 = vmatpush1.msra.mxu0 0.0
    %3023 = vmatprep.subr.mxu0 0.0
    %3024 = vmatpush1.msra.mxu0 0.0
    %3025 = vmatprep.subr.mxu0 0.0
    %3026 = vmatpush1.msra.mxu0 0.0
    %3027 = vmatprep.subr.mxu0 0.0
    %3028 = vmatpush1.msra.mxu0 0.0
    %3029 = vmatprep.subr.mxu0 0.0
    %3030 = vmatpush1.msra.mxu0 0.0
    %3031 = vmatprep.subr.mxu0 0.0
    %3032 = vmatpush1.msra.mxu0 0.0
    %3033 = vmatprep.subr.mxu0 0.0
    %3034 = vmatpush1.msra.mxu0 0.0
    %3035 = vmatprep.subr.mxu0 0.0
    %3036 = vmatpush1.msra.mxu0 0.0
    %3037 = vmatprep.subr.mxu0 0.0
    %3038 = vmatpush1.msra.mxu0 0.0
    %3039 = vmatprep.subr.mxu0 0.0
    %3040 = vmatpush1.msra.mxu0 0.0
    %3041 = vmatprep.subr.mxu0 0.0
    %3042 = vmatpush1.msra.mxu0 0.0
    %3043 = vmatprep.subr.mxu0 0.0
    %3044 = vmatpush1.msra.mxu0 0.0
    %3045 = vmatprep.subr.mxu0 0.0
    %3046 = vmatpush1.msra.mxu0 0.0
    %3047 = vmatprep.subr.mxu0 0.0
    %3048 = vmatpush1.msra.mxu0 0.0
    %3049 = vmatprep.subr.mxu0 0.0
    %3050 = vmatpush1.msra.mxu0 0.0
    %3051 = vmatprep.subr.mxu0 0.0
    %3052 = vmatpush1.msra.mxu0 0.0
    %3053 = vmatprep.subr.mxu0 0.0
    %3054 = vmatpush1.msra.mxu0 0.0
    %3055 = vmatprep.subr.mxu0 0.0
    %3056 = vmatpush1.msra.mxu0 0.0
    %3057 = vmatprep.subr.mxu0 0.0
    %3058 = vmatpush1.msra.mxu0 0.0
    %3059 = vmatprep.subr.mxu0 0.0
    %3060 = vmatpush1.msra.mxu0 0.0
    %3061 = vmatprep.subr.mxu0 0.0
    %3062 = vmatpush1.msra.mxu0 0.0
    %3063 = vmatprep.subr.mxu0 0.0
    %3064 = vmatpush1.msra.mxu0 0.0
    %3065 = vmatprep.subr.mxu0 0.0
    %3066 = vmatpush1.msra.mxu0 0.0
    %3067 = vmatprep.subr.mxu0 0.0
    %3068 = vmatpush1.msra.mxu0 0.0
    %3069 = vmatprep.subr.mxu0 0.0
    %3070 = vmatpush1.msra.mxu0 0.0
    %3071 = vmatprep.subr.mxu0 0.0
    %3072 = vmatpush1.msra.mxu0 0.0
    %3073 = vmatprep.mubr.f32.mxu0 0.0
    %v3074 = vand.u32 %v2588, 4294901760
    %3075 = vmatmul.mubr.f32.gmra.mrb[0].mxu0 %v3074
    %v3076 = vpop.f32.mrb[0].mxu0
    %v3077 = vadd.f32 %v3001, %v3076
    %v3078 = vpop.f32.mrb[0].mxu0
    %v3079 = vadd.f32 %v3003, %v3078
    %3080 = vdwg.mxu0
    %v3081 = vsub.f32 %v3077, %v2583
    %v3082 = vsub.f32 %v3079, %v2585
    %v3083 = vand.u32 2147483647, %v3081
    %v3084 = vand.u32 2147483647, %v3082
    %v3085 = vadd.f32 %v3083, %v3084
    %3086 = vadd.xlane.f32.xlu0 %v3085
    %v3087 = vpop.xlane.xlu0 %3086
    %v3088 = vsub.f32 0.0, %v3087
    %v3089 = vadd.f32 %v2077, %v3088
    %v3090 = vmax.f32 %v3089, 0.0
    %v3091 = vadd.f32 %v2080, %v3090
    %3092 = vset.pattern.permute.xlu0 2
    %3093 = vperm.xlu0 %3092, %v38
    %v3094 = vpop.permute.xlu0 %3093
    %vm3095 = vcmp.eq.s32.totalorder %v59, %v3094
    %v3096 = vsel %vm3095, 1, 0
    %v3097 = vcvt.s32.f32 %v3096
    %3098 = vset.pattern.permute.xlu0 2
    %3099 = vperm.xlu0 %3098, %v39
    %v3100 = vpop.permute.xlu0 %3099
    %vm3101 = vcmp.eq.s32.totalorder %v59, %v3100
    %v3102 = vsel %vm3101, 1, 0
    %v3103 = vcvt.s32.f32 %v3102
    %v3105 = vsel %vm66, %v3103, 0
    %v3107 = vand.u32 %v55, 4294901760
    %3108 = vmatprep.subr.mxu0 %v3107
    %v3109 = vand.u32 %v54, 4294901760
    %3110 = vmatpush1.msra.mxu0 %v3109
    %v3111 = vand.u32 %v57, 4294901760
    %3112 = vmatprep.subr.mxu0 %v3111
    %v3113 = vand.u32 %v56, 4294901760
    %3114 = vmatpush1.msra.mxu0 %v3113
    %3115 = vmatprep.subr.mxu0 0.0
    %3116 = vmatpush1.msra.mxu0 0.0
    %3117 = vmatprep.subr.mxu0 0.0
    %3118 = vmatpush1.msra.mxu0 0.0
    %3119 = vmatprep.subr.mxu0 0.0
    %3120 = vmatpush1.msra.mxu0 0.0
    %3121 = vmatprep.subr.mxu0 0.0
    %3122 = vmatpush1.msra.mxu0 0.0
    %3123 = vmatprep.subr.mxu0 0.0
    %3124 = vmatpush1.msra.mxu0 0.0
    %3125 = vmatprep.subr.mxu0 0.0
    %3126 = vmatpush1.msra.mxu0 0.0
    %3127 = vmatprep.subr.mxu0 0.0
    %3128 = vmatpush1.msra.mxu0 0.0
    %3129 = vmatprep.subr.mxu0 0.0
    %3130 = vmatpush1.msra.mxu0 0.0
    %3131 = vmatprep.subr.mxu0 0.0
    %3132 = vmatpush1.msra.mxu0 0.0
    %3133 = vmatprep.subr.mxu0 0.0
    %3134 = vmatpush1.msra.mxu0 0.0
    %3135 = vmatprep.subr.mxu0 0.0
    %3136 = vmatpush1.msra.mxu0 0.0
    %3137 = vmatprep.subr.mxu0 0.0
    %3138 = vmatpush1.msra.mxu0 0.0
    %3139 = vmatprep.subr.mxu0 0.0
    %3140 = vmatpush1.msra.mxu0 0.0
    %3141 = vmatprep.subr.mxu0 0.0
    %3142 = vmatpush1.msra.mxu0 0.0
    %3143 = vmatprep.subr.mxu0 0.0
    %3144 = vmatpush1.msra.mxu0 0.0
    %3145 = vmatprep.subr.mxu0 0.0
    %3146 = vmatpush1.msra.mxu0 0.0
    %3147 = vmatprep.subr.mxu0 0.0
    %3148 = vmatpush1.msra.mxu0 0.0
    %3149 = vmatprep.subr.mxu0 0.0
    %3150 = vmatpush1.msra.mxu0 0.0
    %3151 = vmatprep.subr.mxu0 0.0
    %3152 = vmatpush1.msra.mxu0 0.0
    %3153 = vmatprep.subr.mxu0 0.0
    %3154 = vmatpush1.msra.mxu0 0.0
    %3155 = vmatprep.subr.mxu0 0.0
    %3156 = vmatpush1.msra.mxu0 0.0
    %3157 = vmatprep.subr.mxu0 0.0
    %3158 = vmatpush1.msra.mxu0 0.0
    %3159 = vmatprep.subr.mxu0 0.0
    %3160 = vmatpush1.msra.mxu0 0.0
    %3161 = vmatprep.subr.mxu0 0.0
    %3162 = vmatpush1.msra.mxu0 0.0
    %3163 = vmatprep.subr.mxu0 0.0
    %3164 = vmatpush1.msra.mxu0 0.0
    %3165 = vmatprep.subr.mxu0 0.0
    %3166 = vmatpush1.msra.mxu0 0.0
    %3167 = vmatprep.subr.mxu0 0.0
    %3168 = vmatpush1.msra.mxu0 0.0
    %3169 = vmatprep.subr.mxu0 0.0
    %3170 = vmatpush1.msra.mxu0 0.0
    %3171 = vmatprep.subr.mxu0 0.0
    %3172 = vmatpush1.msra.mxu0 0.0
    %3173 = vmatprep.subr.mxu0 0.0
    %3174 = vmatpush1.msra.mxu0 0.0
    %3175 = vmatprep.mubr.f32.mxu0 0.0
    %v3176 = vand.u32 %v3105, 4294901760
    %v3177 = vsub.f32 %v3105, %v3176
    %v3178 = vand.u32 %v3177, 4294901760
    %v3179 = vsub.f32 %v3177, %v3178
    %v3180 = vand.u32 %v3179, 4294901760
    %3181 = vmatmul.mubr.f32.gmra.mrb[0].mxu0 %v3180
    %v3182 = vpop.f32.mrb[0].mxu0
    %v3183 = vadd.f32 0.0, %v3182
    %v3184 = vpop.f32.mrb[0].mxu0
    %v3185 = vadd.f32 0.0, %v3184
    %3186 = vdwg.mxu0
    %v3187 = vand.u32 %v55, 4294901760
    %v3188 = vsub.f32 %v55, %v3187
    %v3189 = vand.u32 %v3188, 4294901760
    %v3190 = vsub.f32 %v3188, %v3189
    %v3191 = vand.u32 %v3190, 4294901760
    %3192 = vmatprep.subr.mxu0 %v3191
    %v3193 = vand.u32 %v54, 4294901760
    %v3194 = vsub.f32 %v54, %v3193
    %v3195 = vand.u32 %v3194, 4294901760
    %v3196 = vsub.f32 %v3194, %v3195
    %v3197 = vand.u32 %v3196, 4294901760
    %3198 = vmatpush1.msra.mxu0 %v3197
    %v3199 = vand.u32 %v57, 4294901760
    %v3200 = vsub.f32 %v57, %v3199
    %v3201 = vand.u32 %v3200, 4294901760
    %v3202 = vsub.f32 %v3200, %v3201
    %v3203 = vand.u32 %v3202, 4294901760
    %3204 = vmatprep.subr.mxu0 %v3203
    %v3205 = vand.u32 %v56, 4294901760
    %v3206 = vsub.f32 %v56, %v3205
    %v3207 = vand.u32 %v3206, 4294901760
    %v3208 = vsub.f32 %v3206, %v3207
    %v3209 = vand.u32 %v3208, 4294901760
    %3210 = vmatpush1.msra.mxu0 %v3209
    %3211 = vmatprep.subr.mxu0 0.0
    %3212 = vmatpush1.msra.mxu0 0.0
    %3213 = vmatprep.subr.mxu0 0.0
    %3214 = vmatpush1.msra.mxu0 0.0
    %3215 = vmatprep.subr.mxu0 0.0
    %3216 = vmatpush1.msra.mxu0 0.0
    %3217 = vmatprep.subr.mxu0 0.0
    %3218 = vmatpush1.msra.mxu0 0.0
    %3219 = vmatprep.subr.mxu0 0.0
    %3220 = vmatpush1.msra.mxu0 0.0
    %3221 = vmatprep.subr.mxu0 0.0
    %3222 = vmatpush1.msra.mxu0 0.0
    %3223 = vmatprep.subr.mxu0 0.0
    %3224 = vmatpush1.msra.mxu0 0.0
    %3225 = vmatprep.subr.mxu0 0.0
    %3226 = vmatpush1.msra.mxu0 0.0
    %3227 = vmatprep.subr.mxu0 0.0
    %3228 = vmatpush1.msra.mxu0 0.0
    %3229 = vmatprep.subr.mxu0 0.0
    %3230 = vmatpush1.msra.mxu0 0.0
    %3231 = vmatprep.subr.mxu0 0.0
    %3232 = vmatpush1.msra.mxu0 0.0
    %3233 = vmatprep.subr.mxu0 0.0
    %3234 = vmatpush1.msra.mxu0 0.0
    %3235 = vmatprep.subr.mxu0 0.0
    %3236 = vmatpush1.msra.mxu0 0.0
    %3237 = vmatprep.subr.mxu0 0.0
    %3238 = vmatpush1.msra.mxu0 0.0
    %3239 = vmatprep.subr.mxu0 0.0
    %3240 = vmatpush1.msra.mxu0 0.0
    %3241 = vmatprep.subr.mxu0 0.0
    %3242 = vmatpush1.msra.mxu0 0.0
    %3243 = vmatprep.subr.mxu0 0.0
    %3244 = vmatpush1.msra.mxu0 0.0
    %3245 = vmatprep.subr.mxu0 0.0
    %3246 = vmatpush1.msra.mxu0 0.0
    %3247 = vmatprep.subr.mxu0 0.0
    %3248 = vmatpush1.msra.mxu0 0.0
    %3249 = vmatprep.subr.mxu0 0.0
    %3250 = vmatpush1.msra.mxu0 0.0
    %3251 = vmatprep.subr.mxu0 0.0
    %3252 = vmatpush1.msra.mxu0 0.0
    %3253 = vmatprep.subr.mxu0 0.0
    %3254 = vmatpush1.msra.mxu0 0.0
    %3255 = vmatprep.subr.mxu0 0.0
    %3256 = vmatpush1.msra.mxu0 0.0
    %3257 = vmatprep.subr.mxu0 0.0
    %3258 = vmatpush1.msra.mxu0 0.0
    %3259 = vmatprep.subr.mxu0 0.0
    %3260 = vmatpush1.msra.mxu0 0.0
    %3261 = vmatprep.subr.mxu0 0.0
    %3262 = vmatpush1.msra.mxu0 0.0
    %3263 = vmatprep.subr.mxu0 0.0
    %3264 = vmatpush1.msra.mxu0 0.0
    %3265 = vmatprep.subr.mxu0 0.0
    %3266 = vmatpush1.msra.mxu0 0.0
    %3267 = vmatprep.subr.mxu0 0.0
    %3268 = vmatpush1.msra.mxu0 0.0
    %3269 = vmatprep.subr.mxu0 0.0
    %3270 = vmatpush1.msra.mxu0 0.0
    %3271 = vmatprep.mubr.f32.mxu0 0.0
    %v3272 = vand.u32 %v3105, 4294901760
    %3273 = vmatmul.mubr.f32.gmra.mrb[0].mxu0 %v3272
    %v3274 = vpop.f32.mrb[0].mxu0
    %v3275 = vadd.f32 %v3183, %v3274
    %v3276 = vpop.f32.mrb[0].mxu0
    %v3277 = vadd.f32 %v3185, %v3276
    %3278 = vdwg.mxu0
    %v3279 = vand.u32 %v55, 4294901760
    %v3280 = vsub.f32 %v55, %v3279
    %3281 = vmatprep.subr.mxu0 %v3280
    %v3282 = vand.u32 %v54, 4294901760
    %v3283 = vsub.f32 %v54, %v3282
    %3284 = vmatpush1.msra.mxu0 %v3283
    %v3285 = vand.u32 %v57, 4294901760
    %v3286 = vsub.f32 %v57, %v3285
    %3287 = vmatprep.subr.mxu0 %v3286
    %v3288 = vand.u32 %v56, 4294901760
    %v3289 = vsub.f32 %v56, %v3288
    %3290 = vmatpush1.msra.mxu0 %v3289
    %3291 = vmatprep.subr.mxu0 0.0
    %3292 = vmatpush1.msra.mxu0 0.0
    %3293 = vmatprep.subr.mxu0 0.0
    %3294 = vmatpush1.msra.mxu0 0.0
    %3295 = vmatprep.subr.mxu0 0.0
    %3296 = vmatpush1.msra.mxu0 0.0
    %3297 = vmatprep.subr.mxu0 0.0
    %3298 = vmatpush1.msra.mxu0 0.0
    %3299 = vmatprep.subr.mxu0 0.0
    %3300 = vmatpush1.msra.mxu0 0.0
    %3301 = vmatprep.subr.mxu0 0.0
    %3302 = vmatpush1.msra.mxu0 0.0
    %3303 = vmatprep.subr.mxu0 0.0
    %3304 = vmatpush1.msra.mxu0 0.0
    %3305 = vmatprep.subr.mxu0 0.0
    %3306 = vmatpush1.msra.mxu0 0.0
    %3307 = vmatprep.subr.mxu0 0.0
    %3308 = vmatpush1.msra.mxu0 0.0
    %3309 = vmatprep.subr.mxu0 0.0
    %3310 = vmatpush1.msra.mxu0 0.0
    %3311 = vmatprep.subr.mxu0 0.0
    %3312 = vmatpush1.msra.mxu0 0.0
    %3313 = vmatprep.subr.mxu0 0.0
    %3314 = vmatpush1.msra.mxu0 0.0
    %3315 = vmatprep.subr.mxu0 0.0
    %3316 = vmatpush1.msra.mxu0 0.0
    %3317 = vmatprep.subr.mxu0 0.0
    %3318 = vmatpush1.msra.mxu0 0.0
    %3319 = vmatprep.subr.mxu0 0.0
    %3320 = vmatpush1.msra.mxu0 0.0
    %3321 = vmatprep.subr.mxu0 0.0
    %3322 = vmatpush1.msra.mxu0 0.0
    %3323 = vmatprep.subr.mxu0 0.0
    %3324 = vmatpush1.msra.mxu0 0.0
    %3325 = vmatprep.subr.mxu0 0.0
    %3326 = vmatpush1.msra.mxu0 0.0
    %3327 = vmatprep.subr.mxu0 0.0
    %3328 = vmatpush1.msra.mxu0 0.0
    %3329 = vmatprep.subr.mxu0 0.0
    %3330 = vmatpush1.msra.mxu0 0.0
    %3331 = vmatprep.subr.mxu0 0.0
    %3332 = vmatpush1.msra.mxu0 0.0
    %3333 = vmatprep.subr.mxu0 0.0
    %3334 = vmatpush1.msra.mxu0 0.0
    %3335 = vmatprep.subr.mxu0 0.0
    %3336 = vmatpush1.msra.mxu0 0.0
    %3337 = vmatprep.subr.mxu0 0.0
    %3338 = vmatpush1.msra.mxu0 0.0
    %3339 = vmatprep.subr.mxu0 0.0
    %3340 = vmatpush1.msra.mxu0 0.0
    %3341 = vmatprep.subr.mxu0 0.0
    %3342 = vmatpush1.msra.mxu0 0.0
    %3343 = vmatprep.subr.mxu0 0.0
    %3344 = vmatpush1.msra.mxu0 0.0
    %3345 = vmatprep.subr.mxu0 0.0
    %3346 = vmatpush1.msra.mxu0 0.0
    %3347 = vmatprep.subr.mxu0 0.0
    %3348 = vmatpush1.msra.mxu0 0.0
    %3349 = vmatprep.subr.mxu0 0.0
    %3350 = vmatpush1.msra.mxu0 0.0
    %3351 = vmatprep.mubr.f32.mxu0 0.0
    %v3352 = vand.u32 %v3105, 4294901760
    %v3353 = vsub.f32 %v3105, %v3352
    %3354 = vmatmul.mubr.f32.gmra.mrb[0].mxu0 %v3353
    %v3355 = vpop.f32.mrb[0].mxu0
    %v3356 = vadd.f32 %v3275, %v3355
    %v3357 = vpop.f32.mrb[0].mxu0
    %v3358 = vadd.f32 %v3277, %v3357
    %3359 = vdwg.mxu0
    %v3360 = vand.u32 %v55, 4294901760
    %3361 = vmatprep.subr.mxu0 %v3360
    %v3362 = vand.u32 %v54, 4294901760
    %3363 = vmatpush1.msra.mxu0 %v3362
    %v3364 = vand.u32 %v57, 4294901760
    %3365 = vmatprep.subr.mxu0 %v3364
    %v3366 = vand.u32 %v56, 4294901760
    %3367 = vmatpush1.msra.mxu0 %v3366
    %3368 = vmatprep.subr.mxu0 0.0
    %3369 = vmatpush1.msra.mxu0 0.0
    %3370 = vmatprep.subr.mxu0 0.0
    %3371 = vmatpush1.msra.mxu0 0.0
    %3372 = vmatprep.subr.mxu0 0.0
    %3373 = vmatpush1.msra.mxu0 0.0
    %3374 = vmatprep.subr.mxu0 0.0
    %3375 = vmatpush1.msra.mxu0 0.0
    %3376 = vmatprep.subr.mxu0 0.0
    %3377 = vmatpush1.msra.mxu0 0.0
    %3378 = vmatprep.subr.mxu0 0.0
    %3379 = vmatpush1.msra.mxu0 0.0
    %3380 = vmatprep.subr.mxu0 0.0
    %3381 = vmatpush1.msra.mxu0 0.0
    %3382 = vmatprep.subr.mxu0 0.0
    %3383 = vmatpush1.msra.mxu0 0.0
    %3384 = vmatprep.subr.mxu0 0.0
    %3385 = vmatpush1.msra.mxu0 0.0
    %3386 = vmatprep.subr.mxu0 0.0
    %3387 = vmatpush1.msra.mxu0 0.0
    %3388 = vmatprep.subr.mxu0 0.0
    %3389 = vmatpush1.msra.mxu0 0.0
    %3390 = vmatprep.subr.mxu0 0.0
    %3391 = vmatpush1.msra.mxu0 0.0
    %3392 = vmatprep.subr.mxu0 0.0
    %3393 = vmatpush1.msra.mxu0 0.0
    %3394 = vmatprep.subr.mxu0 0.0
    %3395 = vmatpush1.msra.mxu0 0.0
    %3396 = vmatprep.subr.mxu0 0.0
    %3397 = vmatpush1.msra.mxu0 0.0
    %3398 = vmatprep.subr.mxu0 0.0
    %3399 = vmatpush1.msra.mxu0 0.0
    %3400 = vmatprep.subr.mxu0 0.0
    %3401 = vmatpush1.msra.mxu0 0.0
    %3402 = vmatprep.subr.mxu0 0.0
    %3403 = vmatpush1.msra.mxu0 0.0
    %3404 = vmatprep.subr.mxu0 0.0
    %3405 = vmatpush1.msra.mxu0 0.0
    %3406 = vmatprep.subr.mxu0 0.0
    %3407 = vmatpush1.msra.mxu0 0.0
    %3408 = vmatprep.subr.mxu0 0.0
    %3409 = vmatpush1.msra.mxu0 0.0
    %3410 = vmatprep.subr.mxu0 0.0
    %3411 = vmatpush1.msra.mxu0 0.0
    %3412 = vmatprep.subr.mxu0 0.0
    %3413 = vmatpush1.msra.mxu0 0.0
    %3414 = vmatprep.subr.mxu0 0.0
    %3415 = vmatpush1.msra.mxu0 0.0
    %3416 = vmatprep.subr.mxu0 0.0
    %3417 = vmatpush1.msra.mxu0 0.0
    %3418 = vmatprep.subr.mxu0 0.0
    %3419 = vmatpush1.msra.mxu0 0.0
    %3420 = vmatprep.subr.mxu0 0.0
    %3421 = vmatpush1.msra.mxu0 0.0
    %3422 = vmatprep.subr.mxu0 0.0
    %3423 = vmatpush1.msra.mxu0 0.0
    %3424 = vmatprep.subr.mxu0 0.0
    %3425 = vmatpush1.msra.mxu0 0.0
    %3426 = vmatprep.subr.mxu0 0.0
    %3427 = vmatpush1.msra.mxu0 0.0
    %3428 = vmatprep.mubr.f32.mxu0 0.0
    %v3429 = vand.u32 %v3105, 4294901760
    %v3430 = vsub.f32 %v3105, %v3429
    %v3431 = vand.u32 %v3430, 4294901760
    %3432 = vmatmul.mubr.f32.gmra.mrb[0].mxu0 %v3431
    %v3433 = vpop.f32.mrb[0].mxu0
    %v3434 = vadd.f32 %v3356, %v3433
    %v3435 = vpop.f32.mrb[0].mxu0
    %v3436 = vadd.f32 %v3358, %v3435
    %3437 = vdwg.mxu0
    %v3438 = vand.u32 %v55, 4294901760
    %v3439 = vsub.f32 %v55, %v3438
    %v3440 = vand.u32 %v3439, 4294901760
    %3441 = vmatprep.subr.mxu0 %v3440
    %v3442 = vand.u32 %v54, 4294901760
    %v3443 = vsub.f32 %v54, %v3442
    %v3444 = vand.u32 %v3443, 4294901760
    %3445 = vmatpush1.msra.mxu0 %v3444
    %v3446 = vand.u32 %v57, 4294901760
    %v3447 = vsub.f32 %v57, %v3446
    %v3448 = vand.u32 %v3447, 4294901760
    %3449 = vmatprep.subr.mxu0 %v3448
    %v3450 = vand.u32 %v56, 4294901760
    %v3451 = vsub.f32 %v56, %v3450
    %v3452 = vand.u32 %v3451, 4294901760
    %3453 = vmatpush1.msra.mxu0 %v3452
    %3454 = vmatprep.subr.mxu0 0.0
    %3455 = vmatpush1.msra.mxu0 0.0
    %3456 = vmatprep.subr.mxu0 0.0
    %3457 = vmatpush1.msra.mxu0 0.0
    %3458 = vmatprep.subr.mxu0 0.0
    %3459 = vmatpush1.msra.mxu0 0.0
    %3460 = vmatprep.subr.mxu0 0.0
    %3461 = vmatpush1.msra.mxu0 0.0
    %3462 = vmatprep.subr.mxu0 0.0
    %3463 = vmatpush1.msra.mxu0 0.0
    %3464 = vmatprep.subr.mxu0 0.0
    %3465 = vmatpush1.msra.mxu0 0.0
    %3466 = vmatprep.subr.mxu0 0.0
    %3467 = vmatpush1.msra.mxu0 0.0
    %3468 = vmatprep.subr.mxu0 0.0
    %3469 = vmatpush1.msra.mxu0 0.0
    %3470 = vmatprep.subr.mxu0 0.0
    %3471 = vmatpush1.msra.mxu0 0.0
    %3472 = vmatprep.subr.mxu0 0.0
    %3473 = vmatpush1.msra.mxu0 0.0
    %3474 = vmatprep.subr.mxu0 0.0
    %3475 = vmatpush1.msra.mxu0 0.0
    %3476 = vmatprep.subr.mxu0 0.0
    %3477 = vmatpush1.msra.mxu0 0.0
    %3478 = vmatprep.subr.mxu0 0.0
    %3479 = vmatpush1.msra.mxu0 0.0
    %3480 = vmatprep.subr.mxu0 0.0
    %3481 = vmatpush1.msra.mxu0 0.0
    %3482 = vmatprep.subr.mxu0 0.0
    %3483 = vmatpush1.msra.mxu0 0.0
    %3484 = vmatprep.subr.mxu0 0.0
    %3485 = vmatpush1.msra.mxu0 0.0
    %3486 = vmatprep.subr.mxu0 0.0
    %3487 = vmatpush1.msra.mxu0 0.0
    %3488 = vmatprep.subr.mxu0 0.0
    %3489 = vmatpush1.msra.mxu0 0.0
    %3490 = vmatprep.subr.mxu0 0.0
    %3491 = vmatpush1.msra.mxu0 0.0
    %3492 = vmatprep.subr.mxu0 0.0
    %3493 = vmatpush1.msra.mxu0 0.0
    %3494 = vmatprep.subr.mxu0 0.0
    %3495 = vmatpush1.msra.mxu0 0.0
    %3496 = vmatprep.subr.mxu0 0.0
    %3497 = vmatpush1.msra.mxu0 0.0
    %3498 = vmatprep.subr.mxu0 0.0
    %3499 = vmatpush1.msra.mxu0 0.0
    %3500 = vmatprep.subr.mxu0 0.0
    %3501 = vmatpush1.msra.mxu0 0.0
    %3502 = vmatprep.subr.mxu0 0.0
    %3503 = vmatpush1.msra.mxu0 0.0
    %3504 = vmatprep.subr.mxu0 0.0
    %3505 = vmatpush1.msra.mxu0 0.0
    %3506 = vmatprep.subr.mxu0 0.0
    %3507 = vmatpush1.msra.mxu0 0.0
    %3508 = vmatprep.subr.mxu0 0.0
    %3509 = vmatpush1.msra.mxu0 0.0
    %3510 = vmatprep.subr.mxu0 0.0
    %3511 = vmatpush1.msra.mxu0 0.0
    %3512 = vmatprep.subr.mxu0 0.0
    %3513 = vmatpush1.msra.mxu0 0.0
    %3514 = vmatprep.mubr.f32.mxu0 0.0
    %v3515 = vand.u32 %v3105, 4294901760
    %3516 = vmatmul.mubr.f32.gmra.mrb[0].mxu0 %v3515
    %v3517 = vpop.f32.mrb[0].mxu0
    %v3518 = vadd.f32 %v3434, %v3517
    %v3519 = vpop.f32.mrb[0].mxu0
    %v3520 = vadd.f32 %v3436, %v3519
    %3521 = vdwg.mxu0
    %v3522 = vand.u32 %v55, 4294901760
    %3523 = vmatprep.subr.mxu0 %v3522
    %v3524 = vand.u32 %v54, 4294901760
    %3525 = vmatpush1.msra.mxu0 %v3524
    %v3526 = vand.u32 %v57, 4294901760
    %3527 = vmatprep.subr.mxu0 %v3526
    %v3528 = vand.u32 %v56, 4294901760
    %3529 = vmatpush1.msra.mxu0 %v3528
    %3530 = vmatprep.subr.mxu0 0.0
    %3531 = vmatpush1.msra.mxu0 0.0
    %3532 = vmatprep.subr.mxu0 0.0
    %3533 = vmatpush1.msra.mxu0 0.0
    %3534 = vmatprep.subr.mxu0 0.0
    %3535 = vmatpush1.msra.mxu0 0.0
    %3536 = vmatprep.subr.mxu0 0.0
    %3537 = vmatpush1.msra.mxu0 0.0
    %3538 = vmatprep.subr.mxu0 0.0
    %3539 = vmatpush1.msra.mxu0 0.0
    %3540 = vmatprep.subr.mxu0 0.0
    %3541 = vmatpush1.msra.mxu0 0.0
    %3542 = vmatprep.subr.mxu0 0.0
    %3543 = vmatpush1.msra.mxu0 0.0
    %3544 = vmatprep.subr.mxu0 0.0
    %3545 = vmatpush1.msra.mxu0 0.0
    %3546 = vmatprep.subr.mxu0 0.0
    %3547 = vmatpush1.msra.mxu0 0.0
    %3548 = vmatprep.subr.mxu0 0.0
    %3549 = vmatpush1.msra.mxu0 0.0
    %3550 = vmatprep.subr.mxu0 0.0
    %3551 = vmatpush1.msra.mxu0 0.0
    %3552 = vmatprep.subr.mxu0 0.0
    %3553 = vmatpush1.msra.mxu0 0.0
    %3554 = vmatprep.subr.mxu0 0.0
    %3555 = vmatpush1.msra.mxu0 0.0
    %3556 = vmatprep.subr.mxu0 0.0
    %3557 = vmatpush1.msra.mxu0 0.0
    %3558 = vmatprep.subr.mxu0 0.0
    %3559 = vmatpush1.msra.mxu0 0.0
    %3560 = vmatprep.subr.mxu0 0.0
    %3561 = vmatpush1.msra.mxu0 0.0
    %3562 = vmatprep.subr.mxu0 0.0
    %3563 = vmatpush1.msra.mxu0 0.0
    %3564 = vmatprep.subr.mxu0 0.0
    %3565 = vmatpush1.msra.mxu0 0.0
    %3566 = vmatprep.subr.mxu0 0.0
    %3567 = vmatpush1.msra.mxu0 0.0
    %3568 = vmatprep.subr.mxu0 0.0
    %3569 = vmatpush1.msra.mxu0 0.0
    %3570 = vmatprep.subr.mxu0 0.0
    %3571 = vmatpush1.msra.mxu0 0.0
    %3572 = vmatprep.subr.mxu0 0.0
    %3573 = vmatpush1.msra.mxu0 0.0
    %3574 = vmatprep.subr.mxu0 0.0
    %3575 = vmatpush1.msra.mxu0 0.0
    %3576 = vmatprep.subr.mxu0 0.0
    %3577 = vmatpush1.msra.mxu0 0.0
    %3578 = vmatprep.subr.mxu0 0.0
    %3579 = vmatpush1.msra.mxu0 0.0
    %3580 = vmatprep.subr.mxu0 0.0
    %3581 = vmatpush1.msra.mxu0 0.0
    %3582 = vmatprep.subr.mxu0 0.0
    %3583 = vmatpush1.msra.mxu0 0.0
    %3584 = vmatprep.subr.mxu0 0.0
    %3585 = vmatpush1.msra.mxu0 0.0
    %3586 = vmatprep.subr.mxu0 0.0
    %3587 = vmatpush1.msra.mxu0 0.0
    %3588 = vmatprep.subr.mxu0 0.0
    %3589 = vmatpush1.msra.mxu0 0.0
    %3590 = vmatprep.mubr.f32.mxu0 0.0
    %v3591 = vand.u32 %v3105, 4294901760
    %3592 = vmatmul.mubr.f32.gmra.mrb[0].mxu0 %v3591
    %v3593 = vpop.f32.mrb[0].mxu0
    %v3594 = vadd.f32 %v3518, %v3593
    %v3595 = vpop.f32.mrb[0].mxu0
    %v3596 = vadd.f32 %v3520, %v3595
    %3597 = vdwg.mxu0
    %v3599 = vsel %vm66, %v3097, 0
    %v3601 = vand.u32 %v55, 4294901760
    %3602 = vmatprep.subr.mxu0 %v3601
    %v3603 = vand.u32 %v54, 4294901760
    %3604 = vmatpush1.msra.mxu0 %v3603
    %v3605 = vand.u32 %v57, 4294901760
    %3606 = vmatprep.subr.mxu0 %v3605
    %v3607 = vand.u32 %v56, 4294901760
    %3608 = vmatpush1.msra.mxu0 %v3607
    %3609 = vmatprep.subr.mxu0 0.0
    %3610 = vmatpush1.msra.mxu0 0.0
    %3611 = vmatprep.subr.mxu0 0.0
    %3612 = vmatpush1.msra.mxu0 0.0
    %3613 = vmatprep.subr.mxu0 0.0
    %3614 = vmatpush1.msra.mxu0 0.0
    %3615 = vmatprep.subr.mxu0 0.0
    %3616 = vmatpush1.msra.mxu0 0.0
    %3617 = vmatprep.subr.mxu0 0.0
    %3618 = vmatpush1.msra.mxu0 0.0
    %3619 = vmatprep.subr.mxu0 0.0
    %3620 = vmatpush1.msra.mxu0 0.0
    %3621 = vmatprep.subr.mxu0 0.0
    %3622 = vmatpush1.msra.mxu0 0.0
    %3623 = vmatprep.subr.mxu0 0.0
    %3624 = vmatpush1.msra.mxu0 0.0
    %3625 = vmatprep.subr.mxu0 0.0
    %3626 = vmatpush1.msra.mxu0 0.0
    %3627 = vmatprep.subr.mxu0 0.0
    %3628 = vmatpush1.msra.mxu0 0.0
    %3629 = vmatprep.subr.mxu0 0.0
    %3630 = vmatpush1.msra.mxu0 0.0
    %3631 = vmatprep.subr.mxu0 0.0
    %3632 = vmatpush1.msra.mxu0 0.0
    %3633 = vmatprep.subr.mxu0 0.0
    %3634 = vmatpush1.msra.mxu0 0.0
    %3635 = vmatprep.subr.mxu0 0.0
    %3636 = vmatpush1.msra.mxu0 0.0
    %3637 = vmatprep.subr.mxu0 0.0
    %3638 = vmatpush1.msra.mxu0 0.0
    %3639 = vmatprep.subr.mxu0 0.0
    %3640 = vmatpush1.msra.mxu0 0.0
    %3641 = vmatprep.subr.mxu0 0.0
    %3642 = vmatpush1.msra.mxu0 0.0
    %3643 = vmatprep.subr.mxu0 0.0
    %3644 = vmatpush1.msra.mxu0 0.0
    %3645 = vmatprep.subr.mxu0 0.0
    %3646 = vmatpush1.msra.mxu0 0.0
    %3647 = vmatprep.subr.mxu0 0.0
    %3648 = vmatpush1.msra.mxu0 0.0
    %3649 = vmatprep.subr.mxu0 0.0
    %3650 = vmatpush1.msra.mxu0 0.0
    %3651 = vmatprep.subr.mxu0 0.0
    %3652 = vmatpush1.msra.mxu0 0.0
    %3653 = vmatprep.subr.mxu0 0.0
    %3654 = vmatpush1.msra.mxu0 0.0
    %3655 = vmatprep.subr.mxu0 0.0
    %3656 = vmatpush1.msra.mxu0 0.0
    %3657 = vmatprep.subr.mxu0 0.0
    %3658 = vmatpush1.msra.mxu0 0.0
    %3659 = vmatprep.subr.mxu0 0.0
    %3660 = vmatpush1.msra.mxu0 0.0
    %3661 = vmatprep.subr.mxu0 0.0
    %3662 = vmatpush1.msra.mxu0 0.0
    %3663 = vmatprep.subr.mxu0 0.0
    %3664 = vmatpush1.msra.mxu0 0.0
    %3665 = vmatprep.subr.mxu0 0.0
    %3666 = vmatpush1.msra.mxu0 0.0
    %3667 = vmatprep.subr.mxu0 0.0
    %3668 = vmatpush1.msra.mxu0 0.0
    %3669 = vmatprep.mubr.f32.mxu0 0.0
    %v3670 = vand.u32 %v3599, 4294901760
    %v3671 = vsub.f32 %v3599, %v3670
    %v3672 = vand.u32 %v3671, 4294901760
    %v3673 = vsub.f32 %v3671, %v3672
    %v3674 = vand.u32 %v3673, 4294901760
    %3675 = vmatmul.mubr.f32.gmra.mrb[0].mxu0 %v3674
    %v3676 = vpop.f32.mrb[0].mxu0
    %v3677 = vadd.f32 %v36, %v3676
    %v3678 = vpop.f32.mrb[0].mxu0
    %v3679 = vadd.f32 %v37, %v3678
    %3680 = vdwg.mxu0
    %v3681 = vand.u32 %v55, 4294901760
    %v3682 = vsub.f32 %v55, %v3681
    %v3683 = vand.u32 %v3682, 4294901760
    %v3684 = vsub.f32 %v3682, %v3683
    %v3685 = vand.u32 %v3684, 4294901760
    %3686 = vmatprep.subr.mxu0 %v3685
    %v3687 = vand.u32 %v54, 4294901760
    %v3688 = vsub.f32 %v54, %v3687
    %v3689 = vand.u32 %v3688, 4294901760
    %v3690 = vsub.f32 %v3688, %v3689
    %v3691 = vand.u32 %v3690, 4294901760
    %3692 = vmatpush1.msra.mxu0 %v3691
    %v3693 = vand.u32 %v57, 4294901760
    %v3694 = vsub.f32 %v57, %v3693
    %v3695 = vand.u32 %v3694, 4294901760
    %v3696 = vsub.f32 %v3694, %v3695
    %v3697 = vand.u32 %v3696, 4294901760
    %3698 = vmatprep.subr.mxu0 %v3697
    %v3699 = vand.u32 %v56, 4294901760
    %v3700 = vsub.f32 %v56, %v3699
    %v3701 = vand.u32 %v3700, 4294901760
    %v3702 = vsub.f32 %v3700, %v3701
    %v3703 = vand.u32 %v3702, 4294901760
    %3704 = vmatpush1.msra.mxu0 %v3703
    %3705 = vmatprep.subr.mxu0 0.0
    %3706 = vmatpush1.msra.mxu0 0.0
    %3707 = vmatprep.subr.mxu0 0.0
    %3708 = vmatpush1.msra.mxu0 0.0
    %3709 = vmatprep.subr.mxu0 0.0
    %3710 = vmatpush1.msra.mxu0 0.0
    %3711 = vmatprep.subr.mxu0 0.0
    %3712 = vmatpush1.msra.mxu0 0.0
    %3713 = vmatprep.subr.mxu0 0.0
    %3714 = vmatpush1.msra.mxu0 0.0
    %3715 = vmatprep.subr.mxu0 0.0
    %3716 = vmatpush1.msra.mxu0 0.0
    %3717 = vmatprep.subr.mxu0 0.0
    %3718 = vmatpush1.msra.mxu0 0.0
    %3719 = vmatprep.subr.mxu0 0.0
    %3720 = vmatpush1.msra.mxu0 0.0
    %3721 = vmatprep.subr.mxu0 0.0
    %3722 = vmatpush1.msra.mxu0 0.0
    %3723 = vmatprep.subr.mxu0 0.0
    %3724 = vmatpush1.msra.mxu0 0.0
    %3725 = vmatprep.subr.mxu0 0.0
    %3726 = vmatpush1.msra.mxu0 0.0
    %3727 = vmatprep.subr.mxu0 0.0
    %3728 = vmatpush1.msra.mxu0 0.0
    %3729 = vmatprep.subr.mxu0 0.0
    %3730 = vmatpush1.msra.mxu0 0.0
    %3731 = vmatprep.subr.mxu0 0.0
    %3732 = vmatpush1.msra.mxu0 0.0
    %3733 = vmatprep.subr.mxu0 0.0
    %3734 = vmatpush1.msra.mxu0 0.0
    %3735 = vmatprep.subr.mxu0 0.0
    %3736 = vmatpush1.msra.mxu0 0.0
    %3737 = vmatprep.subr.mxu0 0.0
    %3738 = vmatpush1.msra.mxu0 0.0
    %3739 = vmatprep.subr.mxu0 0.0
    %3740 = vmatpush1.msra.mxu0 0.0
    %3741 = vmatprep.subr.mxu0 0.0
    %3742 = vmatpush1.msra.mxu0 0.0
    %3743 = vmatprep.subr.mxu0 0.0
    %3744 = vmatpush1.msra.mxu0 0.0
    %3745 = vmatprep.subr.mxu0 0.0
    %3746 = vmatpush1.msra.mxu0 0.0
    %3747 = vmatprep.subr.mxu0 0.0
    %3748 = vmatpush1.msra.mxu0 0.0
    %3749 = vmatprep.subr.mxu0 0.0
    %3750 = vmatpush1.msra.mxu0 0.0
    %3751 = vmatprep.subr.mxu0 0.0
    %3752 = vmatpush1.msra.mxu0 0.0
    %3753 = vmatprep.subr.mxu0 0.0
    %3754 = vmatpush1.msra.mxu0 0.0
    %3755 = vmatprep.subr.mxu0 0.0
    %3756 = vmatpush1.msra.mxu0 0.0
    %3757 = vmatprep.subr.mxu0 0.0
    %3758 = vmatpush1.msra.mxu0 0.0
    %3759 = vmatprep.subr.mxu0 0.0
    %3760 = vmatpush1.msra.mxu0 0.0
    %3761 = vmatprep.subr.mxu0 0.0
    %3762 = vmatpush1.msra.mxu0 0.0
    %3763 = vmatprep.subr.mxu0 0.0
    %3764 = vmatpush1.msra.mxu0 0.0
    %3765 = vmatprep.mubr.f32.mxu0 0.0
    %v3766 = vand.u32 %v3599, 4294901760
    %3767 = vmatmul.mubr.f32.gmra.mrb[0].mxu0 %v3766
    %v3768 = vpop.f32.mrb[0].mxu0
    %v3769 = vadd.f32 %v3677, %v3768
    %v3770 = vpop.f32.mrb[0].mxu0
    %v3771 = vadd.f32 %v3679, %v3770
    %3772 = vdwg.mxu0
    %v3773 = vand.u32 %v55, 4294901760
    %v3774 = vsub.f32 %v55, %v3773
    %3775 = vmatprep.subr.mxu0 %v3774
    %v3776 = vand.u32 %v54, 4294901760
    %v3777 = vsub.f32 %v54, %v3776
    %3778 = vmatpush1.msra.mxu0 %v3777
    %v3779 = vand.u32 %v57, 4294901760
    %v3780 = vsub.f32 %v57, %v3779
    %3781 = vmatprep.subr.mxu0 %v3780
    %v3782 = vand.u32 %v56, 4294901760
    %v3783 = vsub.f32 %v56, %v3782
    %3784 = vmatpush1.msra.mxu0 %v3783
    %3785 = vmatprep.subr.mxu0 0.0
    %3786 = vmatpush1.msra.mxu0 0.0
    %3787 = vmatprep.subr.mxu0 0.0
    %3788 = vmatpush1.msra.mxu0 0.0
    %3789 = vmatprep.subr.mxu0 0.0
    %3790 = vmatpush1.msra.mxu0 0.0
    %3791 = vmatprep.subr.mxu0 0.0
    %3792 = vmatpush1.msra.mxu0 0.0
    %3793 = vmatprep.subr.mxu0 0.0
    %3794 = vmatpush1.msra.mxu0 0.0
    %3795 = vmatprep.subr.mxu0 0.0
    %3796 = vmatpush1.msra.mxu0 0.0
    %3797 = vmatprep.subr.mxu0 0.0
    %3798 = vmatpush1.msra.mxu0 0.0
    %3799 = vmatprep.subr.mxu0 0.0
    %3800 = vmatpush1.msra.mxu0 0.0
    %3801 = vmatprep.subr.mxu0 0.0
    %3802 = vmatpush1.msra.mxu0 0.0
    %3803 = vmatprep.subr.mxu0 0.0
    %3804 = vmatpush1.msra.mxu0 0.0
    %3805 = vmatprep.subr.mxu0 0.0
    %3806 = vmatpush1.msra.mxu0 0.0
    %3807 = vmatprep.subr.mxu0 0.0
    %3808 = vmatpush1.msra.mxu0 0.0
    %3809 = vmatprep.subr.mxu0 0.0
    %3810 = vmatpush1.msra.mxu0 0.0
    %3811 = vmatprep.subr.mxu0 0.0
    %3812 = vmatpush1.msra.mxu0 0.0
    %3813 = vmatprep.subr.mxu0 0.0
    %3814 = vmatpush1.msra.mxu0 0.0
    %3815 = vmatprep.subr.mxu0 0.0
    %3816 = vmatpush1.msra.mxu0 0.0
    %3817 = vmatprep.subr.mxu0 0.0
    %3818 = vmatpush1.msra.mxu0 0.0
    %3819 = vmatprep.subr.mxu0 0.0
    %3820 = vmatpush1.msra.mxu0 0.0
    %3821 = vmatprep.subr.mxu0 0.0
    %3822 = vmatpush1.msra.mxu0 0.0
    %3823 = vmatprep.subr.mxu0 0.0
    %3824 = vmatpush1.msra.mxu0 0.0
    %3825 = vmatprep.subr.mxu0 0.0
    %3826 = vmatpush1.msra.mxu0 0.0
    %3827 = vmatprep.subr.mxu0 0.0
    %3828 = vmatpush1.msra.mxu0 0.0
    %3829 = vmatprep.subr.mxu0 0.0
    %3830 = vmatpush1.msra.mxu0 0.0
    %3831 = vmatprep.subr.mxu0 0.0
    %3832 = vmatpush1.msra.mxu0 0.0
    %3833 = vmatprep.subr.mxu0 0.0
    %3834 = vmatpush1.msra.mxu0 0.0
    %3835 = vmatprep.subr.mxu0 0.0
    %3836 = vmatpush1.msra.mxu0 0.0
    %3837 = vmatprep.subr.mxu0 0.0
    %3838 = vmatpush1.msra.mxu0 0.0
    %3839 = vmatprep.subr.mxu0 0.0
    %3840 = vmatpush1.msra.mxu0 0.0
    %3841 = vmatprep.subr.mxu0 0.0
    %3842 = vmatpush1.msra.mxu0 0.0
    %3843 = vmatprep.subr.mxu0 0.0
    %3844 = vmatpush1.msra.mxu0 0.0
    %3845 = vmatprep.mubr.f32.mxu0 0.0
    %v3846 = vand.u32 %v3599, 4294901760
    %v3847 = vsub.f32 %v3599, %v3846
    %3848 = vmatmul.mubr.f32.gmra.mrb[0].mxu0 %v3847
    %v3849 = vpop.f32.mrb[0].mxu0
    %v3850 = vadd.f32 %v3769, %v3849
    %v3851 = vpop.f32.mrb[0].mxu0
    %v3852 = vadd.f32 %v3771, %v3851
    %3853 = vdwg.mxu0
    %v3854 = vand.u32 %v55, 4294901760
    %3855 = vmatprep.subr.mxu0 %v3854
    %v3856 = vand.u32 %v54, 4294901760
    %3857 = vmatpush1.msra.mxu0 %v3856
    %v3858 = vand.u32 %v57, 4294901760
    %3859 = vmatprep.subr.mxu0 %v3858
    %v3860 = vand.u32 %v56, 4294901760
    %3861 = vmatpush1.msra.mxu0 %v3860
    %3862 = vmatprep.subr.mxu0 0.0
    %3863 = vmatpush1.msra.mxu0 0.0
    %3864 = vmatprep.subr.mxu0 0.0
    %3865 = vmatpush1.msra.mxu0 0.0
    %3866 = vmatprep.subr.mxu0 0.0
    %3867 = vmatpush1.msra.mxu0 0.0
    %3868 = vmatprep.subr.mxu0 0.0
    %3869 = vmatpush1.msra.mxu0 0.0
    %3870 = vmatprep.subr.mxu0 0.0
    %3871 = vmatpush1.msra.mxu0 0.0
    %3872 = vmatprep.subr.mxu0 0.0
    %3873 = vmatpush1.msra.mxu0 0.0
    %3874 = vmatprep.subr.mxu0 0.0
    %3875 = vmatpush1.msra.mxu0 0.0
    %3876 = vmatprep.subr.mxu0 0.0
    %3877 = vmatpush1.msra.mxu0 0.0
    %3878 = vmatprep.subr.mxu0 0.0
    %3879 = vmatpush1.msra.mxu0 0.0
    %3880 = vmatprep.subr.mxu0 0.0
    %3881 = vmatpush1.msra.mxu0 0.0
    %3882 = vmatprep.subr.mxu0 0.0
    %3883 = vmatpush1.msra.mxu0 0.0
    %3884 = vmatprep.subr.mxu0 0.0
    %3885 = vmatpush1.msra.mxu0 0.0
    %3886 = vmatprep.subr.mxu0 0.0
    %3887 = vmatpush1.msra.mxu0 0.0
    %3888 = vmatprep.subr.mxu0 0.0
    %3889 = vmatpush1.msra.mxu0 0.0
    %3890 = vmatprep.subr.mxu0 0.0
    %3891 = vmatpush1.msra.mxu0 0.0
    %3892 = vmatprep.subr.mxu0 0.0
    %3893 = vmatpush1.msra.mxu0 0.0
    %3894 = vmatprep.subr.mxu0 0.0
    %3895 = vmatpush1.msra.mxu0 0.0
    %3896 = vmatprep.subr.mxu0 0.0
    %3897 = vmatpush1.msra.mxu0 0.0
    %3898 = vmatprep.subr.mxu0 0.0
    %3899 = vmatpush1.msra.mxu0 0.0
    %3900 = vmatprep.subr.mxu0 0.0
    %3901 = vmatpush1.msra.mxu0 0.0
    %3902 = vmatprep.subr.mxu0 0.0
    %3903 = vmatpush1.msra.mxu0 0.0
    %3904 = vmatprep.subr.mxu0 0.0
    %3905 = vmatpush1.msra.mxu0 0.0
    %3906 = vmatprep.subr.mxu0 0.0
    %3907 = vmatpush1.msra.mxu0 0.0
    %3908 = vmatprep.subr.mxu0 0.0
    %3909 = vmatpush1.msra.mxu0 0.0
    %3910 = vmatprep.subr.mxu0 0.0
    %3911 = vmatpush1.msra.mxu0 0.0
    %3912 = vmatprep.subr.mxu0 0.0
    %3913 = vmatpush1.msra.mxu0 0.0
    %3914 = vmatprep.subr.mxu0 0.0
    %3915 = vmatpush1.msra.mxu0 0.0
    %3916 = vmatprep.subr.mxu0 0.0
    %3917 = vmatpush1.msra.mxu0 0.0
    %3918 = vmatprep.subr.mxu0 0.0
    %3919 = vmatpush1.msra.mxu0 0.0
    %3920 = vmatprep.subr.mxu0 0.0
    %3921 = vmatpush1.msra.mxu0 0.0
    %3922 = vmatprep.mubr.f32.mxu0 0.0
    %v3923 = vand.u32 %v3599, 4294901760
    %v3924 = vsub.f32 %v3599, %v3923
    %v3925 = vand.u32 %v3924, 4294901760
    %3926 = vmatmul.mubr.f32.gmra.mrb[0].mxu0 %v3925
    %v3927 = vpop.f32.mrb[0].mxu0
    %v3928 = vadd.f32 %v3850, %v3927
    %v3929 = vpop.f32.mrb[0].mxu0
    %v3930 = vadd.f32 %v3852, %v3929
    %3931 = vdwg.mxu0
    %v3932 = vand.u32 %v55, 4294901760
    %v3933 = vsub.f32 %v55, %v3932
    %v3934 = vand.u32 %v3933, 4294901760
    %3935 = vmatprep.subr.mxu0 %v3934
    %v3936 = vand.u32 %v54, 4294901760
    %v3937 = vsub.f32 %v54, %v3936
    %v3938 = vand.u32 %v3937, 4294901760
    %3939 = vmatpush1.msra.mxu0 %v3938
    %v3940 = vand.u32 %v57, 4294901760
    %v3941 = vsub.f32 %v57, %v3940
    %v3942 = vand.u32 %v3941, 4294901760
    %3943 = vmatprep.subr.mxu0 %v3942
    %v3944 = vand.u32 %v56, 4294901760
    %v3945 = vsub.f32 %v56, %v3944
    %v3946 = vand.u32 %v3945, 4294901760
    %3947 = vmatpush1.msra.mxu0 %v3946
    %3948 = vmatprep.subr.mxu0 0.0
    %3949 = vmatpush1.msra.mxu0 0.0
    %3950 = vmatprep.subr.mxu0 0.0
    %3951 = vmatpush1.msra.mxu0 0.0
    %3952 = vmatprep.subr.mxu0 0.0
    %3953 = vmatpush1.msra.mxu0 0.0
    %3954 = vmatprep.subr.mxu0 0.0
    %3955 = vmatpush1.msra.mxu0 0.0
    %3956 = vmatprep.subr.mxu0 0.0
    %3957 = vmatpush1.msra.mxu0 0.0
    %3958 = vmatprep.subr.mxu0 0.0
    %3959 = vmatpush1.msra.mxu0 0.0
    %3960 = vmatprep.subr.mxu0 0.0
    %3961 = vmatpush1.msra.mxu0 0.0
    %3962 = vmatprep.subr.mxu0 0.0
    %3963 = vmatpush1.msra.mxu0 0.0
    %3964 = vmatprep.subr.mxu0 0.0
    %3965 = vmatpush1.msra.mxu0 0.0
    %3966 = vmatprep.subr.mxu0 0.0
    %3967 = vmatpush1.msra.mxu0 0.0
    %3968 = vmatprep.subr.mxu0 0.0
    %3969 = vmatpush1.msra.mxu0 0.0
    %3970 = vmatprep.subr.mxu0 0.0
    %3971 = vmatpush1.msra.mxu0 0.0
    %3972 = vmatprep.subr.mxu0 0.0
    %3973 = vmatpush1.msra.mxu0 0.0
    %3974 = vmatprep.subr.mxu0 0.0
    %3975 = vmatpush1.msra.mxu0 0.0
    %3976 = vmatprep.subr.mxu0 0.0
    %3977 = vmatpush1.msra.mxu0 0.0
    %3978 = vmatprep.subr.mxu0 0.0
    %3979 = vmatpush1.msra.mxu0 0.0
    %3980 = vmatprep.subr.mxu0 0.0
    %3981 = vmatpush1.msra.mxu0 0.0
    %3982 = vmatprep.subr.mxu0 0.0
    %3983 = vmatpush1.msra.mxu0 0.0
    %3984 = vmatprep.subr.mxu0 0.0
    %3985 = vmatpush1.msra.mxu0 0.0
    %3986 = vmatprep.subr.mxu0 0.0
    %3987 = vmatpush1.msra.mxu0 0.0
    %3988 = vmatprep.subr.mxu0 0.0
    %3989 = vmatpush1.msra.mxu0 0.0
    %3990 = vmatprep.subr.mxu0 0.0
    %3991 = vmatpush1.msra.mxu0 0.0
    %3992 = vmatprep.subr.mxu0 0.0
    %3993 = vmatpush1.msra.mxu0 0.0
    %3994 = vmatprep.subr.mxu0 0.0
    %3995 = vmatpush1.msra.mxu0 0.0
    %3996 = vmatprep.subr.mxu0 0.0
    %3997 = vmatpush1.msra.mxu0 0.0
    %3998 = vmatprep.subr.mxu0 0.0
    %3999 = vmatpush1.msra.mxu0 0.0
    %4000 = vmatprep.subr.mxu0 0.0
    %4001 = vmatpush1.msra.mxu0 0.0
    %4002 = vmatprep.subr.mxu0 0.0
    %4003 = vmatpush1.msra.mxu0 0.0
    %4004 = vmatprep.subr.mxu0 0.0
    %4005 = vmatpush1.msra.mxu0 0.0
    %4006 = vmatprep.subr.mxu0 0.0
    %4007 = vmatpush1.msra.mxu0 0.0
    %4008 = vmatprep.mubr.f32.mxu0 0.0
    %v4009 = vand.u32 %v3599, 4294901760
    %4010 = vmatmul.mubr.f32.gmra.mrb[0].mxu0 %v4009
    %v4011 = vpop.f32.mrb[0].mxu0
    %v4012 = vadd.f32 %v3928, %v4011
    %v4013 = vpop.f32.mrb[0].mxu0
    %v4014 = vadd.f32 %v3930, %v4013
    %4015 = vdwg.mxu0
    %v4016 = vand.u32 %v55, 4294901760
    %4017 = vmatprep.subr.mxu0 %v4016
    %v4018 = vand.u32 %v54, 4294901760
    %4019 = vmatpush1.msra.mxu0 %v4018
    %v4020 = vand.u32 %v57, 4294901760
    %4021 = vmatprep.subr.mxu0 %v4020
    %v4022 = vand.u32 %v56, 4294901760
    %4023 = vmatpush1.msra.mxu0 %v4022
    %4024 = vmatprep.subr.mxu0 0.0
    %4025 = vmatpush1.msra.mxu0 0.0
    %4026 = vmatprep.subr.mxu0 0.0
    %4027 = vmatpush1.msra.mxu0 0.0
    %4028 = vmatprep.subr.mxu0 0.0
    %4029 = vmatpush1.msra.mxu0 0.0
    %4030 = vmatprep.subr.mxu0 0.0
    %4031 = vmatpush1.msra.mxu0 0.0
    %4032 = vmatprep.subr.mxu0 0.0
    %4033 = vmatpush1.msra.mxu0 0.0
    %4034 = vmatprep.subr.mxu0 0.0
    %4035 = vmatpush1.msra.mxu0 0.0
    %4036 = vmatprep.subr.mxu0 0.0
    %4037 = vmatpush1.msra.mxu0 0.0
    %4038 = vmatprep.subr.mxu0 0.0
    %4039 = vmatpush1.msra.mxu0 0.0
    %4040 = vmatprep.subr.mxu0 0.0
    %4041 = vmatpush1.msra.mxu0 0.0
    %4042 = vmatprep.subr.mxu0 0.0
    %4043 = vmatpush1.msra.mxu0 0.0
    %4044 = vmatprep.subr.mxu0 0.0
    %4045 = vmatpush1.msra.mxu0 0.0
    %4046 = vmatprep.subr.mxu0 0.0
    %4047 = vmatpush1.msra.mxu0 0.0
    %4048 = vmatprep.subr.mxu0 0.0
    %4049 = vmatpush1.msra.mxu0 0.0
    %4050 = vmatprep.subr.mxu0 0.0
    %4051 = vmatpush1.msra.mxu0 0.0
    %4052 = vmatprep.subr.mxu0 0.0
    %4053 = vmatpush1.msra.mxu0 0.0
    %4054 = vmatprep.subr.mxu0 0.0
    %4055 = vmatpush1.msra.mxu0 0.0
    %4056 = vmatprep.subr.mxu0 0.0
    %4057 = vmatpush1.msra.mxu0 0.0
    %4058 = vmatprep.subr.mxu0 0.0
    %4059 = vmatpush1.msra.mxu0 0.0
    %4060 = vmatprep.subr.mxu0 0.0
    %4061 = vmatpush1.msra.mxu0 0.0
    %4062 = vmatprep.subr.mxu0 0.0
    %4063 = vmatpush1.msra.mxu0 0.0
    %4064 = vmatprep.subr.mxu0 0.0
    %4065 = vmatpush1.msra.mxu0 0.0
    %4066 = vmatprep.subr.mxu0 0.0
    %4067 = vmatpush1.msra.mxu0 0.0
    %4068 = vmatprep.subr.mxu0 0.0
    %4069 = vmatpush1.msra.mxu0 0.0
    %4070 = vmatprep.subr.mxu0 0.0
    %4071 = vmatpush1.msra.mxu0 0.0
    %4072 = vmatprep.subr.mxu0 0.0
    %4073 = vmatpush1.msra.mxu0 0.0
    %4074 = vmatprep.subr.mxu0 0.0
    %4075 = vmatpush1.msra.mxu0 0.0
    %4076 = vmatprep.subr.mxu0 0.0
    %4077 = vmatpush1.msra.mxu0 0.0
    %4078 = vmatprep.subr.mxu0 0.0
    %4079 = vmatpush1.msra.mxu0 0.0
    %4080 = vmatprep.subr.mxu0 0.0
    %4081 = vmatpush1.msra.mxu0 0.0
    %4082 = vmatprep.subr.mxu0 0.0
    %4083 = vmatpush1.msra.mxu0 0.0
    %4084 = vmatprep.mubr.f32.mxu0 0.0
    %v4085 = vand.u32 %v3599, 4294901760
    %4086 = vmatmul.mubr.f32.gmra.mrb[0].mxu0 %v4085
    %v4087 = vpop.f32.mrb[0].mxu0
    %v4088 = vadd.f32 %v4012, %v4087
    %v4089 = vpop.f32.mrb[0].mxu0
    %v4090 = vadd.f32 %v4014, %v4089
    %4091 = vdwg.mxu0
    %v4092 = vsub.f32 %v4088, %v3594
    %v4093 = vsub.f32 %v4090, %v3596
    %v4094 = vand.u32 2147483647, %v4092
    %v4095 = vand.u32 2147483647, %v4093
    %v4096 = vadd.f32 %v4094, %v4095
    %4097 = vadd.xlane.f32.xlu0 %v4096
    %v4098 = vpop.xlane.xlu0 %4097
    %v4099 = vsub.f32 0.0, %v4098
    %v4100 = vadd.f32 %v2077, %v4099
    %v4101 = vmax.f32 %v4100, 0.0
    %v4102 = vadd.f32 %v3091, %v4101
    %4103 = vset.pattern.permute.xlu0 3
    %4104 = vperm.xlu0 %4103, %v38
    %v4105 = vpop.permute.xlu0 %4104
    %vm4106 = vcmp.eq.s32.totalorder %v59, %v4105
    %v4107 = vsel %vm4106, 1, 0
    %v4108 = vcvt.s32.f32 %v4107
    %4109 = vset.pattern.permute.xlu0 3
    %4110 = vperm.xlu0 %4109, %v39
    %v4111 = vpop.permute.xlu0 %4110
    %vm4112 = vcmp.eq.s32.totalorder %v59, %v4111
    %v4113 = vsel %vm4112, 1, 0
    %v4114 = vcvt.s32.f32 %v4113
    %v4116 = vsel %vm66, %v4114, 0
    %v4118 = vand.u32 %v55, 4294901760
    %4119 = vmatprep.subr.mxu0 %v4118
    %v4120 = vand.u32 %v54, 4294901760
    %4121 = vmatpush1.msra.mxu0 %v4120
    %v4122 = vand.u32 %v57, 4294901760
    %4123 = vmatprep.subr.mxu0 %v4122
    %v4124 = vand.u32 %v56, 4294901760
    %4125 = vmatpush1.msra.mxu0 %v4124
    %4126 = vmatprep.subr.mxu0 0.0
    %4127 = vmatpush1.msra.mxu0 0.0
    %4128 = vmatprep.subr.mxu0 0.0
    %4129 = vmatpush1.msra.mxu0 0.0
    %4130 = vmatprep.subr.mxu0 0.0
    %4131 = vmatpush1.msra.mxu0 0.0
    %4132 = vmatprep.subr.mxu0 0.0
    %4133 = vmatpush1.msra.mxu0 0.0
    %4134 = vmatprep.subr.mxu0 0.0
    %4135 = vmatpush1.msra.mxu0 0.0
    %4136 = vmatprep.subr.mxu0 0.0
    %4137 = vmatpush1.msra.mxu0 0.0
    %4138 = vmatprep.subr.mxu0 0.0
    %4139 = vmatpush1.msra.mxu0 0.0
    %4140 = vmatprep.subr.mxu0 0.0
    %4141 = vmatpush1.msra.mxu0 0.0
    %4142 = vmatprep.subr.mxu0 0.0
    %4143 = vmatpush1.msra.mxu0 0.0
    %4144 = vmatprep.subr.mxu0 0.0
    %4145 = vmatpush1.msra.mxu0 0.0
    %4146 = vmatprep.subr.mxu0 0.0
    %4147 = vmatpush1.msra.mxu0 0.0
    %4148 = vmatprep.subr.mxu0 0.0
    %4149 = vmatpush1.msra.mxu0 0.0
    %4150 = vmatprep.subr.mxu0 0.0
    %4151 = vmatpush1.msra.mxu0 0.0
    %4152 = vmatprep.subr.mxu0 0.0
    %4153 = vmatpush1.msra.mxu0 0.0
    %4154 = vmatprep.subr.mxu0 0.0
    %4155 = vmatpush1.msra.mxu0 0.0
    %4156 = vmatprep.subr.mxu0 0.0
    %4157 = vmatpush1.msra.mxu0 0.0
    %4158 = vmatprep.subr.mxu0 0.0
    %4159 = vmatpush1.msra.mxu0 0.0
    %4160 = vmatprep.subr.mxu0 0.0
    %4161 = vmatpush1.msra.mxu0 0.0
    %4162 = vmatprep.subr.mxu0 0.0
    %4163 = vmatpush1.msra.mxu0 0.0
    %4164 = vmatprep.subr.mxu0 0.0
    %4165 = vmatpush1.msra.mxu0 0.0
    %4166 = vmatprep.subr.mxu0 0.0
    %4167 = vmatpush1.msra.mxu0 0.0
    %4168 = vmatprep.subr.mxu0 0.0
    %4169 = vmatpush1.msra.mxu0 0.0
    %4170 = vmatprep.subr.mxu0 0.0
    %4171 = vmatpush1.msra.mxu0 0.0
    %4172 = vmatprep.subr.mxu0 0.0
    %4173 = vmatpush1.msra.mxu0 0.0
    %4174 = vmatprep.subr.mxu0 0.0
    %4175 = vmatpush1.msra.mxu0 0.0
    %4176 = vmatprep.subr.mxu0 0.0
    %4177 = vmatpush1.msra.mxu0 0.0
    %4178 = vmatprep.subr.mxu0 0.0
    %4179 = vmatpush1.msra.mxu0 0.0
    %4180 = vmatprep.subr.mxu0 0.0
    %4181 = vmatpush1.msra.mxu0 0.0
    %4182 = vmatprep.subr.mxu0 0.0
    %4183 = vmatpush1.msra.mxu0 0.0
    %4184 = vmatprep.subr.mxu0 0.0
    %4185 = vmatpush1.msra.mxu0 0.0
    %4186 = vmatprep.mubr.f32.mxu0 0.0
    %v4187 = vand.u32 %v4116, 4294901760
    %v4188 = vsub.f32 %v4116, %v4187
    %v4189 = vand.u32 %v4188, 4294901760
    %v4190 = vsub.f32 %v4188, %v4189
    %v4191 = vand.u32 %v4190, 4294901760
    %4192 = vmatmul.mubr.f32.gmra.mrb[0].mxu0 %v4191
    %v4193 = vpop.f32.mrb[0].mxu0
    %v4194 = vadd.f32 0.0, %v4193
    %v4195 = vpop.f32.mrb[0].mxu0
    %v4196 = vadd.f32 0.0, %v4195
    %4197 = vdwg.mxu0
    %v4198 = vand.u32 %v55, 4294901760
    %v4199 = vsub.f32 %v55, %v4198
    %v4200 = vand.u32 %v4199, 4294901760
    %v4201 = vsub.f32 %v4199, %v4200
    %v4202 = vand.u32 %v4201, 4294901760
    %4203 = vmatprep.subr.mxu0 %v4202
    %v4204 = vand.u32 %v54, 4294901760
    %v4205 = vsub.f32 %v54, %v4204
    %v4206 = vand.u32 %v4205, 4294901760
    %v4207 = vsub.f32 %v4205, %v4206
    %v4208 = vand.u32 %v4207, 4294901760
    %4209 = vmatpush1.msra.mxu0 %v4208
    %v4210 = vand.u32 %v57, 4294901760
    %v4211 = vsub.f32 %v57, %v4210
    %v4212 = vand.u32 %v4211, 4294901760
    %v4213 = vsub.f32 %v4211, %v4212
    %v4214 = vand.u32 %v4213, 4294901760
    %4215 = vmatprep.subr.mxu0 %v4214
    %v4216 = vand.u32 %v56, 4294901760
    %v4217 = vsub.f32 %v56, %v4216
    %v4218 = vand.u32 %v4217, 4294901760
    %v4219 = vsub.f32 %v4217, %v4218
    %v4220 = vand.u32 %v4219, 4294901760
    %4221 = vmatpush1.msra.mxu0 %v4220
    %4222 = vmatprep.subr.mxu0 0.0
    %4223 = vmatpush1.msra.mxu0 0.0
    %4224 = vmatprep.subr.mxu0 0.0
    %4225 = vmatpush1.msra.mxu0 0.0
    %4226 = vmatprep.subr.mxu0 0.0
    %4227 = vmatpush1.msra.mxu0 0.0
    %4228 = vmatprep.subr.mxu0 0.0
    %4229 = vmatpush1.msra.mxu0 0.0
    %4230 = vmatprep.subr.mxu0 0.0
    %4231 = vmatpush1.msra.mxu0 0.0
    %4232 = vmatprep.subr.mxu0 0.0
    %4233 = vmatpush1.msra.mxu0 0.0
    %4234 = vmatprep.subr.mxu0 0.0
    %4235 = vmatpush1.msra.mxu0 0.0
    %4236 = vmatprep.subr.mxu0 0.0
    %4237 = vmatpush1.msra.mxu0 0.0
    %4238 = vmatprep.subr.mxu0 0.0
    %4239 = vmatpush1.msra.mxu0 0.0
    %4240 = vmatprep.subr.mxu0 0.0
    %4241 = vmatpush1.msra.mxu0 0.0
    %4242 = vmatprep.subr.mxu0 0.0
    %4243 = vmatpush1.msra.mxu0 0.0
    %4244 = vmatprep.subr.mxu0 0.0
    %4245 = vmatpush1.msra.mxu0 0.0
    %4246 = vmatprep.subr.mxu0 0.0
    %4247 = vmatpush1.msra.mxu0 0.0
    %4248 = vmatprep.subr.mxu0 0.0
    %4249 = vmatpush1.msra.mxu0 0.0
    %4250 = vmatprep.subr.mxu0 0.0
    %4251 = vmatpush1.msra.mxu0 0.0
    %4252 = vmatprep.subr.mxu0 0.0
    %4253 = vmatpush1.msra.mxu0 0.0
    %4254 = vmatprep.subr.mxu0 0.0
    %4255 = vmatpush1.msra.mxu0 0.0
    %4256 = vmatprep.subr.mxu0 0.0
    %4257 = vmatpush1.msra.mxu0 0.0
    %4258 = vmatprep.subr.mxu0 0.0
    %4259 = vmatpush1.msra.mxu0 0.0
    %4260 = vmatprep.subr.mxu0 0.0
    %4261 = vmatpush1.msra.mxu0 0.0
    %4262 = vmatprep.subr.mxu0 0.0
    %4263 = vmatpush1.msra.mxu0 0.0
    %4264 = vmatprep.subr.mxu0 0.0
    %4265 = vmatpush1.msra.mxu0 0.0
    %4266 = vmatprep.subr.mxu0 0.0
    %4267 = vmatpush1.msra.mxu0 0.0
    %4268 = vmatprep.subr.mxu0 0.0
    %4269 = vmatpush1.msra.mxu0 0.0
    %4270 = vmatprep.subr.mxu0 0.0
    %4271 = vmatpush1.msra.mxu0 0.0
    %4272 = vmatprep.subr.mxu0 0.0
    %4273 = vmatpush1.msra.mxu0 0.0
    %4274 = vmatprep.subr.mxu0 0.0
    %4275 = vmatpush1.msra.mxu0 0.0
    %4276 = vmatprep.subr.mxu0 0.0
    %4277 = vmatpush1.msra.mxu0 0.0
    %4278 = vmatprep.subr.mxu0 0.0
    %4279 = vmatpush1.msra.mxu0 0.0
    %4280 = vmatprep.subr.mxu0 0.0
    %4281 = vmatpush1.msra.mxu0 0.0
    %4282 = vmatprep.mubr.f32.mxu0 0.0
    %v4283 = vand.u32 %v4116, 4294901760
    %4284 = vmatmul.mubr.f32.gmra.mrb[0].mxu0 %v4283
    %v4285 = vpop.f32.mrb[0].mxu0
    %v4286 = vadd.f32 %v4194, %v4285
    %v4287 = vpop.f32.mrb[0].mxu0
    %v4288 = vadd.f32 %v4196, %v4287
    %4289 = vdwg.mxu0
    %v4290 = vand.u32 %v55, 4294901760
    %v4291 = vsub.f32 %v55, %v4290
    %4292 = vmatprep.subr.mxu0 %v4291
    %v4293 = vand.u32 %v54, 4294901760
    %v4294 = vsub.f32 %v54, %v4293
    %4295 = vmatpush1.msra.mxu0 %v4294
    %v4296 = vand.u32 %v57, 4294901760
    %v4297 = vsub.f32 %v57, %v4296
    %4298 = vmatprep.subr.mxu0 %v4297
    %v4299 = vand.u32 %v56, 4294901760
    %v4300 = vsub.f32 %v56, %v4299
    %4301 = vmatpush1.msra.mxu0 %v4300
    %4302 = vmatprep.subr.mxu0 0.0
    %4303 = vmatpush1.msra.mxu0 0.0
    %4304 = vmatprep.subr.mxu0 0.0
    %4305 = vmatpush1.msra.mxu0 0.0
    %4306 = vmatprep.subr.mxu0 0.0
    %4307 = vmatpush1.msra.mxu0 0.0
    %4308 = vmatprep.subr.mxu0 0.0
    %4309 = vmatpush1.msra.mxu0 0.0
    %4310 = vmatprep.subr.mxu0 0.0
    %4311 = vmatpush1.msra.mxu0 0.0
    %4312 = vmatprep.subr.mxu0 0.0
    %4313 = vmatpush1.msra.mxu0 0.0
    %4314 = vmatprep.subr.mxu0 0.0
    %4315 = vmatpush1.msra.mxu0 0.0
    %4316 = vmatprep.subr.mxu0 0.0
    %4317 = vmatpush1.msra.mxu0 0.0
    %4318 = vmatprep.subr.mxu0 0.0
    %4319 = vmatpush1.msra.mxu0 0.0
    %4320 = vmatprep.subr.mxu0 0.0
    %4321 = vmatpush1.msra.mxu0 0.0
    %4322 = vmatprep.subr.mxu0 0.0
    %4323 = vmatpush1.msra.mxu0 0.0
    %4324 = vmatprep.subr.mxu0 0.0
    %4325 = vmatpush1.msra.mxu0 0.0
    %4326 = vmatprep.subr.mxu0 0.0
    %4327 = vmatpush1.msra.mxu0 0.0
    %4328 = vmatprep.subr.mxu0 0.0
    %4329 = vmatpush1.msra.mxu0 0.0
    %4330 = vmatprep.subr.mxu0 0.0
    %4331 = vmatpush1.msra.mxu0 0.0
    %4332 = vmatprep.subr.mxu0 0.0
    %4333 = vmatpush1.msra.mxu0 0.0
    %4334 = vmatprep.subr.mxu0 0.0
    %4335 = vmatpush1.msra.mxu0 0.0
    %4336 = vmatprep.subr.mxu0 0.0
    %4337 = vmatpush1.msra.mxu0 0.0
    %4338 = vmatprep.subr.mxu0 0.0
    %4339 = vmatpush1.msra.mxu0 0.0
    %4340 = vmatprep.subr.mxu0 0.0
    %4341 = vmatpush1.msra.mxu0 0.0
    %4342 = vmatprep.subr.mxu0 0.0
    %4343 = vmatpush1.msra.mxu0 0.0
    %4344 = vmatprep.subr.mxu0 0.0
    %4345 = vmatpush1.msra.mxu0 0.0
    %4346 = vmatprep.subr.mxu0 0.0
    %4347 = vmatpush1.msra.mxu0 0.0
    %4348 = vmatprep.subr.mxu0 0.0
    %4349 = vmatpush1.msra.mxu0 0.0
    %4350 = vmatprep.subr.mxu0 0.0
    %4351 = vmatpush1.msra.mxu0 0.0
    %4352 = vmatprep.subr.mxu0 0.0
    %4353 = vmatpush1.msra.mxu0 0.0
    %4354 = vmatprep.subr.mxu0 0.0
    %4355 = vmatpush1.msra.mxu0 0.0
    %4356 = vmatprep.subr.mxu0 0.0
    %4357 = vmatpush1.msra.mxu0 0.0
    %4358 = vmatprep.subr.mxu0 0.0
    %4359 = vmatpush1.msra.mxu0 0.0
    %4360 = vmatprep.subr.mxu0 0.0
    %4361 = vmatpush1.msra.mxu0 0.0
    %4362 = vmatprep.mubr.f32.mxu0 0.0
    %v4363 = vand.u32 %v4116, 4294901760
    %v4364 = vsub.f32 %v4116, %v4363
    %4365 = vmatmul.mubr.f32.gmra.mrb[0].mxu0 %v4364
    %v4366 = vpop.f32.mrb[0].mxu0
    %v4367 = vadd.f32 %v4286, %v4366
    %v4368 = vpop.f32.mrb[0].mxu0
    %v4369 = vadd.f32 %v4288, %v4368
    %4370 = vdwg.mxu0
    %v4371 = vand.u32 %v55, 4294901760
    %4372 = vmatprep.subr.mxu0 %v4371
    %v4373 = vand.u32 %v54, 4294901760
    %4374 = vmatpush1.msra.mxu0 %v4373
    %v4375 = vand.u32 %v57, 4294901760
    %4376 = vmatprep.subr.mxu0 %v4375
    %v4377 = vand.u32 %v56, 4294901760
    %4378 = vmatpush1.msra.mxu0 %v4377
    %4379 = vmatprep.subr.mxu0 0.0
    %4380 = vmatpush1.msra.mxu0 0.0
    %4381 = vmatprep.subr.mxu0 0.0
    %4382 = vmatpush1.msra.mxu0 0.0
    %4383 = vmatprep.subr.mxu0 0.0
    %4384 = vmatpush1.msra.mxu0 0.0
    %4385 = vmatprep.subr.mxu0 0.0
    %4386 = vmatpush1.msra.mxu0 0.0
    %4387 = vmatprep.subr.mxu0 0.0
    %4388 = vmatpush1.msra.mxu0 0.0
    %4389 = vmatprep.subr.mxu0 0.0
    %4390 = vmatpush1.msra.mxu0 0.0
    %4391 = vmatprep.subr.mxu0 0.0
    %4392 = vmatpush1.msra.mxu0 0.0
    %4393 = vmatprep.subr.mxu0 0.0
    %4394 = vmatpush1.msra.mxu0 0.0
    %4395 = vmatprep.subr.mxu0 0.0
    %4396 = vmatpush1.msra.mxu0 0.0
    %4397 = vmatprep.subr.mxu0 0.0
    %4398 = vmatpush1.msra.mxu0 0.0
    %4399 = vmatprep.subr.mxu0 0.0
    %4400 = vmatpush1.msra.mxu0 0.0
    %4401 = vmatprep.subr.mxu0 0.0
    %4402 = vmatpush1.msra.mxu0 0.0
    %4403 = vmatprep.subr.mxu0 0.0
    %4404 = vmatpush1.msra.mxu0 0.0
    %4405 = vmatprep.subr.mxu0 0.0
    %4406 = vmatpush1.msra.mxu0 0.0
    %4407 = vmatprep.subr.mxu0 0.0
    %4408 = vmatpush1.msra.mxu0 0.0
    %4409 = vmatprep.subr.mxu0 0.0
    %4410 = vmatpush1.msra.mxu0 0.0
    %4411 = vmatprep.subr.mxu0 0.0
    %4412 = vmatpush1.msra.mxu0 0.0
    %4413 = vmatprep.subr.mxu0 0.0
    %4414 = vmatpush1.msra.mxu0 0.0
    %4415 = vmatprep.subr.mxu0 0.0
    %4416 = vmatpush1.msra.mxu0 0.0
    %4417 = vmatprep.subr.mxu0 0.0
    %4418 = vmatpush1.msra.mxu0 0.0
    %4419 = vmatprep.subr.mxu0 0.0
    %4420 = vmatpush1.msra.mxu0 0.0
    %4421 = vmatprep.subr.mxu0 0.0
    %4422 = vmatpush1.msra.mxu0 0.0
    %4423 = vmatprep.subr.mxu0 0.0
    %4424 = vmatpush1.msra.mxu0 0.0
    %4425 = vmatprep.subr.mxu0 0.0
    %4426 = vmatpush1.msra.mxu0 0.0
    %4427 = vmatprep.subr.mxu0 0.0
    %4428 = vmatpush1.msra.mxu0 0.0
    %4429 = vmatprep.subr.mxu0 0.0
    %4430 = vmatpush1.msra.mxu0 0.0
    %4431 = vmatprep.subr.mxu0 0.0
    %4432 = vmatpush1.msra.mxu0 0.0
    %4433 = vmatprep.subr.mxu0 0.0
    %4434 = vmatpush1.msra.mxu0 0.0
    %4435 = vmatprep.subr.mxu0 0.0
    %4436 = vmatpush1.msra.mxu0 0.0
    %4437 = vmatprep.subr.mxu0 0.0
    %4438 = vmatpush1.msra.mxu0 0.0
    %4439 = vmatprep.mubr.f32.mxu0 0.0
    %v4440 = vand.u32 %v4116, 4294901760
    %v4441 = vsub.f32 %v4116, %v4440
    %v4442 = vand.u32 %v4441, 4294901760
    %4443 = vmatmul.mubr.f32.gmra.mrb[0].mxu0 %v4442
    %v4444 = vpop.f32.mrb[0].mxu0
    %v4445 = vadd.f32 %v4367, %v4444
    %v4446 = vpop.f32.mrb[0].mxu0
    %v4447 = vadd.f32 %v4369, %v4446
    %4448 = vdwg.mxu0
    %v4449 = vand.u32 %v55, 4294901760
    %v4450 = vsub.f32 %v55, %v4449
    %v4451 = vand.u32 %v4450, 4294901760
    %4452 = vmatprep.subr.mxu0 %v4451
    %v4453 = vand.u32 %v54, 4294901760
    %v4454 = vsub.f32 %v54, %v4453
    %v4455 = vand.u32 %v4454, 4294901760
    %4456 = vmatpush1.msra.mxu0 %v4455
    %v4457 = vand.u32 %v57, 4294901760
    %v4458 = vsub.f32 %v57, %v4457
    %v4459 = vand.u32 %v4458, 4294901760
    %4460 = vmatprep.subr.mxu0 %v4459
    %v4461 = vand.u32 %v56, 4294901760
    %v4462 = vsub.f32 %v56, %v4461
    %v4463 = vand.u32 %v4462, 4294901760
    %4464 = vmatpush1.msra.mxu0 %v4463
    %4465 = vmatprep.subr.mxu0 0.0
    %4466 = vmatpush1.msra.mxu0 0.0
    %4467 = vmatprep.subr.mxu0 0.0
    %4468 = vmatpush1.msra.mxu0 0.0
    %4469 = vmatprep.subr.mxu0 0.0
    %4470 = vmatpush1.msra.mxu0 0.0
    %4471 = vmatprep.subr.mxu0 0.0
    %4472 = vmatpush1.msra.mxu0 0.0
    %4473 = vmatprep.subr.mxu0 0.0
    %4474 = vmatpush1.msra.mxu0 0.0
    %4475 = vmatprep.subr.mxu0 0.0
    %4476 = vmatpush1.msra.mxu0 0.0
    %4477 = vmatprep.subr.mxu0 0.0
    %4478 = vmatpush1.msra.mxu0 0.0
    %4479 = vmatprep.subr.mxu0 0.0
    %4480 = vmatpush1.msra.mxu0 0.0
    %4481 = vmatprep.subr.mxu0 0.0
    %4482 = vmatpush1.msra.mxu0 0.0
    %4483 = vmatprep.subr.mxu0 0.0
    %4484 = vmatpush1.msra.mxu0 0.0
    %4485 = vmatprep.subr.mxu0 0.0
    %4486 = vmatpush1.msra.mxu0 0.0
    %4487 = vmatprep.subr.mxu0 0.0
    %4488 = vmatpush1.msra.mxu0 0.0
    %4489 = vmatprep.subr.mxu0 0.0
    %4490 = vmatpush1.msra.mxu0 0.0
    %4491 = vmatprep.subr.mxu0 0.0
    %4492 = vmatpush1.msra.mxu0 0.0
    %4493 = vmatprep.subr.mxu0 0.0
    %4494 = vmatpush1.msra.mxu0 0.0
    %4495 = vmatprep.subr.mxu0 0.0
    %4496 = vmatpush1.msra.mxu0 0.0
    %4497 = vmatprep.subr.mxu0 0.0
    %4498 = vmatpush1.msra.mxu0 0.0
    %4499 = vmatprep.subr.mxu0 0.0
    %4500 = vmatpush1.msra.mxu0 0.0
    %4501 = vmatprep.subr.mxu0 0.0
    %4502 = vmatpush1.msra.mxu0 0.0
    %4503 = vmatprep.subr.mxu0 0.0
    %4504 = vmatpush1.msra.mxu0 0.0
    %4505 = vmatprep.subr.mxu0 0.0
    %4506 = vmatpush1.msra.mxu0 0.0
    %4507 = vmatprep.subr.mxu0 0.0
    %4508 = vmatpush1.msra.mxu0 0.0
    %4509 = vmatprep.subr.mxu0 0.0
    %4510 = vmatpush1.msra.mxu0 0.0
    %4511 = vmatprep.subr.mxu0 0.0
    %4512 = vmatpush1.msra.mxu0 0.0
    %4513 = vmatprep.subr.mxu0 0.0
    %4514 = vmatpush1.msra.mxu0 0.0
    %4515 = vmatprep.subr.mxu0 0.0
    %4516 = vmatpush1.msra.mxu0 0.0
    %4517 = vmatprep.subr.mxu0 0.0
    %4518 = vmatpush1.msra.mxu0 0.0
    %4519 = vmatprep.subr.mxu0 0.0
    %4520 = vmatpush1.msra.mxu0 0.0
    %4521 = vmatprep.subr.mxu0 0.0
    %4522 = vmatpush1.msra.mxu0 0.0
    %4523 = vmatprep.subr.mxu0 0.0
    %4524 = vmatpush1.msra.mxu0 0.0
    %4525 = vmatprep.mubr.f32.mxu0 0.0
    %v4526 = vand.u32 %v4116, 4294901760
    %4527 = vmatmul.mubr.f32.gmra.mrb[0].mxu0 %v4526
    %v4528 = vpop.f32.mrb[0].mxu0
    %v4529 = vadd.f32 %v4445, %v4528
    %v4530 = vpop.f32.mrb[0].mxu0
    %v4531 = vadd.f32 %v4447, %v4530
    %4532 = vdwg.mxu0
    %v4533 = vand.u32 %v55, 4294901760
    %4534 = vmatprep.subr.mxu0 %v4533
    %v4535 = vand.u32 %v54, 4294901760
    %4536 = vmatpush1.msra.mxu0 %v4535
    %v4537 = vand.u32 %v57, 4294901760
    %4538 = vmatprep.subr.mxu0 %v4537
    %v4539 = vand.u32 %v56, 4294901760
    %4540 = vmatpush1.msra.mxu0 %v4539
    %4541 = vmatprep.subr.mxu0 0.0
    %4542 = vmatpush1.msra.mxu0 0.0
    %4543 = vmatprep.subr.mxu0 0.0
    %4544 = vmatpush1.msra.mxu0 0.0
    %4545 = vmatprep.subr.mxu0 0.0
    %4546 = vmatpush1.msra.mxu0 0.0
    %4547 = vmatprep.subr.mxu0 0.0
    %4548 = vmatpush1.msra.mxu0 0.0
    %4549 = vmatprep.subr.mxu0 0.0
    %4550 = vmatpush1.msra.mxu0 0.0
    %4551 = vmatprep.subr.mxu0 0.0
    %4552 = vmatpush1.msra.mxu0 0.0
    %4553 = vmatprep.subr.mxu0 0.0
    %4554 = vmatpush1.msra.mxu0 0.0
    %4555 = vmatprep.subr.mxu0 0.0
    %4556 = vmatpush1.msra.mxu0 0.0
    %4557 = vmatprep.subr.mxu0 0.0
    %4558 = vmatpush1.msra.mxu0 0.0
    %4559 = vmatprep.subr.mxu0 0.0
    %4560 = vmatpush1.msra.mxu0 0.0
    %4561 = vmatprep.subr.mxu0 0.0
    %4562 = vmatpush1.msra.mxu0 0.0
    %4563 = vmatprep.subr.mxu0 0.0
    %4564 = vmatpush1.msra.mxu0 0.0
    %4565 = vmatprep.subr.mxu0 0.0
    %4566 = vmatpush1.msra.mxu0 0.0
    %4567 = vmatprep.subr.mxu0 0.0
    %4568 = vmatpush1.msra.mxu0 0.0
    %4569 = vmatprep.subr.mxu0 0.0
    %4570 = vmatpush1.msra.mxu0 0.0
    %4571 = vmatprep.subr.mxu0 0.0
    %4572 = vmatpush1.msra.mxu0 0.0
    %4573 = vmatprep.subr.mxu0 0.0
    %4574 = vmatpush1.msra.mxu0 0.0
    %4575 = vmatprep.subr.mxu0 0.0
    %4576 = vmatpush1.msra.mxu0 0.0
    %4577 = vmatprep.subr.mxu0 0.0
    %4578 = vmatpush1.msra.mxu0 0.0
    %4579 = vmatprep.subr.mxu0 0.0
    %4580 = vmatpush1.msra.mxu0 0.0
    %4581 = vmatprep.subr.mxu0 0.0
    %4582 = vmatpush1.msra.mxu0 0.0
    %4583 = vmatprep.subr.mxu0 0.0
    %4584 = vmatpush1.msra.mxu0 0.0
    %4585 = vmatprep.subr.mxu0 0.0
    %4586 = vmatpush1.msra.mxu0 0.0
    %4587 = vmatprep.subr.mxu0 0.0
    %4588 = vmatpush1.msra.mxu0 0.0
    %4589 = vmatprep.subr.mxu0 0.0
    %4590 = vmatpush1.msra.mxu0 0.0
    %4591 = vmatprep.subr.mxu0 0.0
    %4592 = vmatpush1.msra.mxu0 0.0
    %4593 = vmatprep.subr.mxu0 0.0
    %4594 = vmatpush1.msra.mxu0 0.0
    %4595 = vmatprep.subr.mxu0 0.0
    %4596 = vmatpush1.msra.mxu0 0.0
    %4597 = vmatprep.subr.mxu0 0.0
    %4598 = vmatpush1.msra.mxu0 0.0
    %4599 = vmatprep.subr.mxu0 0.0
    %4600 = vmatpush1.msra.mxu0 0.0
    %4601 = vmatprep.mubr.f32.mxu0 0.0
    %v4602 = vand.u32 %v4116, 4294901760
    %4603 = vmatmul.mubr.f32.gmra.mrb[0].mxu0 %v4602
    %v4604 = vpop.f32.mrb[0].mxu0
    %v4605 = vadd.f32 %v4529, %v4604
    %v4606 = vpop.f32.mrb[0].mxu0
    %v4607 = vadd.f32 %v4531, %v4606
    %4608 = vdwg.mxu0
    %v4610 = vsel %vm66, %v4108, 0
    %v4612 = vand.u32 %v55, 4294901760
    %4613 = vmatprep.subr.mxu0 %v4612
    %v4614 = vand.u32 %v54, 4294901760
    %4615 = vmatpush1.msra.mxu0 %v4614
    %v4616 = vand.u32 %v57, 4294901760
    %4617 = vmatprep.subr.mxu0 %v4616
    %v4618 = vand.u32 %v56, 4294901760
    %4619 = vmatpush1.msra.mxu0 %v4618
    %4620 = vmatprep.subr.mxu0 0.0
    %4621 = vmatpush1.msra.mxu0 0.0
    %4622 = vmatprep.subr.mxu0 0.0
    %4623 = vmatpush1.msra.mxu0 0.0
    %4624 = vmatprep.subr.mxu0 0.0
    %4625 = vmatpush1.msra.mxu0 0.0
    %4626 = vmatprep.subr.mxu0 0.0
    %4627 = vmatpush1.msra.mxu0 0.0
    %4628 = vmatprep.subr.mxu0 0.0
    %4629 = vmatpush1.msra.mxu0 0.0
    %4630 = vmatprep.subr.mxu0 0.0
    %4631 = vmatpush1.msra.mxu0 0.0
    %4632 = vmatprep.subr.mxu0 0.0
    %4633 = vmatpush1.msra.mxu0 0.0
    %4634 = vmatprep.subr.mxu0 0.0
    %4635 = vmatpush1.msra.mxu0 0.0
    %4636 = vmatprep.subr.mxu0 0.0
    %4637 = vmatpush1.msra.mxu0 0.0
    %4638 = vmatprep.subr.mxu0 0.0
    %4639 = vmatpush1.msra.mxu0 0.0
    %4640 = vmatprep.subr.mxu0 0.0
    %4641 = vmatpush1.msra.mxu0 0.0
    %4642 = vmatprep.subr.mxu0 0.0
    %4643 = vmatpush1.msra.mxu0 0.0
    %4644 = vmatprep.subr.mxu0 0.0
    %4645 = vmatpush1.msra.mxu0 0.0
    %4646 = vmatprep.subr.mxu0 0.0
    %4647 = vmatpush1.msra.mxu0 0.0
    %4648 = vmatprep.subr.mxu0 0.0
    %4649 = vmatpush1.msra.mxu0 0.0
    %4650 = vmatprep.subr.mxu0 0.0
    %4651 = vmatpush1.msra.mxu0 0.0
    %4652 = vmatprep.subr.mxu0 0.0
    %4653 = vmatpush1.msra.mxu0 0.0
    %4654 = vmatprep.subr.mxu0 0.0
    %4655 = vmatpush1.msra.mxu0 0.0
    %4656 = vmatprep.subr.mxu0 0.0
    %4657 = vmatpush1.msra.mxu0 0.0
    %4658 = vmatprep.subr.mxu0 0.0
    %4659 = vmatpush1.msra.mxu0 0.0
    %4660 = vmatprep.subr.mxu0 0.0
    %4661 = vmatpush1.msra.mxu0 0.0
    %4662 = vmatprep.subr.mxu0 0.0
    %4663 = vmatpush1.msra.mxu0 0.0
    %4664 = vmatprep.subr.mxu0 0.0
    %4665 = vmatpush1.msra.mxu0 0.0
    %4666 = vmatprep.subr.mxu0 0.0
    %4667 = vmatpush1.msra.mxu0 0.0
    %4668 = vmatprep.subr.mxu0 0.0
    %4669 = vmatpush1.msra.mxu0 0.0
    %4670 = vmatprep.subr.mxu0 0.0
    %4671 = vmatpush1.msra.mxu0 0.0
    %4672 = vmatprep.subr.mxu0 0.0
    %4673 = vmatpush1.msra.mxu0 0.0
    %4674 = vmatprep.subr.mxu0 0.0
    %4675 = vmatpush1.msra.mxu0 0.0
    %4676 = vmatprep.subr.mxu0 0.0
    %4677 = vmatpush1.msra.mxu0 0.0
    %4678 = vmatprep.subr.mxu0 0.0
    %4679 = vmatpush1.msra.mxu0 0.0
    %4680 = vmatprep.mubr.f32.mxu0 0.0
    %v4681 = vand.u32 %v4610, 4294901760
    %v4682 = vsub.f32 %v4610, %v4681
    %v4683 = vand.u32 %v4682, 4294901760
    %v4684 = vsub.f32 %v4682, %v4683
    %v4685 = vand.u32 %v4684, 4294901760
    %4686 = vmatmul.mubr.f32.gmra.mrb[0].mxu0 %v4685
    %v4687 = vpop.f32.mrb[0].mxu0
    %v4688 = vadd.f32 %v36, %v4687
    %v4689 = vpop.f32.mrb[0].mxu0
    %v4690 = vadd.f32 %v37, %v4689
    %4691 = vdwg.mxu0
    %v4692 = vand.u32 %v55, 4294901760
    %v4693 = vsub.f32 %v55, %v4692
    %v4694 = vand.u32 %v4693, 4294901760
    %v4695 = vsub.f32 %v4693, %v4694
    %v4696 = vand.u32 %v4695, 4294901760
    %4697 = vmatprep.subr.mxu0 %v4696
    %v4698 = vand.u32 %v54, 4294901760
    %v4699 = vsub.f32 %v54, %v4698
    %v4700 = vand.u32 %v4699, 4294901760
    %v4701 = vsub.f32 %v4699, %v4700
    %v4702 = vand.u32 %v4701, 4294901760
    %4703 = vmatpush1.msra.mxu0 %v4702
    %v4704 = vand.u32 %v57, 4294901760
    %v4705 = vsub.f32 %v57, %v4704
    %v4706 = vand.u32 %v4705, 4294901760
    %v4707 = vsub.f32 %v4705, %v4706
    %v4708 = vand.u32 %v4707, 4294901760
    %4709 = vmatprep.subr.mxu0 %v4708
    %v4710 = vand.u32 %v56, 4294901760
    %v4711 = vsub.f32 %v56, %v4710
    %v4712 = vand.u32 %v4711, 4294901760
    %v4713 = vsub.f32 %v4711, %v4712
    %v4714 = vand.u32 %v4713, 4294901760
    %4715 = vmatpush1.msra.mxu0 %v4714
    %4716 = vmatprep.subr.mxu0 0.0
    %4717 = vmatpush1.msra.mxu0 0.0
    %4718 = vmatprep.subr.mxu0 0.0
    %4719 = vmatpush1.msra.mxu0 0.0
    %4720 = vmatprep.subr.mxu0 0.0
    %4721 = vmatpush1.msra.mxu0 0.0
    %4722 = vmatprep.subr.mxu0 0.0
    %4723 = vmatpush1.msra.mxu0 0.0
    %4724 = vmatprep.subr.mxu0 0.0
    %4725 = vmatpush1.msra.mxu0 0.0
    %4726 = vmatprep.subr.mxu0 0.0
    %4727 = vmatpush1.msra.mxu0 0.0
    %4728 = vmatprep.subr.mxu0 0.0
    %4729 = vmatpush1.msra.mxu0 0.0
    %4730 = vmatprep.subr.mxu0 0.0
    %4731 = vmatpush1.msra.mxu0 0.0
    %4732 = vmatprep.subr.mxu0 0.0
    %4733 = vmatpush1.msra.mxu0 0.0
    %4734 = vmatprep.subr.mxu0 0.0
    %4735 = vmatpush1.msra.mxu0 0.0
    %4736 = vmatprep.subr.mxu0 0.0
    %4737 = vmatpush1.msra.mxu0 0.0
    %4738 = vmatprep.subr.mxu0 0.0
    %4739 = vmatpush1.msra.mxu0 0.0
    %4740 = vmatprep.subr.mxu0 0.0
    %4741 = vmatpush1.msra.mxu0 0.0
    %4742 = vmatprep.subr.mxu0 0.0
    %4743 = vmatpush1.msra.mxu0 0.0
    %4744 = vmatprep.subr.mxu0 0.0
    %4745 = vmatpush1.msra.mxu0 0.0
    %4746 = vmatprep.subr.mxu0 0.0
    %4747 = vmatpush1.msra.mxu0 0.0
    %4748 = vmatprep.subr.mxu0 0.0
    %4749 = vmatpush1.msra.mxu0 0.0
    %4750 = vmatprep.subr.mxu0 0.0
    %4751 = vmatpush1.msra.mxu0 0.0
    %4752 = vmatprep.subr.mxu0 0.0
    %4753 = vmatpush1.msra.mxu0 0.0
    %4754 = vmatprep.subr.mxu0 0.0
    %4755 = vmatpush1.msra.mxu0 0.0
    %4756 = vmatprep.subr.mxu0 0.0
    %4757 = vmatpush1.msra.mxu0 0.0
    %4758 = vmatprep.subr.mxu0 0.0
    %4759 = vmatpush1.msra.mxu0 0.0
    %4760 = vmatprep.subr.mxu0 0.0
    %4761 = vmatpush1.msra.mxu0 0.0
    %4762 = vmatprep.subr.mxu0 0.0
    %4763 = vmatpush1.msra.mxu0 0.0
    %4764 = vmatprep.subr.mxu0 0.0
    %4765 = vmatpush1.msra.mxu0 0.0
    %4766 = vmatprep.subr.mxu0 0.0
    %4767 = vmatpush1.msra.mxu0 0.0
    %4768 = vmatprep.subr.mxu0 0.0
    %4769 = vmatpush1.msra.mxu0 0.0
    %4770 = vmatprep.subr.mxu0 0.0
    %4771 = vmatpush1.msra.mxu0 0.0
    %4772 = vmatprep.subr.mxu0 0.0
    %4773 = vmatpush1.msra.mxu0 0.0
    %4774 = vmatprep.subr.mxu0 0.0
    %4775 = vmatpush1.msra.mxu0 0.0
    %4776 = vmatprep.mubr.f32.mxu0 0.0
    %v4777 = vand.u32 %v4610, 4294901760
    %4778 = vmatmul.mubr.f32.gmra.mrb[0].mxu0 %v4777
    %v4779 = vpop.f32.mrb[0].mxu0
    %v4780 = vadd.f32 %v4688, %v4779
    %v4781 = vpop.f32.mrb[0].mxu0
    %v4782 = vadd.f32 %v4690, %v4781
    %4783 = vdwg.mxu0
    %v4784 = vand.u32 %v55, 4294901760
    %v4785 = vsub.f32 %v55, %v4784
    %4786 = vmatprep.subr.mxu0 %v4785
    %v4787 = vand.u32 %v54, 4294901760
    %v4788 = vsub.f32 %v54, %v4787
    %4789 = vmatpush1.msra.mxu0 %v4788
    %v4790 = vand.u32 %v57, 4294901760
    %v4791 = vsub.f32 %v57, %v4790
    %4792 = vmatprep.subr.mxu0 %v4791
    %v4793 = vand.u32 %v56, 4294901760
    %v4794 = vsub.f32 %v56, %v4793
    %4795 = vmatpush1.msra.mxu0 %v4794
    %4796 = vmatprep.subr.mxu0 0.0
    %4797 = vmatpush1.msra.mxu0 0.0
    %4798 = vmatprep.subr.mxu0 0.0
    %4799 = vmatpush1.msra.mxu0 0.0
    %4800 = vmatprep.subr.mxu0 0.0
    %4801 = vmatpush1.msra.mxu0 0.0
    %4802 = vmatprep.subr.mxu0 0.0
    %4803 = vmatpush1.msra.mxu0 0.0
    %4804 = vmatprep.subr.mxu0 0.0
    %4805 = vmatpush1.msra.mxu0 0.0
    %4806 = vmatprep.subr.mxu0 0.0
    %4807 = vmatpush1.msra.mxu0 0.0
    %4808 = vmatprep.subr.mxu0 0.0
    %4809 = vmatpush1.msra.mxu0 0.0
    %4810 = vmatprep.subr.mxu0 0.0
    %4811 = vmatpush1.msra.mxu0 0.0
    %4812 = vmatprep.subr.mxu0 0.0
    %4813 = vmatpush1.msra.mxu0 0.0
    %4814 = vmatprep.subr.mxu0 0.0
    %4815 = vmatpush1.msra.mxu0 0.0
    %4816 = vmatprep.subr.mxu0 0.0
    %4817 = vmatpush1.msra.mxu0 0.0
    %4818 = vmatprep.subr.mxu0 0.0
    %4819 = vmatpush1.msra.mxu0 0.0
    %4820 = vmatprep.subr.mxu0 0.0
    %4821 = vmatpush1.msra.mxu0 0.0
    %4822 = vmatprep.subr.mxu0 0.0
    %4823 = vmatpush1.msra.mxu0 0.0
    %4824 = vmatprep.subr.mxu0 0.0
    %4825 = vmatpush1.msra.mxu0 0.0
    %4826 = vmatprep.subr.mxu0 0.0
    %4827 = vmatpush1.msra.mxu0 0.0
    %4828 = vmatprep.subr.mxu0 0.0
    %4829 = vmatpush1.msra.mxu0 0.0
    %4830 = vmatprep.subr.mxu0 0.0
    %4831 = vmatpush1.msra.mxu0 0.0
    %4832 = vmatprep.subr.mxu0 0.0
    %4833 = vmatpush1.msra.mxu0 0.0
    %4834 = vmatprep.subr.mxu0 0.0
    %4835 = vmatpush1.msra.mxu0 0.0
    %4836 = vmatprep.subr.mxu0 0.0
    %4837 = vmatpush1.msra.mxu0 0.0
    %4838 = vmatprep.subr.mxu0 0.0
    %4839 = vmatpush1.msra.mxu0 0.0
    %4840 = vmatprep.subr.mxu0 0.0
    %4841 = vmatpush1.msra.mxu0 0.0
    %4842 = vmatprep.subr.mxu0 0.0
    %4843 = vmatpush1.msra.mxu0 0.0
    %4844 = vmatprep.subr.mxu0 0.0
    %4845 = vmatpush1.msra.mxu0 0.0
    %4846 = vmatprep.subr.mxu0 0.0
    %4847 = vmatpush1.msra.mxu0 0.0
    %4848 = vmatprep.subr.mxu0 0.0
    %4849 = vmatpush1.msra.mxu0 0.0
    %4850 = vmatprep.subr.mxu0 0.0
    %4851 = vmatpush1.msra.mxu0 0.0
    %4852 = vmatprep.subr.mxu0 0.0
    %4853 = vmatpush1.msra.mxu0 0.0
    %4854 = vmatprep.subr.mxu0 0.0
    %4855 = vmatpush1.msra.mxu0 0.0
    %4856 = vmatprep.mubr.f32.mxu0 0.0
    %v4857 = vand.u32 %v4610, 4294901760
    %v4858 = vsub.f32 %v4610, %v4857
    %4859 = vmatmul.mubr.f32.gmra.mrb[0].mxu0 %v4858
    %v4860 = vpop.f32.mrb[0].mxu0
    %v4861 = vadd.f32 %v4780, %v4860
    %v4862 = vpop.f32.mrb[0].mxu0
    %v4863 = vadd.f32 %v4782, %v4862
    %4864 = vdwg.mxu0
    %v4865 = vand.u32 %v55, 4294901760
    %4866 = vmatprep.subr.mxu0 %v4865
    %v4867 = vand.u32 %v54, 4294901760
    %4868 = vmatpush1.msra.mxu0 %v4867
    %v4869 = vand.u32 %v57, 4294901760
    %4870 = vmatprep.subr.mxu0 %v4869
    %v4871 = vand.u32 %v56, 4294901760
    %4872 = vmatpush1.msra.mxu0 %v4871
    %4873 = vmatprep.subr.mxu0 0.0
    %4874 = vmatpush1.msra.mxu0 0.0
    %4875 = vmatprep.subr.mxu0 0.0
    %4876 = vmatpush1.msra.mxu0 0.0
    %4877 = vmatprep.subr.mxu0 0.0
    %4878 = vmatpush1.msra.mxu0 0.0
    %4879 = vmatprep.subr.mxu0 0.0
    %4880 = vmatpush1.msra.mxu0 0.0
    %4881 = vmatprep.subr.mxu0 0.0
    %4882 = vmatpush1.msra.mxu0 0.0
    %4883 = vmatprep.subr.mxu0 0.0
    %4884 = vmatpush1.msra.mxu0 0.0
    %4885 = vmatprep.subr.mxu0 0.0
    %4886 = vmatpush1.msra.mxu0 0.0
    %4887 = vmatprep.subr.mxu0 0.0
    %4888 = vmatpush1.msra.mxu0 0.0
    %4889 = vmatprep.subr.mxu0 0.0
    %4890 = vmatpush1.msra.mxu0 0.0
    %4891 = vmatprep.subr.mxu0 0.0
    %4892 = vmatpush1.msra.mxu0 0.0
    %4893 = vmatprep.subr.mxu0 0.0
    %4894 = vmatpush1.msra.mxu0 0.0
    %4895 = vmatprep.subr.mxu0 0.0
    %4896 = vmatpush1.msra.mxu0 0.0
    %4897 = vmatprep.subr.mxu0 0.0
    %4898 = vmatpush1.msra.mxu0 0.0
    %4899 = vmatprep.subr.mxu0 0.0
    %4900 = vmatpush1.msra.mxu0 0.0
    %4901 = vmatprep.subr.mxu0 0.0
    %4902 = vmatpush1.msra.mxu0 0.0
    %4903 = vmatprep.subr.mxu0 0.0
    %4904 = vmatpush1.msra.mxu0 0.0
    %4905 = vmatprep.subr.mxu0 0.0
    %4906 = vmatpush1.msra.mxu0 0.0
    %4907 = vmatprep.subr.mxu0 0.0
    %4908 = vmatpush1.msra.mxu0 0.0
    %4909 = vmatprep.subr.mxu0 0.0
    %4910 = vmatpush1.msra.mxu0 0.0
    %4911 = vmatprep.subr.mxu0 0.0
    %4912 = vmatpush1.msra.mxu0 0.0
    %4913 = vmatprep.subr.mxu0 0.0
    %4914 = vmatpush1.msra.mxu0 0.0
    %4915 = vmatprep.subr.mxu0 0.0
    %4916 = vmatpush1.msra.mxu0 0.0
    %4917 = vmatprep.subr.mxu0 0.0
    %4918 = vmatpush1.msra.mxu0 0.0
    %4919 = vmatprep.subr.mxu0 0.0
    %4920 = vmatpush1.msra.mxu0 0.0
    %4921 = vmatprep.subr.mxu0 0.0
    %4922 = vmatpush1.msra.mxu0 0.0
    %4923 = vmatprep.subr.mxu0 0.0
    %4924 = vmatpush1.msra.mxu0 0.0
    %4925 = vmatprep.subr.mxu0 0.0
    %4926 = vmatpush1.msra.mxu0 0.0
    %4927 = vmatprep.subr.mxu0 0.0
    %4928 = vmatpush1.msra.mxu0 0.0
    %4929 = vmatprep.subr.mxu0 0.0
    %4930 = vmatpush1.msra.mxu0 0.0
    %4931 = vmatprep.subr.mxu0 0.0
    %4932 = vmatpush1.msra.mxu0 0.0
    %4933 = vmatprep.mubr.f32.mxu0 0.0
    %v4934 = vand.u32 %v4610, 4294901760
    %v4935 = vsub.f32 %v4610, %v4934
    %v4936 = vand.u32 %v4935, 4294901760
    %4937 = vmatmul.mubr.f32.gmra.mrb[0].mxu0 %v4936
    %v4938 = vpop.f32.mrb[0].mxu0
    %v4939 = vadd.f32 %v4861, %v4938
    %v4940 = vpop.f32.mrb[0].mxu0
    %v4941 = vadd.f32 %v4863, %v4940
    %4942 = vdwg.mxu0
    %v4943 = vand.u32 %v55, 4294901760
    %v4944 = vsub.f32 %v55, %v4943
    %v4945 = vand.u32 %v4944, 4294901760
    %4946 = vmatprep.subr.mxu0 %v4945
    %v4947 = vand.u32 %v54, 4294901760
    %v4948 = vsub.f32 %v54, %v4947
    %v4949 = vand.u32 %v4948, 4294901760
    %4950 = vmatpush1.msra.mxu0 %v4949
    %v4951 = vand.u32 %v57, 4294901760
    %v4952 = vsub.f32 %v57, %v4951
    %v4953 = vand.u32 %v4952, 4294901760
    %4954 = vmatprep.subr.mxu0 %v4953
    %v4955 = vand.u32 %v56, 4294901760
    %v4956 = vsub.f32 %v56, %v4955
    %v4957 = vand.u32 %v4956, 4294901760
    %4958 = vmatpush1.msra.mxu0 %v4957
    %4959 = vmatprep.subr.mxu0 0.0
    %4960 = vmatpush1.msra.mxu0 0.0
    %4961 = vmatprep.subr.mxu0 0.0
    %4962 = vmatpush1.msra.mxu0 0.0
    %4963 = vmatprep.subr.mxu0 0.0
    %4964 = vmatpush1.msra.mxu0 0.0
    %4965 = vmatprep.subr.mxu0 0.0
    %4966 = vmatpush1.msra.mxu0 0.0
    %4967 = vmatprep.subr.mxu0 0.0
    %4968 = vmatpush1.msra.mxu0 0.0
    %4969 = vmatprep.subr.mxu0 0.0
    %4970 = vmatpush1.msra.mxu0 0.0
    %4971 = vmatprep.subr.mxu0 0.0
    %4972 = vmatpush1.msra.mxu0 0.0
    %4973 = vmatprep.subr.mxu0 0.0
    %4974 = vmatpush1.msra.mxu0 0.0
    %4975 = vmatprep.subr.mxu0 0.0
    %4976 = vmatpush1.msra.mxu0 0.0
    %4977 = vmatprep.subr.mxu0 0.0
    %4978 = vmatpush1.msra.mxu0 0.0
    %4979 = vmatprep.subr.mxu0 0.0
    %4980 = vmatpush1.msra.mxu0 0.0
    %4981 = vmatprep.subr.mxu0 0.0
    %4982 = vmatpush1.msra.mxu0 0.0
    %4983 = vmatprep.subr.mxu0 0.0
    %4984 = vmatpush1.msra.mxu0 0.0
    %4985 = vmatprep.subr.mxu0 0.0
    %4986 = vmatpush1.msra.mxu0 0.0
    %4987 = vmatprep.subr.mxu0 0.0
    %4988 = vmatpush1.msra.mxu0 0.0
    %4989 = vmatprep.subr.mxu0 0.0
    %4990 = vmatpush1.msra.mxu0 0.0
    %4991 = vmatprep.subr.mxu0 0.0
    %4992 = vmatpush1.msra.mxu0 0.0
    %4993 = vmatprep.subr.mxu0 0.0
    %4994 = vmatpush1.msra.mxu0 0.0
    %4995 = vmatprep.subr.mxu0 0.0
    %4996 = vmatpush1.msra.mxu0 0.0
    %4997 = vmatprep.subr.mxu0 0.0
    %4998 = vmatpush1.msra.mxu0 0.0
    %4999 = vmatprep.subr.mxu0 0.0
    %5000 = vmatpush1.msra.mxu0 0.0
    %5001 = vmatprep.subr.mxu0 0.0
    %5002 = vmatpush1.msra.mxu0 0.0
    %5003 = vmatprep.subr.mxu0 0.0
    %5004 = vmatpush1.msra.mxu0 0.0
    %5005 = vmatprep.subr.mxu0 0.0
    %5006 = vmatpush1.msra.mxu0 0.0
    %5007 = vmatprep.subr.mxu0 0.0
    %5008 = vmatpush1.msra.mxu0 0.0
    %5009 = vmatprep.subr.mxu0 0.0
    %5010 = vmatpush1.msra.mxu0 0.0
    %5011 = vmatprep.subr.mxu0 0.0
    %5012 = vmatpush1.msra.mxu0 0.0
    %5013 = vmatprep.subr.mxu0 0.0
    %5014 = vmatpush1.msra.mxu0 0.0
    %5015 = vmatprep.subr.mxu0 0.0
    %5016 = vmatpush1.msra.mxu0 0.0
    %5017 = vmatprep.subr.mxu0 0.0
    %5018 = vmatpush1.msra.mxu0 0.0
    %5019 = vmatprep.mubr.f32.mxu0 0.0
    %v5020 = vand.u32 %v4610, 4294901760
    %5021 = vmatmul.mubr.f32.gmra.mrb[0].mxu0 %v5020
    %v5022 = vpop.f32.mrb[0].mxu0
    %v5023 = vadd.f32 %v4939, %v5022
    %v5024 = vpop.f32.mrb[0].mxu0
    %v5025 = vadd.f32 %v4941, %v5024
    %5026 = vdwg.mxu0
    %v5027 = vand.u32 %v55, 4294901760
    %5028 = vmatprep.subr.mxu0 %v5027
    %v5029 = vand.u32 %v54, 4294901760
    %5030 = vmatpush1.msra.mxu0 %v5029
    %v5031 = vand.u32 %v57, 4294901760
    %5032 = vmatprep.subr.mxu0 %v5031
    %v5033 = vand.u32 %v56, 4294901760
    %5034 = vmatpush1.msra.mxu0 %v5033
    %5035 = vmatprep.subr.mxu0 0.0
    %5036 = vmatpush1.msra.mxu0 0.0
    %5037 = vmatprep.subr.mxu0 0.0
    %5038 = vmatpush1.msra.mxu0 0.0
    %5039 = vmatprep.subr.mxu0 0.0
    %5040 = vmatpush1.msra.mxu0 0.0
    %5041 = vmatprep.subr.mxu0 0.0
    %5042 = vmatpush1.msra.mxu0 0.0
    %5043 = vmatprep.subr.mxu0 0.0
    %5044 = vmatpush1.msra.mxu0 0.0
    %5045 = vmatprep.subr.mxu0 0.0
    %5046 = vmatpush1.msra.mxu0 0.0
    %5047 = vmatprep.subr.mxu0 0.0
    %5048 = vmatpush1.msra.mxu0 0.0
    %5049 = vmatprep.subr.mxu0 0.0
    %5050 = vmatpush1.msra.mxu0 0.0
    %5051 = vmatprep.subr.mxu0 0.0
    %5052 = vmatpush1.msra.mxu0 0.0
    %5053 = vmatprep.subr.mxu0 0.0
    %5054 = vmatpush1.msra.mxu0 0.0
    %5055 = vmatprep.subr.mxu0 0.0
    %5056 = vmatpush1.msra.mxu0 0.0
    %5057 = vmatprep.subr.mxu0 0.0
    %5058 = vmatpush1.msra.mxu0 0.0
    %5059 = vmatprep.subr.mxu0 0.0
    %5060 = vmatpush1.msra.mxu0 0.0
    %5061 = vmatprep.subr.mxu0 0.0
    %5062 = vmatpush1.msra.mxu0 0.0
    %5063 = vmatprep.subr.mxu0 0.0
    %5064 = vmatpush1.msra.mxu0 0.0
    %5065 = vmatprep.subr.mxu0 0.0
    %5066 = vmatpush1.msra.mxu0 0.0
    %5067 = vmatprep.subr.mxu0 0.0
    %5068 = vmatpush1.msra.mxu0 0.0
    %5069 = vmatprep.subr.mxu0 0.0
    %5070 = vmatpush1.msra.mxu0 0.0
    %5071 = vmatprep.subr.mxu0 0.0
    %5072 = vmatpush1.msra.mxu0 0.0
    %5073 = vmatprep.subr.mxu0 0.0
    %5074 = vmatpush1.msra.mxu0 0.0
    %5075 = vmatprep.subr.mxu0 0.0
    %5076 = vmatpush1.msra.mxu0 0.0
    %5077 = vmatprep.subr.mxu0 0.0
    %5078 = vmatpush1.msra.mxu0 0.0
    %5079 = vmatprep.subr.mxu0 0.0
    %5080 = vmatpush1.msra.mxu0 0.0
    %5081 = vmatprep.subr.mxu0 0.0
    %5082 = vmatpush1.msra.mxu0 0.0
    %5083 = vmatprep.subr.mxu0 0.0
    %5084 = vmatpush1.msra.mxu0 0.0
    %5085 = vmatprep.subr.mxu0 0.0
    %5086 = vmatpush1.msra.mxu0 0.0
    %5087 = vmatprep.subr.mxu0 0.0
    %5088 = vmatpush1.msra.mxu0 0.0
    %5089 = vmatprep.subr.mxu0 0.0
    %5090 = vmatpush1.msra.mxu0 0.0
    %5091 = vmatprep.subr.mxu0 0.0
    %5092 = vmatpush1.msra.mxu0 0.0
    %5093 = vmatprep.subr.mxu0 0.0
    %5094 = vmatpush1.msra.mxu0 0.0
    %5095 = vmatprep.mubr.f32.mxu0 0.0
    %v5096 = vand.u32 %v4610, 4294901760
    %5097 = vmatmul.mubr.f32.gmra.mrb[0].mxu0 %v5096
    %v5098 = vpop.f32.mrb[0].mxu0
    %v5099 = vadd.f32 %v5023, %v5098
    %v5100 = vpop.f32.mrb[0].mxu0
    %v5101 = vadd.f32 %v5025, %v5100
    %5102 = vdwg.mxu0
    %v5103 = vsub.f32 %v5099, %v4605
    %v5104 = vsub.f32 %v5101, %v4607
    %v5105 = vand.u32 2147483647, %v5103
    %v5106 = vand.u32 2147483647, %v5104
    %v5107 = vadd.f32 %v5105, %v5106
    %5108 = vadd.xlane.f32.xlu0 %v5107
    %v5109 = vpop.xlane.xlu0 %5108
    %v5110 = vsub.f32 0.0, %v5109
    %v5111 = vadd.f32 %v2077, %v5110
    %v5112 = vmax.f32 %v5111, 0.0
    %v5113 = vadd.f32 %v4102, %v5112
    %vm5114 = vcmask 7168
    %v5115 = vsel %vm5114, %v5113, 0.0
    %5116 = vadd.xlane.f32.xlu0 %v5115
    %v5117 = vpop.xlane.xlu0 %5116
    %v5118 = vrot.slane %v5117, 4
    %v5119 = vadd.f32 %v5117, %v5118
    %v5120 = vrot.slane %v5119, 2
    %v5121 = vadd.f32 %v5119, %v5120
    %v5122 = vrot.slane %v5121, 1
    %v5123 = vadd.f32 %v5121, %v5122
    %s5124 = vtos %v5123
    %s5125 = smul.f32 %s5124, 0.03125
    %v5126 = vmul.f32 %v557, %v557
    %v5127 = vmul.f32 %v559, %v559
    %v5128 = vadd.f32 %v5126, %v5127
    %5129 = vadd.xlane.f32.xlu0 %v5128
    %v5130 = vpop.xlane.xlu0 %5129
    %v5131 = vrot.slane %v5130, 4
    %v5132 = vadd.f32 %v5130, %v5131
    %v5133 = vrot.slane %v5132, 2
    %v5134 = vadd.f32 %v5132, %v5133
    %v5135 = vrot.slane %v5134, 1
    %v5136 = vadd.f32 %v5134, %v5135
    %s5137 = vtos %v5136
    %v5138 = vmul.f32 %v1055, %v1055
    %v5139 = vmul.f32 %v1057, %v1057
    %v5140 = vadd.f32 %v5138, %v5139
    %5141 = vadd.xlane.f32.xlu0 %v5140
    %v5142 = vpop.xlane.xlu0 %5141
    %v5143 = vrot.slane %v5142, 4
    %v5144 = vadd.f32 %v5142, %v5143
    %v5145 = vrot.slane %v5144, 2
    %v5146 = vadd.f32 %v5144, %v5145
    %v5147 = vrot.slane %v5146, 1
    %v5148 = vadd.f32 %v5146, %v5147
    %s5149 = vtos %v5148
    %s5150 = sadd.f32 %s5137, %s5149
    %v5151 = vmul.f32 %v36, %v36
    %v5152 = vmul.f32 %v37, %v37
    %v5153 = vadd.f32 %v5151, %v5152
    %5154 = vadd.xlane.f32.xlu0 %v5153
    %v5155 = vpop.xlane.xlu0 %5154
    %v5156 = vrot.slane %v5155, 4
    %v5157 = vadd.f32 %v5155, %v5156
    %v5158 = vrot.slane %v5157, 2
    %v5159 = vadd.f32 %v5157, %v5158
    %v5160 = vrot.slane %v5159, 1
    %v5161 = vadd.f32 %v5159, %v5160
    %s5162 = vtos %v5161
    %s5163 = sadd.f32 %s5150, %s5162
    %s5164 = smul.f32 %s5163, 0.01
    %s5165 = smul.f32 %s5164, 0.0013020834
    %s5166 = sadd.f32 %s5125, %s5165
    %s5167 = scalar_lea.smem [#allocation5], 0
    %5168 = sst [smem:[%s5167]] %s5166
    // Predicated region
    $region22: #{tpu_custom_call.1} parent=1 // pred_check
      _
    $region23: #{tpu_custom_call.1} parent=1 // pred_check_branch
      %5170 = sbr.rel (0) target = $region25
    $region24: #{tpu_custom_call.1} parent=1 // pred_region
      %s5172 = ssub.s32 16, 16
      %5173 = vsyncadd [#allocation4], %s5172
      %5176 = dma.smem_to_hbm [#allocation5], 16, %s4, [#allocation4]
    $region25: #{tpu_custom_call.1} parent=1 // pred_fallthru
      _
    // Predicated region
    $region26: #{tpu_custom_call.1} parent=1 // pred_check
      _
    $region27: #{tpu_custom_call.1} parent=1 // pred_check_branch
      %5178 = sbr.rel (0) target = $region29
    $region28: #{tpu_custom_call.1} parent=1 // pred_region
      %5179 = dma.done [#allocation4], 16
    $region29: #{tpu_custom_call.1} parent=1 // pred_fallthru
      _
    %5180 = sfence
    %5181 = vsyncpa [#allocation3], 1
    %5182 = vsyncpa [#allocation4], 1

</llo_original>
